<compile_context>
chip_gen: v7x
topology: tpu7x:2x2x1
jax: 0.10.0
libtpu: 0.0.40
codegen_flags: <defaults>
</compile_context>

<pallas_src>
import functools

import jax
import jax.numpy as jnp
from jax.experimental import pallas as pl
from jax.experimental.pallas import tpu as pltpu


# -----------------------------------------------------------------------------
# Kernel
# -----------------------------------------------------------------------------

def _encoder_kernel(x_ref, gamma_ref, beta_ref, fold_ref, unfold_ref,
                    w1_ref, r1_ref, band1_ref, b1_ref,
                    w2_ref, r2_ref, band2_ref, b2_ref,
                    se_ref, so_ref, re_ref, ro_ref,
                    xout_ref, pool_ref, *, K1, K2, count, eps):
    """Whole batch resident in VMEM; activations carried as (N*H, W*C) tiles."""
    f32 = jnp.float32
    slope = f32(0.01)                        # nn.LeakyReLU default slope

    x = x_ref[...]                           # (R, Lin),  R = N*H, Lin = W*Cin

    # --- BatchNorm2d, training-mode batch statistics over the whole batch ---
    inv_count = f32(1.0 / count)
    s1 = jnp.dot(jnp.sum(x, axis=0, keepdims=True), fold_ref[...],
                 preferred_element_type=f32)                        # (1, Cin)
    s2 = jnp.dot(jnp.sum(x * x, axis=0, keepdims=True), fold_ref[...],
                 preferred_element_type=f32)                        # (1, Cin)
    mean = s1 * inv_count
    var = jnp.maximum(s2 * inv_count - mean * mean, 0.0)   # biased var (training)
    a = gamma_ref[...] * jax.lax.rsqrt(var + f32(eps))              # (1, Cin)
    b = beta_ref[...] - a * mean
    a_t = jnp.dot(a, unfold_ref[...], preferred_element_type=f32)   # (1, Lin)
    b_t = jnp.dot(b, unfold_ref[...], preferred_element_type=f32)
    x = x * a_t + b_t
    # TODO(synk): running_mean / running_var buffer updates (training-mode side
    # effect of nn.BatchNorm2d) are not materialized.

    # --- Conv1: 1x1 conv (Cin -> Cout, no bias) on the MXU + LeakyReLU ---
    h = jnp.dot(x, w1_ref[...], preferred_element_type=f32)         # (R, Lout)
    h = jnp.where(h >= 0, h, slope * h)

    def depthwise(act, r_ref, band_ref, bias_ref, K):
        # out = bias + sum_ki (R_ki @ act) @ B_ki
        #   R_ki : (R, R)  0/1 batch-block-diagonal row-shift (zero rows == pad)
        #   B_ki : (L, L)  banded width/channel mixing for row offset ki
        acc = jnp.broadcast_to(bias_ref[...], act.shape).astype(f32)
        for ki in range(K):
            shifted = jnp.dot(r_ref[ki], act, preferred_element_type=f32)
            acc = acc + jnp.dot(shifted, band_ref[ki],
                                preferred_element_type=f32)
        return acc

    # depthwise 5x5 (pad 2, bias) + Tanh
    h = jnp.tanh(depthwise(h, r1_ref, band1_ref, b1_ref, K1))

    # --- Conv2: 1x1 conv (Cout -> Cout, no bias) + LeakyReLU ---
    h = jnp.dot(h, w2_ref[...], preferred_element_type=f32)
    h = jnp.where(h >= 0, h, slope * h)

    # depthwise 7x7 (pad 3, bias) + Tanh -> encoder output (lane-dense store)
    xo = jnp.tanh(depthwise(h, r2_ref, band2_ref, b2_ref, K2))
    xout_ref[...] = xo

    # --- MaxPool2d(2, 2, ceil_mode=True): 0/1 selection matmuls + maximum ---
    cols = jnp.maximum(jnp.dot(xo, se_ref[...], preferred_element_type=f32),
                       jnp.dot(xo, so_ref[...], preferred_element_type=f32))
    pool_ref[...] = jnp.maximum(
        jnp.dot(re_ref[...], cols, preferred_element_type=f32),
        jnp.dot(ro_ref[...], cols, preferred_element_type=f32))


# -----------------------------------------------------------------------------
# Weight expansion helpers (tiny, run once in XLA outside the kernel)
# -----------------------------------------------------------------------------

def _banded_depthwise_matrices(dw_ckk, W):
    """B[ki] of shape (W*C, W*C): B[ki][w2*C+c, w*C+c] = dw[c, ki, w2-w+P]."""
    C, K, _ = dw_ckk.shape
    P = (K - 1) // 2
    w = jnp.arange(W)
    kj = w[:, None] - w[None, :] + P                    # (W, W)
    valid = (kj >= 0) & (kj < K)
    g = dw_ckk[:, :, jnp.clip(kj, 0, K - 1)]            # (C, K, W, W)
    g = jnp.where(valid[None, None], g, 0.0)
    band = jnp.einsum('ckab,cd->kacbd', g, jnp.eye(C, dtype=g.dtype))
    return band.reshape(K, W * C, W * C)


def _row_shift_matrices(H, K, N):
    """R[ki] (N*H, N*H): shifts rows by ki-P within each image, zero padding."""
    P = (K - 1) // 2
    R = N * H
    r = jnp.arange(R)
    h = r % H
    off = jnp.arange(K) - P
    tgt = r[None, :, None] + off[:, None, None]                  # (K, R, 1)
    hh = h[None, :, None] + off[:, None, None]
    valid = (hh >= 0) & (hh < H)
    return ((tgt == r[None, None, :]) & valid).astype(jnp.float32)   # (K, R, R)


def _pool_col_selectors(W, C):
    """ceil_mode 2x2 pool: 0/1 lane (width) selection matrices."""
    Wp = -(-W // 2)
    wcols = jnp.arange(W)
    even_w = 2 * jnp.arange(Wp)
    odd_w = jnp.minimum(2 * jnp.arange(Wp) + 1, W - 1)   # ceil_mode edge clamp
    eye_c = jnp.eye(C, dtype=jnp.float32)
    s_even = jnp.kron((wcols[:, None] == even_w[None, :]).astype(jnp.float32), eye_c)
    s_odd = jnp.kron((wcols[:, None] == odd_w[None, :]).astype(jnp.float32), eye_c)
    return s_even, s_odd                                  # (W*C, Wp*C) each


def _pool_row_selectors(H, N):
    """ceil_mode 2x2 pool: 0/1 row (height) selection matrices, batch-folded."""
    Hp = -(-H // 2)
    rows = jnp.arange(N * H)
    rp = jnp.arange(N * Hp)
    n, hp = rp // Hp, rp % Hp
    e = n * H + 2 * hp
    o = n * H + jnp.minimum(2 * hp + 1, H - 1)            # ceil_mode edge clamp
    r_even = (e[:, None] == rows[None, :]).astype(jnp.float32)   # (N*Hp, N*H)
    r_odd = (o[:, None] == rows[None, :]).astype(jnp.float32)
    return r_even, r_odd


def _spec(shape):
    n = len(shape)
    return pl.BlockSpec(shape, lambda i, _n=n: (0,) * _n)


# -----------------------------------------------------------------------------
# Forward wrapper
# -----------------------------------------------------------------------------

@jax.jit
def encoder_forward(x_nchw, params):
    """x_nchw: (N, Cin, H, W) float32. Returns (x, x_pool) in NCHW like PyTorch."""
    f32 = jnp.float32
    N, Cin, H, W = x_nchw.shape
    w1 = params["conv1_w"].astype(f32)      # (Cout, Cin, 1, 1)
    dw1 = params["conv1_dw"].astype(f32)    # (Cout, 1, K1, K1)
    db1 = params["conv1_db"].astype(f32)    # (Cout,)
    w2 = params["conv2_w"].astype(f32)      # (Cout, Cout, 1, 1)
    dw2 = params["conv2_dw"].astype(f32)    # (Cout, 1, K2, K2)
    db2 = params["conv2_db"].astype(f32)    # (Cout,)
    gamma = params["bn_gamma"].astype(f32)  # (Cin,)
    beta = params["bn_beta"].astype(f32)    # (Cin,)
    Cout, K1, K2 = dw1.shape[0], dw1.shape[-1], dw2.shape[-1]
    Hp, Wp = -(-H // 2), -(-W // 2)
    Lin, Lout, Lp = W * Cin, W * Cout, Wp * Cout
    R, Rp = N * H, N * Hp

    # NCHW -> lane-dense rows: row r = n*H + h, lane l = w*C + c
    x = jnp.transpose(x_nchw.astype(f32), (0, 2, 3, 1)).reshape(R, Lin)

    # ---- lane-flattened weight expansion ----
    eye_w = jnp.eye(W, dtype=f32)
    w1k = jnp.kron(eye_w, w1[:, :, 0, 0].T)            # (W*Cin,  W*Cout)
    w2k = jnp.kron(eye_w, w2[:, :, 0, 0].T)            # (W*Cout, W*Cout)
    band1 = _banded_depthwise_matrices(dw1[:, 0], W)   # (K1, Lout, Lout)
    band2 = _banded_depthwise_matrices(dw2[:, 0], W)   # (K2, Lout, Lout)
    r1 = _row_shift_matrices(H, K1, N)                 # (K1, R, R)
    r2 = _row_shift_matrices(H, K2, N)                 # (K2, R, R)
    b1t = jnp.tile(db1[None, :], (1, W))               # (1, Lout)
    b2t = jnp.tile(db2[None, :], (1, W))               # (1, Lout)
    s_even, s_odd = _pool_col_selectors(W, Cout)       # (Lout, Lp)
    r_even, r_odd = _pool_row_selectors(H, N)          # (Rp, R)
    fold = jnp.kron(jnp.ones((W, 1), f32), jnp.eye(Cin, dtype=f32))     # (Lin, Cin)
    unfold = jnp.kron(jnp.ones((1, W), f32), jnp.eye(Cin, dtype=f32))   # (Cin, Lin)

    kernel = functools.partial(_encoder_kernel, K1=K1, K2=K2,
                               count=float(N * H * W), eps=1e-5)
    xout_f, pool_f = pl.pallas_call(
        kernel,
        out_shape=(jax.ShapeDtypeStruct((R, Lout), f32),
                   jax.ShapeDtypeStruct((Rp, Lp), f32)),
        grid=(1,),
        in_specs=[_spec(x.shape), _spec((1, Cin)), _spec((1, Cin)),
                  _spec(fold.shape), _spec(unfold.shape),
                  _spec(w1k.shape), _spec(r1.shape),
                  _spec(band1.shape), _spec(b1t.shape),
                  _spec(w2k.shape), _spec(r2.shape),
                  _spec(band2.shape), _spec(b2t.shape),
                  _spec(s_even.shape), _spec(s_odd.shape),
                  _spec(r_even.shape), _spec(r_odd.shape)],
        out_specs=[_spec((R, Lout)), _spec((Rp, Lp))],
        compiler_params=pltpu.CompilerParams(dimension_semantics=("arbitrary",)),
    )(x, gamma[None, :], beta[None, :], fold, unfold,
      w1k, r1, band1, b1t, w2k, r2, band2, b2t,
      s_even, s_odd, r_even, r_odd)

    # back to PyTorch NCHW
    x_out = jnp.transpose(xout_f.reshape(N, H, W, Cout), (0, 3, 1, 2))
    x_pool = jnp.transpose(pool_f.reshape(N, Hp, Wp, Cout), (0, 3, 1, 2))
    return x_out, x_pool


# -----------------------------------------------------------------------------
# Parameters (PyTorch-native layouts) and demo
# -----------------------------------------------------------------------------

def make_params(key, cin, cout, k1=5, k2=7):
    ks = jax.random.split(key, 8)
    f32 = jnp.float32
    return {
        # BatchNorm2d affine params (perturbed so the op is non-trivial).
        "bn_gamma": (1.0 + 0.1 * jax.random.normal(ks[0], (cin,))).astype(f32),
        "bn_beta": (0.1 * jax.random.normal(ks[1], (cin,))).astype(f32),
        # 1x1 conv (Cout, Cin, 1, 1), no bias.
        "conv1_w": (jax.random.normal(ks[2], (cout, cin, 1, 1)) /
                    jnp.sqrt(cin)).astype(f32),
        # depthwise 5x5 (Cout, 1, K1, K1) + bias.
        "conv1_dw": (0.2 * jax.random.normal(ks[3], (cout, 1, k1, k1))).astype(f32),
        "conv1_db": (0.1 * jax.random.normal(ks[4], (cout,))).astype(f32),
        # 1x1 conv (Cout, Cout, 1, 1), no bias.
        "conv2_w": (jax.random.normal(ks[5], (cout, cout, 1, 1)) /
                    jnp.sqrt(cout)).astype(f32),
        # depthwise 7x7 (Cout, 1, K2, K2) + bias.
        "conv2_dw": (0.1 * jax.random.normal(ks[6], (cout, 1, k2, k2))).astype(f32),
        "conv2_db": (0.1 * jax.random.normal(ks[7], (cout,))).astype(f32),
    }


if __name__ == "__main__":
    key = jax.random.PRNGKey(0)
    kx, kp = jax.random.split(key)

    in_channels, out_channels = 4, 8
    N, H, W = 2, 16, 16

    x = jax.random.normal(kx, (N, in_channels, H, W), dtype=jnp.float32)  # NCHW
    params = make_params(kp, in_channels, out_channels)

    x_out, x_pool = encoder_forward(x, params)
    jax.block_until_ready((x_out, x_pool))

    assert x_out.shape == (N, out_channels, H, W)
    assert x_pool.shape == (N, out_channels, (H + 1) // 2, (W + 1) // 2)
    assert bool(jnp.all(jnp.isfinite(x_out))) and bool(jnp.all(jnp.isfinite(x_pool)))
    print("KERNEL_OK")
</pallas_src>

<mosaic_0001>
module attributes {stable_mosaic.version = 11 : i64} {
  func.func @_encoder_kernel(%arg0: i32, %arg1: memref<32x64xf32, #tpu.memory_space<vmem>>, %arg2: memref<1x4xf32, #tpu.memory_space<vmem>>, %arg3: memref<1x4xf32, #tpu.memory_space<vmem>>, %arg4: memref<64x4xf32, #tpu.memory_space<vmem>>, %arg5: memref<4x64xf32, #tpu.memory_space<vmem>>, %arg6: memref<64x128xf32, #tpu.memory_space<vmem>>, %arg7: memref<5x32x32xf32, #tpu.memory_space<vmem>>, %arg8: memref<5x128x128xf32, #tpu.memory_space<vmem>>, %arg9: memref<1x128xf32, #tpu.memory_space<vmem>>, %arg10: memref<128x128xf32, #tpu.memory_space<vmem>>, %arg11: memref<7x32x32xf32, #tpu.memory_space<vmem>>, %arg12: memref<7x128x128xf32, #tpu.memory_space<vmem>>, %arg13: memref<1x128xf32, #tpu.memory_space<vmem>>, %arg14: memref<128x64xf32, #tpu.memory_space<vmem>>, %arg15: memref<128x64xf32, #tpu.memory_space<vmem>>, %arg16: memref<16x32xf32, #tpu.memory_space<vmem>>, %arg17: memref<16x32xf32, #tpu.memory_space<vmem>>, %arg18: memref<32x128xf32, #tpu.memory_space<vmem>>, %arg19: memref<16x64xf32, #tpu.memory_space<vmem>>) attributes {dimension_semantics = [#tpu.dimension_semantics<arbitrary>], iteration_bounds = array<i64: 1>, scalar_prefetch = 0 : i64, scratch_operands = 0 : i64, tpu.core_type = #tpu.core_type<tc>, window_params = [{pipeline_mode = #tpu.pipeline_mode<synchronous>, transform_indices = @transform_0, window_bounds = array<i64: 32, 64>}, {pipeline_mode = #tpu.pipeline_mode<synchronous>, transform_indices = @transform_1, window_bounds = array<i64: 1, 4>}, {pipeline_mode = #tpu.pipeline_mode<synchronous>, transform_indices = @transform_2, window_bounds = array<i64: 1, 4>}, {pipeline_mode = #tpu.pipeline_mode<synchronous>, transform_indices = @transform_3, window_bounds = array<i64: 64, 4>}, {pipeline_mode = #tpu.pipeline_mode<synchronous>, transform_indices = @transform_4, window_bounds = array<i64: 4, 64>}, {pipeline_mode = #tpu.pipeline_mode<synchronous>, transform_indices = @transform_5, window_bounds = array<i64: 64, 128>}, {pipeline_mode = #tpu.pipeline_mode<synchronous>, transform_indices = @transform_6, window_bounds = array<i64: 5, 32, 32>}, {pipeline_mode = #tpu.pipeline_mode<synchronous>, transform_indices = @transform_7, window_bounds = array<i64: 5, 128, 128>}, {pipeline_mode = #tpu.pipeline_mode<synchronous>, transform_indices = @transform_8, window_bounds = array<i64: 1, 128>}, {pipeline_mode = #tpu.pipeline_mode<synchronous>, transform_indices = @transform_9, window_bounds = array<i64: 128, 128>}, {pipeline_mode = #tpu.pipeline_mode<synchronous>, transform_indices = @transform_10, window_bounds = array<i64: 7, 32, 32>}, {pipeline_mode = #tpu.pipeline_mode<synchronous>, transform_indices = @transform_11, window_bounds = array<i64: 7, 128, 128>}, {pipeline_mode = #tpu.pipeline_mode<synchronous>, transform_indices = @transform_12, window_bounds = array<i64: 1, 128>}, {pipeline_mode = #tpu.pipeline_mode<synchronous>, transform_indices = @transform_13, window_bounds = array<i64: 128, 64>}, {pipeline_mode = #tpu.pipeline_mode<synchronous>, transform_indices = @transform_14, window_bounds = array<i64: 128, 64>}, {pipeline_mode = #tpu.pipeline_mode<synchronous>, transform_indices = @transform_15, window_bounds = array<i64: 16, 32>}, {pipeline_mode = #tpu.pipeline_mode<synchronous>, transform_indices = @transform_16, window_bounds = array<i64: 16, 32>}, {pipeline_mode = #tpu.pipeline_mode<synchronous>, transform_indices = @transform_17, window_bounds = array<i64: 32, 128>}, {pipeline_mode = #tpu.pipeline_mode<synchronous>, transform_indices = @transform_18, window_bounds = array<i64: 16, 64>}]} {
    %c0 = arith.constant 0 : index
    %c0_0 = arith.constant 0 : index
    %0 = vector.load %arg1[%c0, %c0_0] : memref<32x64xf32, #tpu.memory_space<vmem>>, vector<32x64xf32>
    %cst = arith.constant dense<0.000000e+00> : vector<64xf32>
    %1 = vector.multi_reduction <add>, %0, %cst [0] : vector<32x64xf32> to vector<64xf32>
    %2 = vector.shape_cast %1 : vector<64xf32> to vector<1x64xf32>
    %c0_1 = arith.constant 0 : index
    %c0_2 = arith.constant 0 : index
    %3 = vector.load %arg4[%c0_1, %c0_2] : memref<64x4xf32, #tpu.memory_space<vmem>>, vector<64x4xf32>
    %cst_3 = arith.constant dense<0.000000e+00> : vector<1x4xf32>
    %4 = tpu.matmul %2, %3, %cst_3 {dimension_numbers = #tpu.dot_dimension_numbers<[1], [0], [0], [1], [0, 0, 1, 1], [], []>} : vector<1x64xf32>, vector<64x4xf32>, vector<1x4xf32> -> vector<1x4xf32>
    %5 = arith.mulf %0, %0 : vector<32x64xf32>
    %cst_4 = arith.constant dense<0.000000e+00> : vector<64xf32>
    %6 = vector.multi_reduction <add>, %5, %cst_4 [0] : vector<32x64xf32> to vector<64xf32>
    %7 = vector.shape_cast %6 : vector<64xf32> to vector<1x64xf32>
    %c0_5 = arith.constant 0 : index
    %c0_6 = arith.constant 0 : index
    %8 = vector.load %arg4[%c0_5, %c0_6] : memref<64x4xf32, #tpu.memory_space<vmem>>, vector<64x4xf32>
    %cst_7 = arith.constant dense<0.000000e+00> : vector<1x4xf32>
    %9 = tpu.matmul %7, %8, %cst_7 {dimension_numbers = #tpu.dot_dimension_numbers<[1], [0], [0], [1], [0, 0, 1, 1], [], []>} : vector<1x64xf32>, vector<64x4xf32>, vector<1x4xf32> -> vector<1x4xf32>
    %cst_8 = arith.constant 0.001953125 : f32
    %10 = vector.broadcast %cst_8 : f32 to vector<1x4xf32>
    %11 = arith.mulf %4, %10 : vector<1x4xf32>
    %cst_9 = arith.constant 0.001953125 : f32
    %12 = vector.broadcast %cst_9 : f32 to vector<1x4xf32>
    %13 = arith.mulf %9, %12 : vector<1x4xf32>
    %14 = arith.mulf %11, %11 : vector<1x4xf32>
    %15 = arith.subf %13, %14 : vector<1x4xf32>
    %cst_10 = arith.constant 0.000000e+00 : f32
    %16 = vector.broadcast %cst_10 : f32 to vector<1x4xf32>
    %17 = arith.maximumf %15, %16 : vector<1x4xf32>
    %c0_11 = arith.constant 0 : index
    %c0_12 = arith.constant 0 : index
    %18 = vector.load %arg2[%c0_11, %c0_12] : memref<1x4xf32, #tpu.memory_space<vmem>>, vector<1x4xf32>
    %cst_13 = arith.constant 9.99999974E-6 : f32
    %19 = vector.broadcast %cst_13 : f32 to vector<1x4xf32>
    %20 = arith.addf %17, %19 : vector<1x4xf32>
    %21 = math.rsqrt %20 : vector<1x4xf32>
    %22 = arith.mulf %18, %21 : vector<1x4xf32>
    %c0_14 = arith.constant 0 : index
    %c0_15 = arith.constant 0 : index
    %23 = vector.load %arg3[%c0_14, %c0_15] : memref<1x4xf32, #tpu.memory_space<vmem>>, vector<1x4xf32>
    %24 = arith.mulf %22, %11 : vector<1x4xf32>
    %25 = arith.subf %23, %24 : vector<1x4xf32>
    %c0_16 = arith.constant 0 : index
    %c0_17 = arith.constant 0 : index
    %26 = vector.load %arg5[%c0_16, %c0_17] : memref<4x64xf32, #tpu.memory_space<vmem>>, vector<4x64xf32>
    %cst_18 = arith.constant dense<0.000000e+00> : vector<1x64xf32>
    %27 = tpu.matmul %22, %26, %cst_18 {dimension_numbers = #tpu.dot_dimension_numbers<[1], [0], [0], [1], [0, 0, 1, 1], [], []>} : vector<1x4xf32>, vector<4x64xf32>, vector<1x64xf32> -> vector<1x64xf32>
    %c0_19 = arith.constant 0 : index
    %c0_20 = arith.constant 0 : index
    %28 = vector.load %arg5[%c0_19, %c0_20] : memref<4x64xf32, #tpu.memory_space<vmem>>, vector<4x64xf32>
    %cst_21 = arith.constant dense<0.000000e+00> : vector<1x64xf32>
    %29 = tpu.matmul %25, %28, %cst_21 {dimension_numbers = #tpu.dot_dimension_numbers<[1], [0], [0], [1], [0, 0, 1, 1], [], []>} : vector<1x4xf32>, vector<4x64xf32>, vector<1x64xf32> -> vector<1x64xf32>
    %30 = vector.broadcast %27 : vector<1x64xf32> to vector<32x64xf32>
    %31 = arith.mulf %0, %30 : vector<32x64xf32>
    %32 = vector.broadcast %29 : vector<1x64xf32> to vector<32x64xf32>
    %33 = arith.addf %31, %32 : vector<32x64xf32>
    %c0_22 = arith.constant 0 : index
    %c0_23 = arith.constant 0 : index
    %34 = vector.load %arg6[%c0_22, %c0_23] : memref<64x128xf32, #tpu.memory_space<vmem>>, vector<64x128xf32>
    %cst_24 = arith.constant dense<0.000000e+00> : vector<32x128xf32>
    %35 = tpu.matmul %33, %34, %cst_24 {dimension_numbers = #tpu.dot_dimension_numbers<[1], [0], [0], [1], [0, 0, 1, 1], [], []>} : vector<32x64xf32>, vector<64x128xf32>, vector<32x128xf32> -> vector<32x128xf32>
    %cst_25 = arith.constant 0.000000e+00 : f32
    %36 = vector.broadcast %cst_25 : f32 to vector<32x128xf32>
    %37 = arith.cmpf oge, %35, %36 : vector<32x128xf32>
    %cst_26 = arith.constant 0.00999999977 : f32
    %38 = vector.broadcast %cst_26 : f32 to vector<32x128xf32>
    %39 = arith.mulf %38, %35 : vector<32x128xf32>
    %40 = arith.select %37, %35, %39 : vector<32x128xi1>, vector<32x128xf32>
    %c0_27 = arith.constant 0 : index
    %c0_28 = arith.constant 0 : index
    %41 = vector.load %arg9[%c0_27, %c0_28] : memref<1x128xf32, #tpu.memory_space<vmem>>, vector<1x128xf32>
    %42 = vector.shape_cast %41 : vector<1x128xf32> to vector<1x128xf32>
    %43 = vector.broadcast %42 : vector<1x128xf32> to vector<32x128xf32>
    %c0_29 = arith.constant 0 : index
    %c0_30 = arith.constant 0 : index
    %c0_31 = arith.constant 0 : index
    %44 = vector.load %arg7[%c0_29, %c0_30, %c0_31] : memref<5x32x32xf32, #tpu.memory_space<vmem>>, vector<1x32x32xf32>
    %45 = vector.shape_cast %44 : vector<1x32x32xf32> to vector<32x32xf32>
    %cst_32 = arith.constant dense<0.000000e+00> : vector<32x128xf32>
    %46 = tpu.matmul %45, %40, %cst_32 {dimension_numbers = #tpu.dot_dimension_numbers<[1], [0], [0], [1], [0, 0, 1, 1], [], []>} : vector<32x32xf32>, vector<32x128xf32>, vector<32x128xf32> -> vector<32x128xf32>
    %c0_33 = arith.constant 0 : index
    %c0_34 = arith.constant 0 : index
    %c0_35 = arith.constant 0 : index
    %47 = vector.load %arg8[%c0_33, %c0_34, %c0_35] : memref<5x128x128xf32, #tpu.memory_space<vmem>>, vector<1x128x128xf32>
    %48 = vector.shape_cast %47 : vector<1x128x128xf32> to vector<128x128xf32>
    %cst_36 = arith.constant dense<0.000000e+00> : vector<32x128xf32>
    %49 = tpu.matmul %46, %48, %cst_36 {dimension_numbers = #tpu.dot_dimension_numbers<[1], [0], [0], [1], [0, 0, 1, 1], [], []>} : vector<32x128xf32>, vector<128x128xf32>, vector<32x128xf32> -> vector<32x128xf32>
    %50 = arith.addf %43, %49 : vector<32x128xf32>
    %c1 = arith.constant 1 : index
    %c0_37 = arith.constant 0 : index
    %c0_38 = arith.constant 0 : index
    %51 = vector.load %arg7[%c1, %c0_37, %c0_38] : memref<5x32x32xf32, #tpu.memory_space<vmem>>, vector<1x32x32xf32>
    %52 = vector.shape_cast %51 : vector<1x32x32xf32> to vector<32x32xf32>
    %cst_39 = arith.constant dense<0.000000e+00> : vector<32x128xf32>
    %53 = tpu.matmul %52, %40, %cst_39 {dimension_numbers = #tpu.dot_dimension_numbers<[1], [0], [0], [1], [0, 0, 1, 1], [], []>} : vector<32x32xf32>, vector<32x128xf32>, vector<32x128xf32> -> vector<32x128xf32>
    %c1_40 = arith.constant 1 : index
    %c0_41 = arith.constant 0 : index
    %c0_42 = arith.constant 0 : index
    %54 = vector.load %arg8[%c1_40, %c0_41, %c0_42] : memref<5x128x128xf32, #tpu.memory_space<vmem>>, vector<1x128x128xf32>
    %55 = vector.shape_cast %54 : vector<1x128x128xf32> to vector<128x128xf32>
    %cst_43 = arith.constant dense<0.000000e+00> : vector<32x128xf32>
    %56 = tpu.matmul %53, %55, %cst_43 {dimension_numbers = #tpu.dot_dimension_numbers<[1], [0], [0], [1], [0, 0, 1, 1], [], []>} : vector<32x128xf32>, vector<128x128xf32>, vector<32x128xf32> -> vector<32x128xf32>
    %57 = arith.addf %50, %56 : vector<32x128xf32>
    %c2 = arith.constant 2 : index
    %c0_44 = arith.constant 0 : index
    %c0_45 = arith.constant 0 : index
    %58 = vector.load %arg7[%c2, %c0_44, %c0_45] : memref<5x32x32xf32, #tpu.memory_space<vmem>>, vector<1x32x32xf32>
    %59 = vector.shape_cast %58 : vector<1x32x32xf32> to vector<32x32xf32>
    %cst_46 = arith.constant dense<0.000000e+00> : vector<32x128xf32>
    %60 = tpu.matmul %59, %40, %cst_46 {dimension_numbers = #tpu.dot_dimension_numbers<[1], [0], [0], [1], [0, 0, 1, 1], [], []>} : vector<32x32xf32>, vector<32x128xf32>, vector<32x128xf32> -> vector<32x128xf32>
    %c2_47 = arith.constant 2 : index
    %c0_48 = arith.constant 0 : index
    %c0_49 = arith.constant 0 : index
    %61 = vector.load %arg8[%c2_47, %c0_48, %c0_49] : memref<5x128x128xf32, #tpu.memory_space<vmem>>, vector<1x128x128xf32>
    %62 = vector.shape_cast %61 : vector<1x128x128xf32> to vector<128x128xf32>
    %cst_50 = arith.constant dense<0.000000e+00> : vector<32x128xf32>
    %63 = tpu.matmul %60, %62, %cst_50 {dimension_numbers = #tpu.dot_dimension_numbers<[1], [0], [0], [1], [0, 0, 1, 1], [], []>} : vector<32x128xf32>, vector<128x128xf32>, vector<32x128xf32> -> vector<32x128xf32>
    %64 = arith.addf %57, %63 : vector<32x128xf32>
    %c3 = arith.constant 3 : index
    %c0_51 = arith.constant 0 : index
    %c0_52 = arith.constant 0 : index
    %65 = vector.load %arg7[%c3, %c0_51, %c0_52] : memref<5x32x32xf32, #tpu.memory_space<vmem>>, vector<1x32x32xf32>
    %66 = vector.shape_cast %65 : vector<1x32x32xf32> to vector<32x32xf32>
    %cst_53 = arith.constant dense<0.000000e+00> : vector<32x128xf32>
    %67 = tpu.matmul %66, %40, %cst_53 {dimension_numbers = #tpu.dot_dimension_numbers<[1], [0], [0], [1], [0, 0, 1, 1], [], []>} : vector<32x32xf32>, vector<32x128xf32>, vector<32x128xf32> -> vector<32x128xf32>
    %c3_54 = arith.constant 3 : index
    %c0_55 = arith.constant 0 : index
    %c0_56 = arith.constant 0 : index
    %68 = vector.load %arg8[%c3_54, %c0_55, %c0_56] : memref<5x128x128xf32, #tpu.memory_space<vmem>>, vector<1x128x128xf32>
    %69 = vector.shape_cast %68 : vector<1x128x128xf32> to vector<128x128xf32>
    %cst_57 = arith.constant dense<0.000000e+00> : vector<32x128xf32>
    %70 = tpu.matmul %67, %69, %cst_57 {dimension_numbers = #tpu.dot_dimension_numbers<[1], [0], [0], [1], [0, 0, 1, 1], [], []>} : vector<32x128xf32>, vector<128x128xf32>, vector<32x128xf32> -> vector<32x128xf32>
    %71 = arith.addf %64, %70 : vector<32x128xf32>
    %c4 = arith.constant 4 : index
    %c0_58 = arith.constant 0 : index
    %c0_59 = arith.constant 0 : index
    %72 = vector.load %arg7[%c4, %c0_58, %c0_59] : memref<5x32x32xf32, #tpu.memory_space<vmem>>, vector<1x32x32xf32>
    %73 = vector.shape_cast %72 : vector<1x32x32xf32> to vector<32x32xf32>
    %cst_60 = arith.constant dense<0.000000e+00> : vector<32x128xf32>
    %74 = tpu.matmul %73, %40, %cst_60 {dimension_numbers = #tpu.dot_dimension_numbers<[1], [0], [0], [1], [0, 0, 1, 1], [], []>} : vector<32x32xf32>, vector<32x128xf32>, vector<32x128xf32> -> vector<32x128xf32>
    %c4_61 = arith.constant 4 : index
    %c0_62 = arith.constant 0 : index
    %c0_63 = arith.constant 0 : index
    %75 = vector.load %arg8[%c4_61, %c0_62, %c0_63] : memref<5x128x128xf32, #tpu.memory_space<vmem>>, vector<1x128x128xf32>
    %76 = vector.shape_cast %75 : vector<1x128x128xf32> to vector<128x128xf32>
    %cst_64 = arith.constant dense<0.000000e+00> : vector<32x128xf32>
    %77 = tpu.matmul %74, %76, %cst_64 {dimension_numbers = #tpu.dot_dimension_numbers<[1], [0], [0], [1], [0, 0, 1, 1], [], []>} : vector<32x128xf32>, vector<128x128xf32>, vector<32x128xf32> -> vector<32x128xf32>
    %78 = arith.addf %71, %77 : vector<32x128xf32>
    %79 = math.tanh %78 : vector<32x128xf32>
    %c0_65 = arith.constant 0 : index
    %c0_66 = arith.constant 0 : index
    %80 = vector.load %arg10[%c0_65, %c0_66] : memref<128x128xf32, #tpu.memory_space<vmem>>, vector<128x128xf32>
    %cst_67 = arith.constant dense<0.000000e+00> : vector<32x128xf32>
    %81 = tpu.matmul %79, %80, %cst_67 {dimension_numbers = #tpu.dot_dimension_numbers<[1], [0], [0], [1], [0, 0, 1, 1], [], []>} : vector<32x128xf32>, vector<128x128xf32>, vector<32x128xf32> -> vector<32x128xf32>
    %cst_68 = arith.constant 0.000000e+00 : f32
    %82 = vector.broadcast %cst_68 : f32 to vector<32x128xf32>
    %83 = arith.cmpf oge, %81, %82 : vector<32x128xf32>
    %cst_69 = arith.constant 0.00999999977 : f32
    %84 = vector.broadcast %cst_69 : f32 to vector<32x128xf32>
    %85 = arith.mulf %84, %81 : vector<32x128xf32>
    %86 = arith.select %83, %81, %85 : vector<32x128xi1>, vector<32x128xf32>
    %c0_70 = arith.constant 0 : index
    %c0_71 = arith.constant 0 : index
    %87 = vector.load %arg13[%c0_70, %c0_71] : memref<1x128xf32, #tpu.memory_space<vmem>>, vector<1x128xf32>
    %88 = vector.shape_cast %87 : vector<1x128xf32> to vector<1x128xf32>
    %89 = vector.broadcast %88 : vector<1x128xf32> to vector<32x128xf32>
    %c0_72 = arith.constant 0 : index
    %c0_73 = arith.constant 0 : index
    %c0_74 = arith.constant 0 : index
    %90 = vector.load %arg11[%c0_72, %c0_73, %c0_74] : memref<7x32x32xf32, #tpu.memory_space<vmem>>, vector<1x32x32xf32>
    %91 = vector.shape_cast %90 : vector<1x32x32xf32> to vector<32x32xf32>
    %cst_75 = arith.constant dense<0.000000e+00> : vector<32x128xf32>
    %92 = tpu.matmul %91, %86, %cst_75 {dimension_numbers = #tpu.dot_dimension_numbers<[1], [0], [0], [1], [0, 0, 1, 1], [], []>} : vector<32x32xf32>, vector<32x128xf32>, vector<32x128xf32> -> vector<32x128xf32>
    %c0_76 = arith.constant 0 : index
    %c0_77 = arith.constant 0 : index
    %c0_78 = arith.constant 0 : index
    %93 = vector.load %arg12[%c0_76, %c0_77, %c0_78] : memref<7x128x128xf32, #tpu.memory_space<vmem>>, vector<1x128x128xf32>
    %94 = vector.shape_cast %93 : vector<1x128x128xf32> to vector<128x128xf32>
    %cst_79 = arith.constant dense<0.000000e+00> : vector<32x128xf32>
    %95 = tpu.matmul %92, %94, %cst_79 {dimension_numbers = #tpu.dot_dimension_numbers<[1], [0], [0], [1], [0, 0, 1, 1], [], []>} : vector<32x128xf32>, vector<128x128xf32>, vector<32x128xf32> -> vector<32x128xf32>
    %96 = arith.addf %89, %95 : vector<32x128xf32>
    %c1_80 = arith.constant 1 : index
    %c0_81 = arith.constant 0 : index
    %c0_82 = arith.constant 0 : index
    %97 = vector.load %arg11[%c1_80, %c0_81, %c0_82] : memref<7x32x32xf32, #tpu.memory_space<vmem>>, vector<1x32x32xf32>
    %98 = vector.shape_cast %97 : vector<1x32x32xf32> to vector<32x32xf32>
    %cst_83 = arith.constant dense<0.000000e+00> : vector<32x128xf32>
    %99 = tpu.matmul %98, %86, %cst_83 {dimension_numbers = #tpu.dot_dimension_numbers<[1], [0], [0], [1], [0, 0, 1, 1], [], []>} : vector<32x32xf32>, vector<32x128xf32>, vector<32x128xf32> -> vector<32x128xf32>
    %c1_84 = arith.constant 1 : index
    %c0_85 = arith.constant 0 : index
    %c0_86 = arith.constant 0 : index
    %100 = vector.load %arg12[%c1_84, %c0_85, %c0_86] : memref<7x128x128xf32, #tpu.memory_space<vmem>>, vector<1x128x128xf32>
    %101 = vector.shape_cast %100 : vector<1x128x128xf32> to vector<128x128xf32>
    %cst_87 = arith.constant dense<0.000000e+00> : vector<32x128xf32>
    %102 = tpu.matmul %99, %101, %cst_87 {dimension_numbers = #tpu.dot_dimension_numbers<[1], [0], [0], [1], [0, 0, 1, 1], [], []>} : vector<32x128xf32>, vector<128x128xf32>, vector<32x128xf32> -> vector<32x128xf32>
    %103 = arith.addf %96, %102 : vector<32x128xf32>
    %c2_88 = arith.constant 2 : index
    %c0_89 = arith.constant 0 : index
    %c0_90 = arith.constant 0 : index
    %104 = vector.load %arg11[%c2_88, %c0_89, %c0_90] : memref<7x32x32xf32, #tpu.memory_space<vmem>>, vector<1x32x32xf32>
    %105 = vector.shape_cast %104 : vector<1x32x32xf32> to vector<32x32xf32>
    %cst_91 = arith.constant dense<0.000000e+00> : vector<32x128xf32>
    %106 = tpu.matmul %105, %86, %cst_91 {dimension_numbers = #tpu.dot_dimension_numbers<[1], [0], [0], [1], [0, 0, 1, 1], [], []>} : vector<32x32xf32>, vector<32x128xf32>, vector<32x128xf32> -> vector<32x128xf32>
    %c2_92 = arith.constant 2 : index
    %c0_93 = arith.constant 0 : index
    %c0_94 = arith.constant 0 : index
    %107 = vector.load %arg12[%c2_92, %c0_93, %c0_94] : memref<7x128x128xf32, #tpu.memory_space<vmem>>, vector<1x128x128xf32>
    %108 = vector.shape_cast %107 : vector<1x128x128xf32> to vector<128x128xf32>
    %cst_95 = arith.constant dense<0.000000e+00> : vector<32x128xf32>
    %109 = tpu.matmul %106, %108, %cst_95 {dimension_numbers = #tpu.dot_dimension_numbers<[1], [0], [0], [1], [0, 0, 1, 1], [], []>} : vector<32x128xf32>, vector<128x128xf32>, vector<32x128xf32> -> vector<32x128xf32>
    %110 = arith.addf %103, %109 : vector<32x128xf32>
    %c3_96 = arith.constant 3 : index
    %c0_97 = arith.constant 0 : index
    %c0_98 = arith.constant 0 : index
    %111 = vector.load %arg11[%c3_96, %c0_97, %c0_98] : memref<7x32x32xf32, #tpu.memory_space<vmem>>, vector<1x32x32xf32>
    %112 = vector.shape_cast %111 : vector<1x32x32xf32> to vector<32x32xf32>
    %cst_99 = arith.constant dense<0.000000e+00> : vector<32x128xf32>
    %113 = tpu.matmul %112, %86, %cst_99 {dimension_numbers = #tpu.dot_dimension_numbers<[1], [0], [0], [1], [0, 0, 1, 1], [], []>} : vector<32x32xf32>, vector<32x128xf32>, vector<32x128xf32> -> vector<32x128xf32>
    %c3_100 = arith.constant 3 : index
    %c0_101 = arith.constant 0 : index
    %c0_102 = arith.constant 0 : index
    %114 = vector.load %arg12[%c3_100, %c0_101, %c0_102] : memref<7x128x128xf32, #tpu.memory_space<vmem>>, vector<1x128x128xf32>
    %115 = vector.shape_cast %114 : vector<1x128x128xf32> to vector<128x128xf32>
    %cst_103 = arith.constant dense<0.000000e+00> : vector<32x128xf32>
    %116 = tpu.matmul %113, %115, %cst_103 {dimension_numbers = #tpu.dot_dimension_numbers<[1], [0], [0], [1], [0, 0, 1, 1], [], []>} : vector<32x128xf32>, vector<128x128xf32>, vector<32x128xf32> -> vector<32x128xf32>
    %117 = arith.addf %110, %116 : vector<32x128xf32>
    %c4_104 = arith.constant 4 : index
    %c0_105 = arith.constant 0 : index
    %c0_106 = arith.constant 0 : index
    %118 = vector.load %arg11[%c4_104, %c0_105, %c0_106] : memref<7x32x32xf32, #tpu.memory_space<vmem>>, vector<1x32x32xf32>
    %119 = vector.shape_cast %118 : vector<1x32x32xf32> to vector<32x32xf32>
    %cst_107 = arith.constant dense<0.000000e+00> : vector<32x128xf32>
    %120 = tpu.matmul %119, %86, %cst_107 {dimension_numbers = #tpu.dot_dimension_numbers<[1], [0], [0], [1], [0, 0, 1, 1], [], []>} : vector<32x32xf32>, vector<32x128xf32>, vector<32x128xf32> -> vector<32x128xf32>
    %c4_108 = arith.constant 4 : index
    %c0_109 = arith.constant 0 : index
    %c0_110 = arith.constant 0 : index
    %121 = vector.load %arg12[%c4_108, %c0_109, %c0_110] : memref<7x128x128xf32, #tpu.memory_space<vmem>>, vector<1x128x128xf32>
    %122 = vector.shape_cast %121 : vector<1x128x128xf32> to vector<128x128xf32>
    %cst_111 = arith.constant dense<0.000000e+00> : vector<32x128xf32>
    %123 = tpu.matmul %120, %122, %cst_111 {dimension_numbers = #tpu.dot_dimension_numbers<[1], [0], [0], [1], [0, 0, 1, 1], [], []>} : vector<32x128xf32>, vector<128x128xf32>, vector<32x128xf32> -> vector<32x128xf32>
    %124 = arith.addf %117, %123 : vector<32x128xf32>
    %c5 = arith.constant 5 : index
    %c0_112 = arith.constant 0 : index
    %c0_113 = arith.constant 0 : index
    %125 = vector.load %arg11[%c5, %c0_112, %c0_113] : memref<7x32x32xf32, #tpu.memory_space<vmem>>, vector<1x32x32xf32>
    %126 = vector.shape_cast %125 : vector<1x32x32xf32> to vector<32x32xf32>
    %cst_114 = arith.constant dense<0.000000e+00> : vector<32x128xf32>
    %127 = tpu.matmul %126, %86, %cst_114 {dimension_numbers = #tpu.dot_dimension_numbers<[1], [0], [0], [1], [0, 0, 1, 1], [], []>} : vector<32x32xf32>, vector<32x128xf32>, vector<32x128xf32> -> vector<32x128xf32>
    %c5_115 = arith.constant 5 : index
    %c0_116 = arith.constant 0 : index
    %c0_117 = arith.constant 0 : index
    %128 = vector.load %arg12[%c5_115, %c0_116, %c0_117] : memref<7x128x128xf32, #tpu.memory_space<vmem>>, vector<1x128x128xf32>
    %129 = vector.shape_cast %128 : vector<1x128x128xf32> to vector<128x128xf32>
    %cst_118 = arith.constant dense<0.000000e+00> : vector<32x128xf32>
    %130 = tpu.matmul %127, %129, %cst_118 {dimension_numbers = #tpu.dot_dimension_numbers<[1], [0], [0], [1], [0, 0, 1, 1], [], []>} : vector<32x128xf32>, vector<128x128xf32>, vector<32x128xf32> -> vector<32x128xf32>
    %131 = arith.addf %124, %130 : vector<32x128xf32>
    %c6 = arith.constant 6 : index
    %c0_119 = arith.constant 0 : index
    %c0_120 = arith.constant 0 : index
    %132 = vector.load %arg11[%c6, %c0_119, %c0_120] : memref<7x32x32xf32, #tpu.memory_space<vmem>>, vector<1x32x32xf32>
    %133 = vector.shape_cast %132 : vector<1x32x32xf32> to vector<32x32xf32>
    %cst_121 = arith.constant dense<0.000000e+00> : vector<32x128xf32>
    %134 = tpu.matmul %133, %86, %cst_121 {dimension_numbers = #tpu.dot_dimension_numbers<[1], [0], [0], [1], [0, 0, 1, 1], [], []>} : vector<32x32xf32>, vector<32x128xf32>, vector<32x128xf32> -> vector<32x128xf32>
    %c6_122 = arith.constant 6 : index
    %c0_123 = arith.constant 0 : index
    %c0_124 = arith.constant 0 : index
    %135 = vector.load %arg12[%c6_122, %c0_123, %c0_124] : memref<7x128x128xf32, #tpu.memory_space<vmem>>, vector<1x128x128xf32>
    %136 = vector.shape_cast %135 : vector<1x128x128xf32> to vector<128x128xf32>
    %cst_125 = arith.constant dense<0.000000e+00> : vector<32x128xf32>
    %137 = tpu.matmul %134, %136, %cst_125 {dimension_numbers = #tpu.dot_dimension_numbers<[1], [0], [0], [1], [0, 0, 1, 1], [], []>} : vector<32x128xf32>, vector<128x128xf32>, vector<32x128xf32> -> vector<32x128xf32>
    %138 = arith.addf %131, %137 : vector<32x128xf32>
    %139 = math.tanh %138 : vector<32x128xf32>
    %c0_126 = arith.constant 0 : index
    %c0_127 = arith.constant 0 : index
    %140 = vector.load %arg18[%c0_126, %c0_127] : memref<32x128xf32, #tpu.memory_space<vmem>>, vector<32x128xf32>
    tpu.vector_store %arg18[%c0_126, %c0_127], %139 {strides = array<i32>} : memref<32x128xf32, #tpu.memory_space<vmem>>, vector<32x128xf32>,
    %c0_128 = arith.constant 0 : index
    %c0_129 = arith.constant 0 : index
    %141 = vector.load %arg14[%c0_128, %c0_129] : memref<128x64xf32, #tpu.memory_space<vmem>>, vector<128x64xf32>
    %cst_130 = arith.constant dense<0.000000e+00> : vector<32x64xf32>
    %142 = tpu.matmul %139, %141, %cst_130 {dimension_numbers = #tpu.dot_dimension_numbers<[1], [0], [0], [1], [0, 0, 1, 1], [], []>} : vector<32x128xf32>, vector<128x64xf32>, vector<32x64xf32> -> vector<32x64xf32>
    %c0_131 = arith.constant 0 : index
    %c0_132 = arith.constant 0 : index
    %143 = vector.load %arg15[%c0_131, %c0_132] : memref<128x64xf32, #tpu.memory_space<vmem>>, vector<128x64xf32>
    %cst_133 = arith.constant dense<0.000000e+00> : vector<32x64xf32>
    %144 = tpu.matmul %139, %143, %cst_133 {dimension_numbers = #tpu.dot_dimension_numbers<[1], [0], [0], [1], [0, 0, 1, 1], [], []>} : vector<32x128xf32>, vector<128x64xf32>, vector<32x64xf32> -> vector<32x64xf32>
    %145 = arith.maximumf %142, %144 : vector<32x64xf32>
    %c0_134 = arith.constant 0 : index
    %c0_135 = arith.constant 0 : index
    %146 = vector.load %arg16[%c0_134, %c0_135] : memref<16x32xf32, #tpu.memory_space<vmem>>, vector<16x32xf32>
    %cst_136 = arith.constant dense<0.000000e+00> : vector<16x64xf32>
    %147 = tpu.matmul %146, %145, %cst_136 {dimension_numbers = #tpu.dot_dimension_numbers<[1], [0], [0], [1], [0, 0, 1, 1], [], []>} : vector<16x32xf32>, vector<32x64xf32>, vector<16x64xf32> -> vector<16x64xf32>
    %c0_137 = arith.constant 0 : index
    %c0_138 = arith.constant 0 : index
    %148 = vector.load %arg17[%c0_137, %c0_138] : memref<16x32xf32, #tpu.memory_space<vmem>>, vector<16x32xf32>
    %cst_139 = arith.constant dense<0.000000e+00> : vector<16x64xf32>
    %149 = tpu.matmul %148, %145, %cst_139 {dimension_numbers = #tpu.dot_dimension_numbers<[1], [0], [0], [1], [0, 0, 1, 1], [], []>} : vector<16x32xf32>, vector<32x64xf32>, vector<16x64xf32> -> vector<16x64xf32>
    %150 = arith.maximumf %147, %149 : vector<16x64xf32>
    %c0_140 = arith.constant 0 : index
    %c0_141 = arith.constant 0 : index
    %151 = vector.load %arg19[%c0_140, %c0_141] : memref<16x64xf32, #tpu.memory_space<vmem>>, vector<16x64xf32>
    tpu.vector_store %arg19[%c0_140, %c0_141], %150 {strides = array<i32>} : memref<16x64xf32, #tpu.memory_space<vmem>>, vector<16x64xf32>,
    return
  }
  func.func @transform_0(%arg0: i32) -> (i32, i32) {
    %c0_i32 = arith.constant 0 : i32
    %c0_i32_0 = arith.constant 0 : i32
    %c0_i32_1 = arith.constant 0 : i32
    return %c0_i32, %c0_i32_0 : i32, i32
  }
  func.func @transform_1(%arg0: i32) -> (i32, i32) {
    %c0_i32 = arith.constant 0 : i32
    %c0_i32_0 = arith.constant 0 : i32
    %c0_i32_1 = arith.constant 0 : i32
    return %c0_i32, %c0_i32_0 : i32, i32
  }
  func.func @transform_2(%arg0: i32) -> (i32, i32) {
    %c0_i32 = arith.constant 0 : i32
    %c0_i32_0 = arith.constant 0 : i32
    %c0_i32_1 = arith.constant 0 : i32
    return %c0_i32, %c0_i32_0 : i32, i32
  }
  func.func @transform_3(%arg0: i32) -> (i32, i32) {
    %c0_i32 = arith.constant 0 : i32
    %c0_i32_0 = arith.constant 0 : i32
    %c0_i32_1 = arith.constant 0 : i32
    return %c0_i32, %c0_i32_0 : i32, i32
  }
  func.func @transform_4(%arg0: i32) -> (i32, i32) {
    %c0_i32 = arith.constant 0 : i32
    %c0_i32_0 = arith.constant 0 : i32
    %c0_i32_1 = arith.constant 0 : i32
    return %c0_i32, %c0_i32_0 : i32, i32
  }
  func.func @transform_5(%arg0: i32) -> (i32, i32) {
    %c0_i32 = arith.constant 0 : i32
    %c0_i32_0 = arith.constant 0 : i32
    %c0_i32_1 = arith.constant 0 : i32
    return %c0_i32, %c0_i32_0 : i32, i32
  }
  func.func @transform_6(%arg0: i32) -> (i32, i32, i32) {
    %c0_i32 = arith.constant 0 : i32
    %c0_i32_0 = arith.constant 0 : i32
    %c0_i32_1 = arith.constant 0 : i32
    %c0_i32_2 = arith.constant 0 : i32
    return %c0_i32, %c0_i32_0, %c0_i32_1 : i32, i32, i32
  }
  func.func @transform_7(%arg0: i32) -> (i32, i32, i32) {
    %c0_i32 = arith.constant 0 : i32
    %c0_i32_0 = arith.constant 0 : i32
    %c0_i32_1 = arith.constant 0 : i32
    %c0_i32_2 = arith.constant 0 : i32
    return %c0_i32, %c0_i32_0, %c0_i32_1 : i32, i32, i32
  }
  func.func @transform_8(%arg0: i32) -> (i32, i32) {
    %c0_i32 = arith.constant 0 : i32
    %c0_i32_0 = arith.constant 0 : i32
    %c0_i32_1 = arith.constant 0 : i32
    return %c0_i32, %c0_i32_0 : i32, i32
  }
  func.func @transform_9(%arg0: i32) -> (i32, i32) {
    %c0_i32 = arith.constant 0 : i32
    %c0_i32_0 = arith.constant 0 : i32
    %c0_i32_1 = arith.constant 0 : i32
    return %c0_i32, %c0_i32_0 : i32, i32
  }
  func.func @transform_10(%arg0: i32) -> (i32, i32, i32) {
    %c0_i32 = arith.constant 0 : i32
    %c0_i32_0 = arith.constant 0 : i32
    %c0_i32_1 = arith.constant 0 : i32
    %c0_i32_2 = arith.constant 0 : i32
    return %c0_i32, %c0_i32_0, %c0_i32_1 : i32, i32, i32
  }
  func.func @transform_11(%arg0: i32) -> (i32, i32, i32) {
    %c0_i32 = arith.constant 0 : i32
    %c0_i32_0 = arith.constant 0 : i32
    %c0_i32_1 = arith.constant 0 : i32
    %c0_i32_2 = arith.constant 0 : i32
    return %c0_i32, %c0_i32_0, %c0_i32_1 : i32, i32, i32
  }
  func.func @transform_12(%arg0: i32) -> (i32, i32) {
    %c0_i32 = arith.constant 0 : i32
    %c0_i32_0 = arith.constant 0 : i32
    %c0_i32_1 = arith.constant 0 : i32
    return %c0_i32, %c0_i32_0 : i32, i32
  }
  func.func @transform_13(%arg0: i32) -> (i32, i32) {
    %c0_i32 = arith.constant 0 : i32
    %c0_i32_0 = arith.constant 0 : i32
    %c0_i32_1 = arith.constant 0 : i32
    return %c0_i32, %c0_i32_0 : i32, i32
  }
  func.func @transform_14(%arg0: i32) -> (i32, i32) {
    %c0_i32 = arith.constant 0 : i32
    %c0_i32_0 = arith.constant 0 : i32
    %c0_i32_1 = arith.constant 0 : i32
    return %c0_i32, %c0_i32_0 : i32, i32
  }
  func.func @transform_15(%arg0: i32) -> (i32, i32) {
    %c0_i32 = arith.constant 0 : i32
    %c0_i32_0 = arith.constant 0 : i32
    %c0_i32_1 = arith.constant 0 : i32
    return %c0_i32, %c0_i32_0 : i32, i32
  }
  func.func @transform_16(%arg0: i32) -> (i32, i32) {
    %c0_i32 = arith.constant 0 : i32
    %c0_i32_0 = arith.constant 0 : i32
    %c0_i32_1 = arith.constant 0 : i32
    return %c0_i32, %c0_i32_0 : i32, i32
  }
  func.func @transform_17(%arg0: i32) -> (i32, i32) {
    %c0_i32 = arith.constant 0 : i32
    %c0_i32_0 = arith.constant 0 : i32
    %c0_i32_1 = arith.constant 0 : i32
    return %c0_i32, %c0_i32_0 : i32, i32
  }
  func.func @transform_18(%arg0: i32) -> (i32, i32) {
    %c0_i32 = arith.constant 0 : i32
    %c0_i32_0 = arith.constant 0 : i32
    %c0_i32_1 = arith.constant 0 : i32
    return %c0_i32, %c0_i32_0 : i32, i32
  }
}

</mosaic_0001>

<llo_original>
// kernel: encoder_forward.1
$region0: #{encoder_forward.1}
  #allocation0 [shape = 'u32[]', space=smem, size = 0x4, offset = 0x4, fixed_abs, tag = 'smem constant byte address 0x4 - core index']
  #allocation1 [shape = 'u32[144,128]{1,0:T(1,128)}', space=vmem, size = 0x12000, scoped, tag = 'internal scratch']
  %s0 = inlined_call_operand.vmem [shape: f32[32,64], index: 0, kind: input, shape index: {}]
  %s1 = inlined_call_operand.vmem [shape: f32[1,4], index: 1, kind: input, shape index: {}]
  %s2 = inlined_call_operand.vmem [shape: f32[1,4], index: 2, kind: input, shape index: {}]
  %s3 = inlined_call_operand.vmem [shape: f32[64,4], index: 3, kind: input, shape index: {}]
  %s4 = inlined_call_operand.vmem [shape: f32[4,64], index: 4, kind: input, shape index: {}]
  %s5 = inlined_call_operand.vmem [shape: f32[64,128], index: 5, kind: input, shape index: {}]
  %s6 = inlined_call_operand.vmem [shape: f32[5,32,32], index: 6, kind: input, shape index: {}]
  %s7 = inlined_call_operand.vmem [shape: f32[5,128,128], index: 7, kind: input, shape index: {}]
  %s8 = inlined_call_operand.vmem [shape: f32[1,128], index: 8, kind: input, shape index: {}]
  %s9 = inlined_call_operand.vmem [shape: f32[128,128], index: 9, kind: input, shape index: {}]
  %s10 = inlined_call_operand.vmem [shape: f32[7,32,32], index: 10, kind: input, shape index: {}]
  %s11 = inlined_call_operand.vmem [shape: f32[7,128,128], index: 11, kind: input, shape index: {}]
  %s12 = inlined_call_operand.vmem [shape: f32[1,128], index: 12, kind: input, shape index: {}]
  %s13 = inlined_call_operand.vmem [shape: f32[128,64], index: 13, kind: input, shape index: {}]
  %s14 = inlined_call_operand.vmem [shape: f32[128,64], index: 14, kind: input, shape index: {}]
  %s15 = inlined_call_operand.vmem [shape: f32[16,32], index: 15, kind: input, shape index: {}]
  %s16 = inlined_call_operand.vmem [shape: f32[16,32], index: 16, kind: input, shape index: {}]
  %s17 = inlined_call_operand.vmem [shape: f32[32,128], index: 17, kind: output, shape index: {0}]
  %s18 = inlined_call_operand.vmem [shape: f32[16,64], index: 18, kind: output, shape index: {1}]
  %19 = xla_tuple %s17, %s18
  %s20 = sld [smem:[#allocation0]]
  $region86: #{encoder_forward.1} parent=0
    _
  %s22 = ssub.s32 1, %s20
  %s23 = scalar_select 0, %s22, %s20
  // Predicated region
  $region2: #{encoder_forward.1} parent=0 // pred_check
    _
  $region3: #{encoder_forward.1} parent=0 // pred_check_branch
    %25 = sbr.rel (0) target = $region5
  $region4: #{encoder_forward.1} parent=0 // pred_region
    _
  $region5: #{encoder_forward.1} parent=0 // pred_fallthru
    _
  // Predicated region
  $region6: #{encoder_forward.1} parent=0 // pred_check
    _
  $region7: #{encoder_forward.1} parent=0 // pred_check_branch
    %27 = sbr.rel (0) target = $region9
  $region8: #{encoder_forward.1} parent=0 // pred_region
    _
  $region9: #{encoder_forward.1} parent=0 // pred_fallthru
    _
  // Predicated region
  $region10: #{encoder_forward.1} parent=0 // pred_check
    _
  $region11: #{encoder_forward.1} parent=0 // pred_check_branch
    %29 = sbr.rel (0) target = $region13
  $region12: #{encoder_forward.1} parent=0 // pred_region
    _
  $region13: #{encoder_forward.1} parent=0 // pred_fallthru
    _
  // Predicated region
  $region14: #{encoder_forward.1} parent=0 // pred_check
    _
  $region15: #{encoder_forward.1} parent=0 // pred_check_branch
    %31 = sbr.rel (0) target = $region17
  $region16: #{encoder_forward.1} parent=0 // pred_region
    _
  $region17: #{encoder_forward.1} parent=0 // pred_fallthru
    _
  // Predicated region
  $region18: #{encoder_forward.1} parent=0 // pred_check
    _
  $region19: #{encoder_forward.1} parent=0 // pred_check_branch
    %33 = sbr.rel (0) target = $region21
  $region20: #{encoder_forward.1} parent=0 // pred_region
    _
  $region21: #{encoder_forward.1} parent=0 // pred_fallthru
    _
  // Predicated region
  $region22: #{encoder_forward.1} parent=0 // pred_check
    _
  $region23: #{encoder_forward.1} parent=0 // pred_check_branch
    %35 = sbr.rel (0) target = $region25
  $region24: #{encoder_forward.1} parent=0 // pred_region
    _
  $region25: #{encoder_forward.1} parent=0 // pred_fallthru
    _
  // Predicated region
  $region26: #{encoder_forward.1} parent=0 // pred_check
    _
  $region27: #{encoder_forward.1} parent=0 // pred_check_branch
    %37 = sbr.rel (0) target = $region29
  $region28: #{encoder_forward.1} parent=0 // pred_region
    _
  $region29: #{encoder_forward.1} parent=0 // pred_fallthru
    _
  // Predicated region
  $region30: #{encoder_forward.1} parent=0 // pred_check
    _
  $region31: #{encoder_forward.1} parent=0 // pred_check_branch
    %39 = sbr.rel (0) target = $region33
  $region32: #{encoder_forward.1} parent=0 // pred_region
    _
  $region33: #{encoder_forward.1} parent=0 // pred_fallthru
    _
  // Predicated region
  $region34: #{encoder_forward.1} parent=0 // pred_check
    _
  $region35: #{encoder_forward.1} parent=0 // pred_check_branch
    %41 = sbr.rel (0) target = $region37
  $region36: #{encoder_forward.1} parent=0 // pred_region
    _
  $region37: #{encoder_forward.1} parent=0 // pred_fallthru
    _
  // Predicated region
  $region38: #{encoder_forward.1} parent=0 // pred_check
    _
  $region39: #{encoder_forward.1} parent=0 // pred_check_branch
    %43 = sbr.rel (0) target = $region41
  $region40: #{encoder_forward.1} parent=0 // pred_region
    _
  $region41: #{encoder_forward.1} parent=0 // pred_fallthru
    _
  // Predicated region
  $region42: #{encoder_forward.1} parent=0 // pred_check
    _
  $region43: #{encoder_forward.1} parent=0 // pred_check_branch
    %45 = sbr.rel (0) target = $region45
  $region44: #{encoder_forward.1} parent=0 // pred_region
    _
  $region45: #{encoder_forward.1} parent=0 // pred_fallthru
    _
  // Predicated region
  $region46: #{encoder_forward.1} parent=0 // pred_check
    _
  $region47: #{encoder_forward.1} parent=0 // pred_check_branch
    %47 = sbr.rel (0) target = $region49
  $region48: #{encoder_forward.1} parent=0 // pred_region
    _
  $region49: #{encoder_forward.1} parent=0 // pred_fallthru
    _
  // Predicated region
  $region50: #{encoder_forward.1} parent=0 // pred_check
    _
  $region51: #{encoder_forward.1} parent=0 // pred_check_branch
    %49 = sbr.rel (0) target = $region53
  $region52: #{encoder_forward.1} parent=0 // pred_region
    _
  $region53: #{encoder_forward.1} parent=0 // pred_fallthru
    _
  // Predicated region
  $region54: #{encoder_forward.1} parent=0 // pred_check
    _
  $region55: #{encoder_forward.1} parent=0 // pred_check_branch
    %51 = sbr.rel (0) target = $region57
  $region56: #{encoder_forward.1} parent=0 // pred_region
    _
  $region57: #{encoder_forward.1} parent=0 // pred_fallthru
    _
  // Predicated region
  $region58: #{encoder_forward.1} parent=0 // pred_check
    _
  $region59: #{encoder_forward.1} parent=0 // pred_check_branch
    %53 = sbr.rel (0) target = $region61
  $region60: #{encoder_forward.1} parent=0 // pred_region
    _
  $region61: #{encoder_forward.1} parent=0 // pred_fallthru
    _
  // Predicated region
  $region62: #{encoder_forward.1} parent=0 // pred_check
    _
  $region63: #{encoder_forward.1} parent=0 // pred_check_branch
    %55 = sbr.rel (0) target = $region65
  $region64: #{encoder_forward.1} parent=0 // pred_region
    _
  $region65: #{encoder_forward.1} parent=0 // pred_fallthru
    _
  // Predicated region
  $region66: #{encoder_forward.1} parent=0 // pred_check
    _
  $region67: #{encoder_forward.1} parent=0 // pred_check_branch
    %57 = sbr.rel (0) target = $region69
  $region68: #{encoder_forward.1} parent=0 // pred_region
    _
  $region69: #{encoder_forward.1} parent=0 // pred_fallthru
    _
  %v58 = vld [vmem:[%s0] sm:$0xff]
  %v59 = vld [vmem:[%s0 + $0x8] sm:$0xff]
  %v60 = vld [vmem:[%s0 + $0x10] sm:$0xff]
  %v61 = vld [vmem:[%s0 + $0x18] sm:$0xff]
  %vm62 = vcmask 523264
  %v63 = vsel %vm62, %v58, 0.0
  %v64 = vsel %vm62, %v59, 0.0
  %v65 = vadd.f32 %v63, %v64
  %v66 = vsel %vm62, %v60, 0.0
  %v67 = vadd.f32 %v65, %v66
  %v68 = vsel %vm62, %v61, 0.0
  %v69 = vadd.f32 %v67, %v68
  %v70 = vrot.slane %v69, 4
  %v71 = vadd.f32 %v69, %v70
  %v72 = vrot.slane %v71, 2
  %v73 = vadd.f32 %v71, %v72
  %v74 = vrot.slane %v73, 1
  %v75 = vadd.f32 %v73, %v74
  %v76 = vld [vmem:[%s3] sm:$0xff]
  %v77 = vld [vmem:[%s3 + $0x8] sm:$0xff]
  %v78 = vld [vmem:[%s3 + $0x10] sm:$0xff]
  %v79 = vld [vmem:[%s3 + $0x18] sm:$0xff]
  %v80 = vld [vmem:[%s3 + $0x20] sm:$0xff]
  %v81 = vld [vmem:[%s3 + $0x28] sm:$0xff]
  %v82 = vld [vmem:[%s3 + $0x30] sm:$0xff]
  %v83 = vld [vmem:[%s3 + $0x38] sm:$0xff]
  %v85 = vsel %vm62, %v75, 0
  %87 = vmatprep.subr.mxu0 0.0
  %88 = vmatpush1.msra.mxu0 %v76
  %89 = vmatprep.subr.mxu0 0.0
  %90 = vmatpush1.msra.mxu0 %v77
  %91 = vmatprep.subr.mxu0 0.0
  %92 = vmatpush1.msra.mxu0 %v78
  %93 = vmatprep.subr.mxu0 0.0
  %94 = vmatpush1.msra.mxu0 %v79
  %95 = vmatprep.subr.mxu0 0.0
  %96 = vmatpush1.msra.mxu0 %v80
  %97 = vmatprep.subr.mxu0 0.0
  %98 = vmatpush1.msra.mxu0 %v81
  %99 = vmatprep.subr.mxu0 0.0
  %100 = vmatpush1.msra.mxu0 %v82
  %101 = vmatprep.subr.mxu0 0.0
  %102 = vmatpush1.msra.mxu0 %v83
  %103 = vmatprep.subr.mxu0 0.0
  %104 = vmatpush1.msra.mxu0 0.0
  %105 = vmatprep.subr.mxu0 0.0
  %106 = vmatpush1.msra.mxu0 0.0
  %107 = vmatprep.subr.mxu0 0.0
  %108 = vmatpush1.msra.mxu0 0.0
  %109 = vmatprep.subr.mxu0 0.0
  %110 = vmatpush1.msra.mxu0 0.0
  %111 = vmatprep.subr.mxu0 0.0
  %112 = vmatpush1.msra.mxu0 0.0
  %113 = vmatprep.subr.mxu0 0.0
  %114 = vmatpush1.msra.mxu0 0.0
  %115 = vmatprep.subr.mxu0 0.0
  %116 = vmatpush1.msra.mxu0 0.0
  %117 = vmatprep.subr.mxu0 0.0
  %118 = vmatpush1.msra.mxu0 0.0
  %119 = vmatprep.subr.mxu0 0.0
  %120 = vmatpush1.msra.mxu0 0.0
  %121 = vmatprep.subr.mxu0 0.0
  %122 = vmatpush1.msra.mxu0 0.0
  %123 = vmatprep.subr.mxu0 0.0
  %124 = vmatpush1.msra.mxu0 0.0
  %125 = vmatprep.subr.mxu0 0.0
  %126 = vmatpush1.msra.mxu0 0.0
  %127 = vmatprep.subr.mxu0 0.0
  %128 = vmatpush1.msra.mxu0 0.0
  %129 = vmatprep.subr.mxu0 0.0
  %130 = vmatpush1.msra.mxu0 0.0
  %131 = vmatprep.subr.mxu0 0.0
  %132 = vmatpush1.msra.mxu0 0.0
  %133 = vmatprep.subr.mxu0 0.0
  %134 = vmatpush1.msra.mxu0 0.0
  %135 = vmatprep.subr.mxu0 0.0
  %136 = vmatpush1.msra.mxu0 0.0
  %137 = vmatprep.subr.mxu0 0.0
  %138 = vmatpush1.msra.mxu0 0.0
  %139 = vmatprep.subr.mxu0 0.0
  %140 = vmatpush1.msra.mxu0 0.0
  %141 = vmatprep.subr.mxu0 0.0
  %142 = vmatpush1.msra.mxu0 0.0
  %143 = vmatprep.subr.mxu0 0.0
  %144 = vmatpush1.msra.mxu0 0.0
  %145 = vmatprep.subr.mxu0 0.0
  %146 = vmatpush1.msra.mxu0 0.0
  %147 = vmatprep.subr.mxu0 0.0
  %148 = vmatpush1.msra.mxu0 0.0
  %149 = vmatprep.subr.mxu0 0.0
  %150 = vmatpush1.msra.mxu0 0.0
  %151 = vmatprep.mubr.f32.mxu0 0.0
  %152 = vmatmul.mubr.f32.gmra.mrb[0].mxu0 %v85
  %v153 = vpop.f32.mrb[0].mxu0
  %v154 = vadd.f32 0.0, %v153
  %v155 = vpop.f32.mrb[0].mxu0
  %156 = vdwg.mxu0
  %v157 = vmul.f32 %v58, %v58
  %v158 = vmul.f32 %v59, %v59
  %v159 = vmul.f32 %v60, %v60
  %v160 = vmul.f32 %v61, %v61
  %v161 = vsel %vm62, %v157, 0.0
  %v162 = vsel %vm62, %v158, 0.0
  %v163 = vadd.f32 %v161, %v162
  %v164 = vsel %vm62, %v159, 0.0
  %v165 = vadd.f32 %v163, %v164
  %v166 = vsel %vm62, %v160, 0.0
  %v167 = vadd.f32 %v165, %v166
  %v168 = vrot.slane %v167, 4
  %v169 = vadd.f32 %v167, %v168
  %v170 = vrot.slane %v169, 2
  %v171 = vadd.f32 %v169, %v170
  %v172 = vrot.slane %v171, 1
  %v173 = vadd.f32 %v171, %v172
  %v175 = vsel %vm62, %v173, 0
  %177 = vmatprep.subr.mxu0 0.0
  %178 = vmatpush1.msra.mxu0 %v76
  %179 = vmatprep.subr.mxu0 0.0
  %180 = vmatpush1.msra.mxu0 %v77
  %181 = vmatprep.subr.mxu0 0.0
  %182 = vmatpush1.msra.mxu0 %v78
  %183 = vmatprep.subr.mxu0 0.0
  %184 = vmatpush1.msra.mxu0 %v79
  %185 = vmatprep.subr.mxu0 0.0
  %186 = vmatpush1.msra.mxu0 %v80
  %187 = vmatprep.subr.mxu0 0.0
  %188 = vmatpush1.msra.mxu0 %v81
  %189 = vmatprep.subr.mxu0 0.0
  %190 = vmatpush1.msra.mxu0 %v82
  %191 = vmatprep.subr.mxu0 0.0
  %192 = vmatpush1.msra.mxu0 %v83
  %193 = vmatprep.subr.mxu0 0.0
  %194 = vmatpush1.msra.mxu0 0.0
  %195 = vmatprep.subr.mxu0 0.0
  %196 = vmatpush1.msra.mxu0 0.0
  %197 = vmatprep.subr.mxu0 0.0
  %198 = vmatpush1.msra.mxu0 0.0
  %199 = vmatprep.subr.mxu0 0.0
  %200 = vmatpush1.msra.mxu0 0.0
  %201 = vmatprep.subr.mxu0 0.0
  %202 = vmatpush1.msra.mxu0 0.0
  %203 = vmatprep.subr.mxu0 0.0
  %204 = vmatpush1.msra.mxu0 0.0
  %205 = vmatprep.subr.mxu0 0.0
  %206 = vmatpush1.msra.mxu0 0.0
  %207 = vmatprep.subr.mxu0 0.0
  %208 = vmatpush1.msra.mxu0 0.0
  %209 = vmatprep.subr.mxu0 0.0
  %210 = vmatpush1.msra.mxu0 0.0
  %211 = vmatprep.subr.mxu0 0.0
  %212 = vmatpush1.msra.mxu0 0.0
  %213 = vmatprep.subr.mxu0 0.0
  %214 = vmatpush1.msra.mxu0 0.0
  %215 = vmatprep.subr.mxu0 0.0
  %216 = vmatpush1.msra.mxu0 0.0
  %217 = vmatprep.subr.mxu0 0.0
  %218 = vmatpush1.msra.mxu0 0.0
  %219 = vmatprep.subr.mxu0 0.0
  %220 = vmatpush1.msra.mxu0 0.0
  %221 = vmatprep.subr.mxu0 0.0
  %222 = vmatpush1.msra.mxu0 0.0
  %223 = vmatprep.subr.mxu0 0.0
  %224 = vmatpush1.msra.mxu0 0.0
  %225 = vmatprep.subr.mxu0 0.0
  %226 = vmatpush1.msra.mxu0 0.0
  %227 = vmatprep.subr.mxu0 0.0
  %228 = vmatpush1.msra.mxu0 0.0
  %229 = vmatprep.subr.mxu0 0.0
  %230 = vmatpush1.msra.mxu0 0.0
  %231 = vmatprep.subr.mxu0 0.0
  %232 = vmatpush1.msra.mxu0 0.0
  %233 = vmatprep.subr.mxu0 0.0
  %234 = vmatpush1.msra.mxu0 0.0
  %235 = vmatprep.subr.mxu0 0.0
  %236 = vmatpush1.msra.mxu0 0.0
  %237 = vmatprep.subr.mxu0 0.0
  %238 = vmatpush1.msra.mxu0 0.0
  %239 = vmatprep.subr.mxu0 0.0
  %240 = vmatpush1.msra.mxu0 0.0
  %241 = vmatprep.mubr.f32.mxu0 0.0
  %242 = vmatmul.mubr.f32.gmra.mrb[0].mxu0 %v175
  %v243 = vpop.f32.mrb[0].mxu0
  %v244 = vadd.f32 0.0, %v243
  %v245 = vpop.f32.mrb[0].mxu0
  %246 = vdwg.mxu0
  %v247 = vmul.f32 %v154, 0.001953125
  %v248 = vmul.f32 %v244, 0.001953125
  %v249 = vmul.f32 %v247, %v247
  %v250 = vsub.f32 %v248, %v249
  %v251 = vmax.f32 %v250, 0.0
  %v252 = vld [vmem:[%s1] sm:$0x1]
  %v253 = vadd.f32 %v251, 1e-05
  %v254 = vrsqrt.pop %v253
  %v255 = vmul.f32 %v252, %v254
  %v256 = vld [vmem:[%s2] sm:$0x1]
  %v257 = vmul.f32 %v255, %v247
  %v258 = vsub.f32 %v256, %v257
  %v259 = vld [vmem:[%s4] sm:$0xf]
  %vm260 = vcmask 31744
  %v262 = vsel %vm260, %v255, 0
  %vm264 = vcmask 1043456
  %v266 = vsel %vm264, %v259, 0
  %268 = vmatprep.subr.mxu0 0.0
  %269 = vmatpush1.msra.mxu0 %v266
  %270 = vmatprep.subr.mxu0 0.0
  %271 = vmatpush1.msra.mxu0 0.0
  %272 = vmatprep.subr.mxu0 0.0
  %273 = vmatpush1.msra.mxu0 0.0
  %274 = vmatprep.subr.mxu0 0.0
  %275 = vmatpush1.msra.mxu0 0.0
  %276 = vmatprep.subr.mxu0 0.0
  %277 = vmatpush1.msra.mxu0 0.0
  %278 = vmatprep.subr.mxu0 0.0
  %279 = vmatpush1.msra.mxu0 0.0
  %280 = vmatprep.subr.mxu0 0.0
  %281 = vmatpush1.msra.mxu0 0.0
  %282 = vmatprep.subr.mxu0 0.0
  %283 = vmatpush1.msra.mxu0 0.0
  %284 = vmatprep.subr.mxu0 0.0
  %285 = vmatpush1.msra.mxu0 0.0
  %286 = vmatprep.subr.mxu0 0.0
  %287 = vmatpush1.msra.mxu0 0.0
  %288 = vmatprep.subr.mxu0 0.0
  %289 = vmatpush1.msra.mxu0 0.0
  %290 = vmatprep.subr.mxu0 0.0
  %291 = vmatpush1.msra.mxu0 0.0
  %292 = vmatprep.subr.mxu0 0.0
  %293 = vmatpush1.msra.mxu0 0.0
  %294 = vmatprep.subr.mxu0 0.0
  %295 = vmatpush1.msra.mxu0 0.0
  %296 = vmatprep.subr.mxu0 0.0
  %297 = vmatpush1.msra.mxu0 0.0
  %298 = vmatprep.subr.mxu0 0.0
  %299 = vmatpush1.msra.mxu0 0.0
  %300 = vmatprep.subr.mxu0 0.0
  %301 = vmatpush1.msra.mxu0 0.0
  %302 = vmatprep.subr.mxu0 0.0
  %303 = vmatpush1.msra.mxu0 0.0
  %304 = vmatprep.subr.mxu0 0.0
  %305 = vmatpush1.msra.mxu0 0.0
  %306 = vmatprep.subr.mxu0 0.0
  %307 = vmatpush1.msra.mxu0 0.0
  %308 = vmatprep.subr.mxu0 0.0
  %309 = vmatpush1.msra.mxu0 0.0
  %310 = vmatprep.subr.mxu0 0.0
  %311 = vmatpush1.msra.mxu0 0.0
  %312 = vmatprep.subr.mxu0 0.0
  %313 = vmatpush1.msra.mxu0 0.0
  %314 = vmatprep.subr.mxu0 0.0
  %315 = vmatpush1.msra.mxu0 0.0
  %316 = vmatprep.subr.mxu0 0.0
  %317 = vmatpush1.msra.mxu0 0.0
  %318 = vmatprep.subr.mxu0 0.0
  %319 = vmatpush1.msra.mxu0 0.0
  %320 = vmatprep.subr.mxu0 0.0
  %321 = vmatpush1.msra.mxu0 0.0
  %322 = vmatprep.subr.mxu0 0.0
  %323 = vmatpush1.msra.mxu0 0.0
  %324 = vmatprep.subr.mxu0 0.0
  %325 = vmatpush1.msra.mxu0 0.0
  %326 = vmatprep.subr.mxu0 0.0
  %327 = vmatpush1.msra.mxu0 0.0
  %328 = vmatprep.subr.mxu0 0.0
  %329 = vmatpush1.msra.mxu0 0.0
  %330 = vmatprep.subr.mxu0 0.0
  %331 = vmatpush1.msra.mxu0 0.0
  %332 = vmatprep.mubr.f32.mxu0 0.0
  %333 = vmatmul.mubr.f32.gmra.mrb[0].mxu0 %v262
  %v334 = vpop.f32.mrb[0].mxu0
  %v335 = vadd.f32 0.0, %v334
  %v336 = vpop.f32.mrb[0].mxu0
  %337 = vdwg.mxu0
  %v339 = vsel %vm260, %v258, 0
  %341 = vmatprep.subr.mxu0 0.0
  %342 = vmatpush1.msra.mxu0 %v266
  %343 = vmatprep.subr.mxu0 0.0
  %344 = vmatpush1.msra.mxu0 0.0
  %345 = vmatprep.subr.mxu0 0.0
  %346 = vmatpush1.msra.mxu0 0.0
  %347 = vmatprep.subr.mxu0 0.0
  %348 = vmatpush1.msra.mxu0 0.0
  %349 = vmatprep.subr.mxu0 0.0
  %350 = vmatpush1.msra.mxu0 0.0
  %351 = vmatprep.subr.mxu0 0.0
  %352 = vmatpush1.msra.mxu0 0.0
  %353 = vmatprep.subr.mxu0 0.0
  %354 = vmatpush1.msra.mxu0 0.0
  %355 = vmatprep.subr.mxu0 0.0
  %356 = vmatpush1.msra.mxu0 0.0
  %357 = vmatprep.subr.mxu0 0.0
  %358 = vmatpush1.msra.mxu0 0.0
  %359 = vmatprep.subr.mxu0 0.0
  %360 = vmatpush1.msra.mxu0 0.0
  %361 = vmatprep.subr.mxu0 0.0
  %362 = vmatpush1.msra.mxu0 0.0
  %363 = vmatprep.subr.mxu0 0.0
  %364 = vmatpush1.msra.mxu0 0.0
  %365 = vmatprep.subr.mxu0 0.0
  %366 = vmatpush1.msra.mxu0 0.0
  %367 = vmatprep.subr.mxu0 0.0
  %368 = vmatpush1.msra.mxu0 0.0
  %369 = vmatprep.subr.mxu0 0.0
  %370 = vmatpush1.msra.mxu0 0.0
  %371 = vmatprep.subr.mxu0 0.0
  %372 = vmatpush1.msra.mxu0 0.0
  %373 = vmatprep.subr.mxu0 0.0
  %374 = vmatpush1.msra.mxu0 0.0
  %375 = vmatprep.subr.mxu0 0.0
  %376 = vmatpush1.msra.mxu0 0.0
  %377 = vmatprep.subr.mxu0 0.0
  %378 = vmatpush1.msra.mxu0 0.0
  %379 = vmatprep.subr.mxu0 0.0
  %380 = vmatpush1.msra.mxu0 0.0
  %381 = vmatprep.subr.mxu0 0.0
  %382 = vmatpush1.msra.mxu0 0.0
  %383 = vmatprep.subr.mxu0 0.0
  %384 = vmatpush1.msra.mxu0 0.0
  %385 = vmatprep.subr.mxu0 0.0
  %386 = vmatpush1.msra.mxu0 0.0
  %387 = vmatprep.subr.mxu0 0.0
  %388 = vmatpush1.msra.mxu0 0.0
  %389 = vmatprep.subr.mxu0 0.0
  %390 = vmatpush1.msra.mxu0 0.0
  %391 = vmatprep.subr.mxu0 0.0
  %392 = vmatpush1.msra.mxu0 0.0
  %393 = vmatprep.subr.mxu0 0.0
  %394 = vmatpush1.msra.mxu0 0.0
  %395 = vmatprep.subr.mxu0 0.0
  %396 = vmatpush1.msra.mxu0 0.0
  %397 = vmatprep.subr.mxu0 0.0
  %398 = vmatpush1.msra.mxu0 0.0
  %399 = vmatprep.subr.mxu0 0.0
  %400 = vmatpush1.msra.mxu0 0.0
  %401 = vmatprep.subr.mxu0 0.0
  %402 = vmatpush1.msra.mxu0 0.0
  %403 = vmatprep.subr.mxu0 0.0
  %404 = vmatpush1.msra.mxu0 0.0
  %405 = vmatprep.mubr.f32.mxu0 0.0
  %406 = vmatmul.mubr.f32.gmra.mrb[0].mxu0 %v339
  %v407 = vpop.f32.mrb[0].mxu0
  %v408 = vadd.f32 0.0, %v407
  %v409 = vpop.f32.mrb[0].mxu0
  %410 = vdwg.mxu0
  %v411 = vlaneseq
  %v412 = vshrl.u32 %v411, 7
  %v413 = vsub.s32 0, %v412
  %v414 = vrot.slane %v335, %v413
  %v415 = vmul.f32 %v58, %v414
  %v416 = vmul.f32 %v59, %v414
  %v417 = vmul.f32 %v60, %v414
  %v418 = vmul.f32 %v61, %v414
  %v419 = vlaneseq
  %v420 = vshrl.u32 %v419, 7
  %v421 = vsub.s32 0, %v420
  %v422 = vrot.slane %v408, %v421
  %v423 = vadd.f32 %v415, %v422
  %v424 = vadd.f32 %v416, %v422
  %v425 = vadd.f32 %v417, %v422
  %v426 = vadd.f32 %v418, %v422
  %v427 = vld [vmem:[%s5] sm:$0xff]
  %v428 = vld [vmem:[%s5 + $0x8] sm:$0xff]
  %v429 = vld [vmem:[%s5 + $0x10] sm:$0xff]
  %v430 = vld [vmem:[%s5 + $0x18] sm:$0xff]
  %v431 = vld [vmem:[%s5 + $0x20] sm:$0xff]
  %v432 = vld [vmem:[%s5 + $0x28] sm:$0xff]
  %v433 = vld [vmem:[%s5 + $0x30] sm:$0xff]
  %v434 = vld [vmem:[%s5 + $0x38] sm:$0xff]
  %v436 = vsel %vm62, %v423, 0
  %v439 = vsel %vm62, %v424, 0
  %v442 = vsel %vm62, %v425, 0
  %v445 = vsel %vm62, %v426, 0
  %447 = vmatprep.subr.mxu0 0.0
  %448 = vmatpush1.msra.mxu0 %v427
  %449 = vmatprep.subr.mxu0 0.0
  %450 = vmatpush1.msra.mxu0 %v428
  %451 = vmatprep.subr.mxu0 0.0
  %452 = vmatpush1.msra.mxu0 %v429
  %453 = vmatprep.subr.mxu0 0.0
  %454 = vmatpush1.msra.mxu0 %v430
  %455 = vmatprep.subr.mxu0 0.0
  %456 = vmatpush1.msra.mxu0 %v431
  %457 = vmatprep.subr.mxu0 0.0
  %458 = vmatpush1.msra.mxu0 %v432
  %459 = vmatprep.subr.mxu0 0.0
  %460 = vmatpush1.msra.mxu0 %v433
  %461 = vmatprep.subr.mxu0 0.0
  %462 = vmatpush1.msra.mxu0 %v434
  %463 = vmatprep.subr.mxu0 0.0
  %464 = vmatpush1.msra.mxu0 0.0
  %465 = vmatprep.subr.mxu0 0.0
  %466 = vmatpush1.msra.mxu0 0.0
  %467 = vmatprep.subr.mxu0 0.0
  %468 = vmatpush1.msra.mxu0 0.0
  %469 = vmatprep.subr.mxu0 0.0
  %470 = vmatpush1.msra.mxu0 0.0
  %471 = vmatprep.subr.mxu0 0.0
  %472 = vmatpush1.msra.mxu0 0.0
  %473 = vmatprep.subr.mxu0 0.0
  %474 = vmatpush1.msra.mxu0 0.0
  %475 = vmatprep.subr.mxu0 0.0
  %476 = vmatpush1.msra.mxu0 0.0
  %477 = vmatprep.subr.mxu0 0.0
  %478 = vmatpush1.msra.mxu0 0.0
  %479 = vmatprep.subr.mxu0 0.0
  %480 = vmatpush1.msra.mxu0 0.0
  %481 = vmatprep.subr.mxu0 0.0
  %482 = vmatpush1.msra.mxu0 0.0
  %483 = vmatprep.subr.mxu0 0.0
  %484 = vmatpush1.msra.mxu0 0.0
  %485 = vmatprep.subr.mxu0 0.0
  %486 = vmatpush1.msra.mxu0 0.0
  %487 = vmatprep.subr.mxu0 0.0
  %488 = vmatpush1.msra.mxu0 0.0
  %489 = vmatprep.subr.mxu0 0.0
  %490 = vmatpush1.msra.mxu0 0.0
  %491 = vmatprep.subr.mxu0 0.0
  %492 = vmatpush1.msra.mxu0 0.0
  %493 = vmatprep.subr.mxu0 0.0
  %494 = vmatpush1.msra.mxu0 0.0
  %495 = vmatprep.subr.mxu0 0.0
  %496 = vmatpush1.msra.mxu0 0.0
  %497 = vmatprep.subr.mxu0 0.0
  %498 = vmatpush1.msra.mxu0 0.0
  %499 = vmatprep.subr.mxu0 0.0
  %500 = vmatpush1.msra.mxu0 0.0
  %501 = vmatprep.subr.mxu0 0.0
  %502 = vmatpush1.msra.mxu0 0.0
  %503 = vmatprep.subr.mxu0 0.0
  %504 = vmatpush1.msra.mxu0 0.0
  %505 = vmatprep.subr.mxu0 0.0
  %506 = vmatpush1.msra.mxu0 0.0
  %507 = vmatprep.subr.mxu0 0.0
  %508 = vmatpush1.msra.mxu0 0.0
  %509 = vmatprep.subr.mxu0 0.0
  %510 = vmatpush1.msra.mxu0 0.0
  %511 = vmatprep.mubr.f32.mxu0 0.0
  %512 = vmatmul.mubr.f32.gmra.mrb[0].mxu0 %v436
  %v513 = vpop.f32.mrb[0].mxu0
  %v514 = vadd.f32 0.0, %v513
  %v515 = vpop.f32.mrb[0].mxu0
  %516 = vmatprep.mubr.f32.mxu0 0.0
  %517 = vmatmul.mubr.f32.gmra.mrb[0].mxu0 %v439
  %v518 = vpop.f32.mrb[0].mxu0
  %v519 = vadd.f32 0.0, %v518
  %v520 = vpop.f32.mrb[0].mxu0
  %521 = vmatprep.mubr.f32.mxu0 0.0
  %522 = vmatmul.mubr.f32.gmra.mrb[0].mxu0 %v442
  %v523 = vpop.f32.mrb[0].mxu0
  %v524 = vadd.f32 0.0, %v523
  %v525 = vpop.f32.mrb[0].mxu0
  %526 = vmatprep.mubr.f32.mxu0 0.0
  %527 = vmatmul.mubr.f32.gmra.mrb[0].mxu0 %v445
  %v528 = vpop.f32.mrb[0].mxu0
  %v529 = vadd.f32 0.0, %v528
  %v530 = vpop.f32.mrb[0].mxu0
  %531 = vdwg.mxu0
  %vm532 = vcmp.ge.f32.partialorder %v514, 0.0
  %vm533 = vcmp.ge.f32.partialorder %v519, 0.0
  %vm534 = vcmp.ge.f32.partialorder %v524, 0.0
  %vm535 = vcmp.ge.f32.partialorder %v529, 0.0
  %v536 = vmul.f32 %v514, 0.01
  %v537 = vmul.f32 %v519, 0.01
  %v538 = vmul.f32 %v524, 0.01
  %v539 = vmul.f32 %v529, 0.01
  %v540 = vsel %vm532, %v514, %v536
  %v541 = vsel %vm533, %v519, %v537
  %v542 = vsel %vm534, %v524, %v538
  %v543 = vsel %vm535, %v529, %v539
  %v544 = vld [vmem:[%s8] sm:$0x1]
  %v546 = vlaneseq
  %v547 = vshrl.u32 %v546, 7
  %v548 = vsub.s32 0, %v547
  %v549 = vrot.slane %v544, %v548
  %v551 = vld [vmem:[%s6] sm:$0xff]
  %v552 = vld [vmem:[%s6 + $0x8] sm:$0xff]
  %v553 = vld [vmem:[%s6 + $0x10] sm:$0xff]
  %v554 = vld [vmem:[%s6 + $0x18] sm:$0xff]
  %vm555 = vcmask 261120
  %v557 = vsel %vm555, %v551, 0
  %v560 = vsel %vm555, %v552, 0
  %v563 = vsel %vm555, %v553, 0
  %v566 = vsel %vm555, %v554, 0
  %568 = vmatprep.subr.mxu0 0.0
  %569 = vmatpush1.msra.mxu0 %v540
  %570 = vmatprep.subr.mxu0 0.0
  %571 = vmatpush1.msra.mxu0 %v541
  %572 = vmatprep.subr.mxu0 0.0
  %573 = vmatpush1.msra.mxu0 %v542
  %574 = vmatprep.subr.mxu0 0.0
  %575 = vmatpush1.msra.mxu0 %v543
  %576 = vmatprep.subr.mxu0 0.0
  %577 = vmatpush1.msra.mxu0 0.0
  %578 = vmatprep.subr.mxu0 0.0
  %579 = vmatpush1.msra.mxu0 0.0
  %580 = vmatprep.subr.mxu0 0.0
  %581 = vmatpush1.msra.mxu0 0.0
  %582 = vmatprep.subr.mxu0 0.0
  %583 = vmatpush1.msra.mxu0 0.0
  %584 = vmatprep.subr.mxu0 0.0
  %585 = vmatpush1.msra.mxu0 0.0
  %586 = vmatprep.subr.mxu0 0.0
  %587 = vmatpush1.msra.mxu0 0.0
  %588 = vmatprep.subr.mxu0 0.0
  %589 = vmatpush1.msra.mxu0 0.0
  %590 = vmatprep.subr.mxu0 0.0
  %591 = vmatpush1.msra.mxu0 0.0
  %592 = vmatprep.subr.mxu0 0.0
  %593 = vmatpush1.msra.mxu0 0.0
  %594 = vmatprep.subr.mxu0 0.0
  %595 = vmatpush1.msra.mxu0 0.0
  %596 = vmatprep.subr.mxu0 0.0
  %597 = vmatpush1.msra.mxu0 0.0
  %598 = vmatprep.subr.mxu0 0.0
  %599 = vmatpush1.msra.mxu0 0.0
  %600 = vmatprep.subr.mxu0 0.0
  %601 = vmatpush1.msra.mxu0 0.0
  %602 = vmatprep.subr.mxu0 0.0
  %603 = vmatpush1.msra.mxu0 0.0
  %604 = vmatprep.subr.mxu0 0.0
  %605 = vmatpush1.msra.mxu0 0.0
  %606 = vmatprep.subr.mxu0 0.0
  %607 = vmatpush1.msra.mxu0 0.0
  %608 = vmatprep.subr.mxu0 0.0
  %609 = vmatpush1.msra.mxu0 0.0
  %610 = vmatprep.subr.mxu0 0.0
  %611 = vmatpush1.msra.mxu0 0.0
  %612 = vmatprep.subr.mxu0 0.0
  %613 = vmatpush1.msra.mxu0 0.0
  %614 = vmatprep.subr.mxu0 0.0
  %615 = vmatpush1.msra.mxu0 0.0
  %616 = vmatprep.subr.mxu0 0.0
  %617 = vmatpush1.msra.mxu0 0.0
  %618 = vmatprep.subr.mxu0 0.0
  %619 = vmatpush1.msra.mxu0 0.0
  %620 = vmatprep.subr.mxu0 0.0
  %621 = vmatpush1.msra.mxu0 0.0
  %622 = vmatprep.subr.mxu0 0.0
  %623 = vmatpush1.msra.mxu0 0.0
  %624 = vmatprep.subr.mxu0 0.0
  %625 = vmatpush1.msra.mxu0 0.0
  %626 = vmatprep.subr.mxu0 0.0
  %627 = vmatpush1.msra.mxu0 0.0
  %628 = vmatprep.subr.mxu0 0.0
  %629 = vmatpush1.msra.mxu0 0.0
  %630 = vmatprep.subr.mxu0 0.0
  %631 = vmatpush1.msra.mxu0 0.0
  %632 = vmatprep.mubr.f32.mxu0 0.0
  %633 = vmatmul.mubr.f32.gmra.mrb[0].mxu0 %v557
  %v634 = vpop.f32.mrb[0].mxu0
  %v635 = vadd.f32 0.0, %v634
  %v636 = vpop.f32.mrb[0].mxu0
  %637 = vmatprep.mubr.f32.mxu0 0.0
  %638 = vmatmul.mubr.f32.gmra.mrb[0].mxu0 %v560
  %v639 = vpop.f32.mrb[0].mxu0
  %v640 = vadd.f32 0.0, %v639
  %v641 = vpop.f32.mrb[0].mxu0
  %642 = vmatprep.mubr.f32.mxu0 0.0
  %643 = vmatmul.mubr.f32.gmra.mrb[0].mxu0 %v563
  %v644 = vpop.f32.mrb[0].mxu0
  %v645 = vadd.f32 0.0, %v644
  %v646 = vpop.f32.mrb[0].mxu0
  %647 = vmatprep.mubr.f32.mxu0 0.0
  %648 = vmatmul.mubr.f32.gmra.mrb[0].mxu0 %v566
  %v649 = vpop.f32.mrb[0].mxu0
  %v650 = vadd.f32 0.0, %v649
  %v651 = vpop.f32.mrb[0].mxu0
  %652 = vdwg.mxu0
  %v653 = vld [vmem:[%s7] sm:$0xff]
  %v654 = vld [vmem:[%s7 + $0x8] sm:$0xff]
  %v655 = vld [vmem:[%s7 + $0x10] sm:$0xff]
  %v656 = vld [vmem:[%s7 + $0x18] sm:$0xff]
  %v657 = vld [vmem:[%s7 + $0x20] sm:$0xff]
  %v658 = vld [vmem:[%s7 + $0x28] sm:$0xff]
  %v659 = vld [vmem:[%s7 + $0x30] sm:$0xff]
  %v660 = vld [vmem:[%s7 + $0x38] sm:$0xff]
  %v661 = vld [vmem:[%s7 + $0x40] sm:$0xff]
  %v662 = vld [vmem:[%s7 + $0x48] sm:$0xff]
  %v663 = vld [vmem:[%s7 + $0x50] sm:$0xff]
  %v664 = vld [vmem:[%s7 + $0x58] sm:$0xff]
  %v665 = vld [vmem:[%s7 + $0x60] sm:$0xff]
  %v666 = vld [vmem:[%s7 + $0x68] sm:$0xff]
  %v667 = vld [vmem:[%s7 + $0x70] sm:$0xff]
  %v668 = vld [vmem:[%s7 + $0x78] sm:$0xff]
  %669 = vmatprep.subr.mxu0 0.0
  %670 = vmatpush1.msra.mxu0 %v653
  %671 = vmatprep.subr.mxu0 0.0
  %672 = vmatpush1.msra.mxu0 %v654
  %673 = vmatprep.subr.mxu0 0.0
  %674 = vmatpush1.msra.mxu0 %v655
  %675 = vmatprep.subr.mxu0 0.0
  %676 = vmatpush1.msra.mxu0 %v656
  %677 = vmatprep.subr.mxu0 0.0
  %678 = vmatpush1.msra.mxu0 %v657
  %679 = vmatprep.subr.mxu0 0.0
  %680 = vmatpush1.msra.mxu0 %v658
  %681 = vmatprep.subr.mxu0 0.0
  %682 = vmatpush1.msra.mxu0 %v659
  %683 = vmatprep.subr.mxu0 0.0
  %684 = vmatpush1.msra.mxu0 %v660
  %685 = vmatprep.subr.mxu0 0.0
  %686 = vmatpush1.msra.mxu0 %v661
  %687 = vmatprep.subr.mxu0 0.0
  %688 = vmatpush1.msra.mxu0 %v662
  %689 = vmatprep.subr.mxu0 0.0
  %690 = vmatpush1.msra.mxu0 %v663
  %691 = vmatprep.subr.mxu0 0.0
  %692 = vmatpush1.msra.mxu0 %v664
  %693 = vmatprep.subr.mxu0 0.0
  %694 = vmatpush1.msra.mxu0 %v665
  %695 = vmatprep.subr.mxu0 0.0
  %696 = vmatpush1.msra.mxu0 %v666
  %697 = vmatprep.subr.mxu0 0.0
  %698 = vmatpush1.msra.mxu0 %v667
  %699 = vmatprep.subr.mxu0 0.0
  %700 = vmatpush1.msra.mxu0 %v668
  %701 = vmatprep.subr.mxu0 0.0
  %702 = vmatpush1.msra.mxu0 0.0
  %703 = vmatprep.subr.mxu0 0.0
  %704 = vmatpush1.msra.mxu0 0.0
  %705 = vmatprep.subr.mxu0 0.0
  %706 = vmatpush1.msra.mxu0 0.0
  %707 = vmatprep.subr.mxu0 0.0
  %708 = vmatpush1.msra.mxu0 0.0
  %709 = vmatprep.subr.mxu0 0.0
  %710 = vmatpush1.msra.mxu0 0.0
  %711 = vmatprep.subr.mxu0 0.0
  %712 = vmatpush1.msra.mxu0 0.0
  %713 = vmatprep.subr.mxu0 0.0
  %714 = vmatpush1.msra.mxu0 0.0
  %715 = vmatprep.subr.mxu0 0.0
  %716 = vmatpush1.msra.mxu0 0.0
  %717 = vmatprep.subr.mxu0 0.0
  %718 = vmatpush1.msra.mxu0 0.0
  %719 = vmatprep.subr.mxu0 0.0
  %720 = vmatpush1.msra.mxu0 0.0
  %721 = vmatprep.subr.mxu0 0.0
  %722 = vmatpush1.msra.mxu0 0.0
  %723 = vmatprep.subr.mxu0 0.0
  %724 = vmatpush1.msra.mxu0 0.0
  %725 = vmatprep.subr.mxu0 0.0
  %726 = vmatpush1.msra.mxu0 0.0
  %727 = vmatprep.subr.mxu0 0.0
  %728 = vmatpush1.msra.mxu0 0.0
  %729 = vmatprep.subr.mxu0 0.0
  %730 = vmatpush1.msra.mxu0 0.0
  %731 = vmatprep.subr.mxu0 0.0
  %732 = vmatpush1.msra.mxu0 0.0
  %733 = vmatprep.mubr.f32.mxu0 0.0
  %734 = vmatmul.mubr.f32.gmra.mrb[0].mxu0 %v635
  %v735 = vpop.f32.mrb[0].mxu0
  %v736 = vadd.f32 0.0, %v735
  %v737 = vpop.f32.mrb[0].mxu0
  %738 = vmatprep.mubr.f32.mxu0 0.0
  %739 = vmatmul.mubr.f32.gmra.mrb[0].mxu0 %v640
  %v740 = vpop.f32.mrb[0].mxu0
  %v741 = vadd.f32 0.0, %v740
  %v742 = vpop.f32.mrb[0].mxu0
  %743 = vmatprep.mubr.f32.mxu0 0.0
  %744 = vmatmul.mubr.f32.gmra.mrb[0].mxu0 %v645
  %v745 = vpop.f32.mrb[0].mxu0
  %v746 = vadd.f32 0.0, %v745
  %v747 = vpop.f32.mrb[0].mxu0
  %748 = vmatprep.mubr.f32.mxu0 0.0
  %749 = vmatmul.mubr.f32.gmra.mrb[0].mxu0 %v650
  %v750 = vpop.f32.mrb[0].mxu0
  %v751 = vadd.f32 0.0, %v750
  %v752 = vpop.f32.mrb[0].mxu0
  %753 = vdwg.mxu0
  %v754 = vadd.f32 %v549, %v736
  %v755 = vadd.f32 %v549, %v741
  %v756 = vadd.f32 %v549, %v746
  %v757 = vadd.f32 %v549, %v751
  %s758 = scalar_lea.vmem %s6, 32
  %v759 = vld [vmem:[%s758] sm:$0xff]
  %v760 = vld [vmem:[%s758 + $0x8] sm:$0xff]
  %v761 = vld [vmem:[%s758 + $0x10] sm:$0xff]
  %v762 = vld [vmem:[%s758 + $0x18] sm:$0xff]
  %v764 = vsel %vm555, %v759, 0
  %v767 = vsel %vm555, %v760, 0
  %v770 = vsel %vm555, %v761, 0
  %v773 = vsel %vm555, %v762, 0
  %775 = vmatprep.subr.mxu0 0.0
  %776 = vmatpush1.msra.mxu0 %v540
  %777 = vmatprep.subr.mxu0 0.0
  %778 = vmatpush1.msra.mxu0 %v541
  %779 = vmatprep.subr.mxu0 0.0
  %780 = vmatpush1.msra.mxu0 %v542
  %781 = vmatprep.subr.mxu0 0.0
  %782 = vmatpush1.msra.mxu0 %v543
  %783 = vmatprep.subr.mxu0 0.0
  %784 = vmatpush1.msra.mxu0 0.0
  %785 = vmatprep.subr.mxu0 0.0
  %786 = vmatpush1.msra.mxu0 0.0
  %787 = vmatprep.subr.mxu0 0.0
  %788 = vmatpush1.msra.mxu0 0.0
  %789 = vmatprep.subr.mxu0 0.0
  %790 = vmatpush1.msra.mxu0 0.0
  %791 = vmatprep.subr.mxu0 0.0
  %792 = vmatpush1.msra.mxu0 0.0
  %793 = vmatprep.subr.mxu0 0.0
  %794 = vmatpush1.msra.mxu0 0.0
  %795 = vmatprep.subr.mxu0 0.0
  %796 = vmatpush1.msra.mxu0 0.0
  %797 = vmatprep.subr.mxu0 0.0
  %798 = vmatpush1.msra.mxu0 0.0
  %799 = vmatprep.subr.mxu0 0.0
  %800 = vmatpush1.msra.mxu0 0.0
  %801 = vmatprep.subr.mxu0 0.0
  %802 = vmatpush1.msra.mxu0 0.0
  %803 = vmatprep.subr.mxu0 0.0
  %804 = vmatpush1.msra.mxu0 0.0
  %805 = vmatprep.subr.mxu0 0.0
  %806 = vmatpush1.msra.mxu0 0.0
  %807 = vmatprep.subr.mxu0 0.0
  %808 = vmatpush1.msra.mxu0 0.0
  %809 = vmatprep.subr.mxu0 0.0
  %810 = vmatpush1.msra.mxu0 0.0
  %811 = vmatprep.subr.mxu0 0.0
  %812 = vmatpush1.msra.mxu0 0.0
  %813 = vmatprep.subr.mxu0 0.0
  %814 = vmatpush1.msra.mxu0 0.0
  %815 = vmatprep.subr.mxu0 0.0
  %816 = vmatpush1.msra.mxu0 0.0
  %817 = vmatprep.subr.mxu0 0.0
  %818 = vmatpush1.msra.mxu0 0.0
  %819 = vmatprep.subr.mxu0 0.0
  %820 = vmatpush1.msra.mxu0 0.0
  %821 = vmatprep.subr.mxu0 0.0
  %822 = vmatpush1.msra.mxu0 0.0
  %823 = vmatprep.subr.mxu0 0.0
  %824 = vmatpush1.msra.mxu0 0.0
  %825 = vmatprep.subr.mxu0 0.0
  %826 = vmatpush1.msra.mxu0 0.0
  %827 = vmatprep.subr.mxu0 0.0
  %828 = vmatpush1.msra.mxu0 0.0
  %829 = vmatprep.subr.mxu0 0.0
  %830 = vmatpush1.msra.mxu0 0.0
  %831 = vmatprep.subr.mxu0 0.0
  %832 = vmatpush1.msra.mxu0 0.0
  %833 = vmatprep.subr.mxu0 0.0
  %834 = vmatpush1.msra.mxu0 0.0
  %835 = vmatprep.subr.mxu0 0.0
  %836 = vmatpush1.msra.mxu0 0.0
  %837 = vmatprep.subr.mxu0 0.0
  %838 = vmatpush1.msra.mxu0 0.0
  %839 = vmatprep.mubr.f32.mxu0 0.0
  %840 = vmatmul.mubr.f32.gmra.mrb[0].mxu0 %v764
  %v841 = vpop.f32.mrb[0].mxu0
  %v842 = vadd.f32 0.0, %v841
  %v843 = vpop.f32.mrb[0].mxu0
  %844 = vmatprep.mubr.f32.mxu0 0.0
  %845 = vmatmul.mubr.f32.gmra.mrb[0].mxu0 %v767
  %v846 = vpop.f32.mrb[0].mxu0
  %v847 = vadd.f32 0.0, %v846
  %v848 = vpop.f32.mrb[0].mxu0
  %849 = vmatprep.mubr.f32.mxu0 0.0
  %850 = vmatmul.mubr.f32.gmra.mrb[0].mxu0 %v770
  %v851 = vpop.f32.mrb[0].mxu0
  %v852 = vadd.f32 0.0, %v851
  %v853 = vpop.f32.mrb[0].mxu0
  %854 = vmatprep.mubr.f32.mxu0 0.0
  %855 = vmatmul.mubr.f32.gmra.mrb[0].mxu0 %v773
  %v856 = vpop.f32.mrb[0].mxu0
  %v857 = vadd.f32 0.0, %v856
  %v858 = vpop.f32.mrb[0].mxu0
  %859 = vdwg.mxu0
  %s860 = scalar_lea.vmem %s7, 128
  %v861 = vld [vmem:[%s860] sm:$0xff]
  %v862 = vld [vmem:[%s860 + $0x8] sm:$0xff]
  %v863 = vld [vmem:[%s860 + $0x10] sm:$0xff]
  %v864 = vld [vmem:[%s860 + $0x18] sm:$0xff]
  %v865 = vld [vmem:[%s860 + $0x20] sm:$0xff]
  %v866 = vld [vmem:[%s860 + $0x28] sm:$0xff]
  %v867 = vld [vmem:[%s860 + $0x30] sm:$0xff]
  %v868 = vld [vmem:[%s860 + $0x38] sm:$0xff]
  %v869 = vld [vmem:[%s860 + $0x40] sm:$0xff]
  %v870 = vld [vmem:[%s860 + $0x48] sm:$0xff]
  %v871 = vld [vmem:[%s860 + $0x50] sm:$0xff]
  %v872 = vld [vmem:[%s860 + $0x58] sm:$0xff]
  %v873 = vld [vmem:[%s860 + $0x60] sm:$0xff]
  %v874 = vld [vmem:[%s860 + $0x68] sm:$0xff]
  %v875 = vld [vmem:[%s860 + $0x70] sm:$0xff]
  %v876 = vld [vmem:[%s860 + $0x78] sm:$0xff]
  %877 = vmatprep.subr.mxu0 0.0
  %878 = vmatpush1.msra.mxu0 %v861
  %879 = vmatprep.subr.mxu0 0.0
  %880 = vmatpush1.msra.mxu0 %v862
  %881 = vmatprep.subr.mxu0 0.0
  %882 = vmatpush1.msra.mxu0 %v863
  %883 = vmatprep.subr.mxu0 0.0
  %884 = vmatpush1.msra.mxu0 %v864
  %885 = vmatprep.subr.mxu0 0.0
  %886 = vmatpush1.msra.mxu0 %v865
  %887 = vmatprep.subr.mxu0 0.0
  %888 = vmatpush1.msra.mxu0 %v866
  %889 = vmatprep.subr.mxu0 0.0
  %890 = vmatpush1.msra.mxu0 %v867
  %891 = vmatprep.subr.mxu0 0.0
  %892 = vmatpush1.msra.mxu0 %v868
  %893 = vmatprep.subr.mxu0 0.0
  %894 = vmatpush1.msra.mxu0 %v869
  %895 = vmatprep.subr.mxu0 0.0
  %896 = vmatpush1.msra.mxu0 %v870
  %897 = vmatprep.subr.mxu0 0.0
  %898 = vmatpush1.msra.mxu0 %v871
  %899 = vmatprep.subr.mxu0 0.0
  %900 = vmatpush1.msra.mxu0 %v872
  %901 = vmatprep.subr.mxu0 0.0
  %902 = vmatpush1.msra.mxu0 %v873
  %903 = vmatprep.subr.mxu0 0.0
  %904 = vmatpush1.msra.mxu0 %v874
  %905 = vmatprep.subr.mxu0 0.0
  %906 = vmatpush1.msra.mxu0 %v875
  %907 = vmatprep.subr.mxu0 0.0
  %908 = vmatpush1.msra.mxu0 %v876
  %909 = vmatprep.subr.mxu0 0.0
  %910 = vmatpush1.msra.mxu0 0.0
  %911 = vmatprep.subr.mxu0 0.0
  %912 = vmatpush1.msra.mxu0 0.0
  %913 = vmatprep.subr.mxu0 0.0
  %914 = vmatpush1.msra.mxu0 0.0
  %915 = vmatprep.subr.mxu0 0.0
  %916 = vmatpush1.msra.mxu0 0.0
  %917 = vmatprep.subr.mxu0 0.0
  %918 = vmatpush1.msra.mxu0 0.0
  %919 = vmatprep.subr.mxu0 0.0
  %920 = vmatpush1.msra.mxu0 0.0
  %921 = vmatprep.subr.mxu0 0.0
  %922 = vmatpush1.msra.mxu0 0.0
  %923 = vmatprep.subr.mxu0 0.0
  %924 = vmatpush1.msra.mxu0 0.0
  %925 = vmatprep.subr.mxu0 0.0
  %926 = vmatpush1.msra.mxu0 0.0
  %927 = vmatprep.subr.mxu0 0.0
  %928 = vmatpush1.msra.mxu0 0.0
  %929 = vmatprep.subr.mxu0 0.0
  %930 = vmatpush1.msra.mxu0 0.0
  %931 = vmatprep.subr.mxu0 0.0
  %932 = vmatpush1.msra.mxu0 0.0
  %933 = vmatprep.subr.mxu0 0.0
  %934 = vmatpush1.msra.mxu0 0.0
  %935 = vmatprep.subr.mxu0 0.0
  %936 = vmatpush1.msra.mxu0 0.0
  %937 = vmatprep.subr.mxu0 0.0
  %938 = vmatpush1.msra.mxu0 0.0
  %939 = vmatprep.subr.mxu0 0.0
  %940 = vmatpush1.msra.mxu0 0.0
  %941 = vmatprep.mubr.f32.mxu0 0.0
  %942 = vmatmul.mubr.f32.gmra.mrb[0].mxu0 %v842
  %v943 = vpop.f32.mrb[0].mxu0
  %v944 = vadd.f32 0.0, %v943
  %v945 = vpop.f32.mrb[0].mxu0
  %946 = vmatprep.mubr.f32.mxu0 0.0
  %947 = vmatmul.mubr.f32.gmra.mrb[0].mxu0 %v847
  %v948 = vpop.f32.mrb[0].mxu0
  %v949 = vadd.f32 0.0, %v948
  %v950 = vpop.f32.mrb[0].mxu0
  %951 = vmatprep.mubr.f32.mxu0 0.0
  %952 = vmatmul.mubr.f32.gmra.mrb[0].mxu0 %v852
  %v953 = vpop.f32.mrb[0].mxu0
  %v954 = vadd.f32 0.0, %v953
  %v955 = vpop.f32.mrb[0].mxu0
  %956 = vmatprep.mubr.f32.mxu0 0.0
  %957 = vmatmul.mubr.f32.gmra.mrb[0].mxu0 %v857
  %v958 = vpop.f32.mrb[0].mxu0
  %v959 = vadd.f32 0.0, %v958
  %v960 = vpop.f32.mrb[0].mxu0
  %961 = vdwg.mxu0
  %v962 = vadd.f32 %v754, %v944
  %v963 = vadd.f32 %v755, %v949
  %v964 = vadd.f32 %v756, %v954
  %v965 = vadd.f32 %v757, %v959
  %s966 = scalar_lea.vmem %s6, 64
  %v967 = vld [vmem:[%s966] sm:$0xff]
  %v968 = vld [vmem:[%s966 + $0x8] sm:$0xff]
  %v969 = vld [vmem:[%s966 + $0x10] sm:$0xff]
  %v970 = vld [vmem:[%s966 + $0x18] sm:$0xff]
  %v972 = vsel %vm555, %v967, 0
  %v975 = vsel %vm555, %v968, 0
  %v978 = vsel %vm555, %v969, 0
  %v981 = vsel %vm555, %v970, 0
  %983 = vmatprep.subr.mxu0 0.0
  %984 = vmatpush1.msra.mxu0 %v540
  %985 = vmatprep.subr.mxu0 0.0
  %986 = vmatpush1.msra.mxu0 %v541
  %987 = vmatprep.subr.mxu0 0.0
  %988 = vmatpush1.msra.mxu0 %v542
  %989 = vmatprep.subr.mxu0 0.0
  %990 = vmatpush1.msra.mxu0 %v543
  %991 = vmatprep.subr.mxu0 0.0
  %992 = vmatpush1.msra.mxu0 0.0
  %993 = vmatprep.subr.mxu0 0.0
  %994 = vmatpush1.msra.mxu0 0.0
  %995 = vmatprep.subr.mxu0 0.0
  %996 = vmatpush1.msra.mxu0 0.0
  %997 = vmatprep.subr.mxu0 0.0
  %998 = vmatpush1.msra.mxu0 0.0
  %999 = vmatprep.subr.mxu0 0.0
  %1000 = vmatpush1.msra.mxu0 0.0
  %1001 = vmatprep.subr.mxu0 0.0
  %1002 = vmatpush1.msra.mxu0 0.0
  %1003 = vmatprep.subr.mxu0 0.0
  %1004 = vmatpush1.msra.mxu0 0.0
  %1005 = vmatprep.subr.mxu0 0.0
  %1006 = vmatpush1.msra.mxu0 0.0
  %1007 = vmatprep.subr.mxu0 0.0
  %1008 = vmatpush1.msra.mxu0 0.0
  %1009 = vmatprep.subr.mxu0 0.0
  %1010 = vmatpush1.msra.mxu0 0.0
  %1011 = vmatprep.subr.mxu0 0.0
  %1012 = vmatpush1.msra.mxu0 0.0
  %1013 = vmatprep.subr.mxu0 0.0
  %1014 = vmatpush1.msra.mxu0 0.0
  %1015 = vmatprep.subr.mxu0 0.0
  %1016 = vmatpush1.msra.mxu0 0.0
  %1017 = vmatprep.subr.mxu0 0.0
  %1018 = vmatpush1.msra.mxu0 0.0
  %1019 = vmatprep.subr.mxu0 0.0
  %1020 = vmatpush1.msra.mxu0 0.0
  %1021 = vmatprep.subr.mxu0 0.0
  %1022 = vmatpush1.msra.mxu0 0.0
  %1023 = vmatprep.subr.mxu0 0.0
  %1024 = vmatpush1.msra.mxu0 0.0
  %1025 = vmatprep.subr.mxu0 0.0
  %1026 = vmatpush1.msra.mxu0 0.0
  %1027 = vmatprep.subr.mxu0 0.0
  %1028 = vmatpush1.msra.mxu0 0.0
  %1029 = vmatprep.subr.mxu0 0.0
  %1030 = vmatpush1.msra.mxu0 0.0
  %1031 = vmatprep.subr.mxu0 0.0
  %1032 = vmatpush1.msra.mxu0 0.0
  %1033 = vmatprep.subr.mxu0 0.0
  %1034 = vmatpush1.msra.mxu0 0.0
  %1035 = vmatprep.subr.mxu0 0.0
  %1036 = vmatpush1.msra.mxu0 0.0
  %1037 = vmatprep.subr.mxu0 0.0
  %1038 = vmatpush1.msra.mxu0 0.0
  %1039 = vmatprep.subr.mxu0 0.0
  %1040 = vmatpush1.msra.mxu0 0.0
  %1041 = vmatprep.subr.mxu0 0.0
  %1042 = vmatpush1.msra.mxu0 0.0
  %1043 = vmatprep.subr.mxu0 0.0
  %1044 = vmatpush1.msra.mxu0 0.0
  %1045 = vmatprep.subr.mxu0 0.0
  %1046 = vmatpush1.msra.mxu0 0.0
  %1047 = vmatprep.mubr.f32.mxu0 0.0
  %1048 = vmatmul.mubr.f32.gmra.mrb[0].mxu0 %v972
  %v1049 = vpop.f32.mrb[0].mxu0
  %v1050 = vadd.f32 0.0, %v1049
  %v1051 = vpop.f32.mrb[0].mxu0
  %1052 = vmatprep.mubr.f32.mxu0 0.0
  %1053 = vmatmul.mubr.f32.gmra.mrb[0].mxu0 %v975
  %v1054 = vpop.f32.mrb[0].mxu0
  %v1055 = vadd.f32 0.0, %v1054
  %v1056 = vpop.f32.mrb[0].mxu0
  %1057 = vmatprep.mubr.f32.mxu0 0.0
  %1058 = vmatmul.mubr.f32.gmra.mrb[0].mxu0 %v978
  %v1059 = vpop.f32.mrb[0].mxu0
  %v1060 = vadd.f32 0.0, %v1059
  %v1061 = vpop.f32.mrb[0].mxu0
  %1062 = vmatprep.mubr.f32.mxu0 0.0
  %1063 = vmatmul.mubr.f32.gmra.mrb[0].mxu0 %v981
  %v1064 = vpop.f32.mrb[0].mxu0
  %v1065 = vadd.f32 0.0, %v1064
  %v1066 = vpop.f32.mrb[0].mxu0
  %1067 = vdwg.mxu0
  %s1068 = scalar_lea.vmem %s7, 256
  %v1069 = vld [vmem:[%s1068] sm:$0xff]
  %v1070 = vld [vmem:[%s1068 + $0x8] sm:$0xff]
  %v1071 = vld [vmem:[%s1068 + $0x10] sm:$0xff]
  %v1072 = vld [vmem:[%s1068 + $0x18] sm:$0xff]
  %v1073 = vld [vmem:[%s1068 + $0x20] sm:$0xff]
  %v1074 = vld [vmem:[%s1068 + $0x28] sm:$0xff]
  %v1075 = vld [vmem:[%s1068 + $0x30] sm:$0xff]
  %v1076 = vld [vmem:[%s1068 + $0x38] sm:$0xff]
  %v1077 = vld [vmem:[%s1068 + $0x40] sm:$0xff]
  %v1078 = vld [vmem:[%s1068 + $0x48] sm:$0xff]
  %v1079 = vld [vmem:[%s1068 + $0x50] sm:$0xff]
  %v1080 = vld [vmem:[%s1068 + $0x58] sm:$0xff]
  %v1081 = vld [vmem:[%s1068 + $0x60] sm:$0xff]
  %v1082 = vld [vmem:[%s1068 + $0x68] sm:$0xff]
  %v1083 = vld [vmem:[%s1068 + $0x70] sm:$0xff]
  %v1084 = vld [vmem:[%s1068 + $0x78] sm:$0xff]
  %1085 = vmatprep.subr.mxu0 0.0
  %1086 = vmatpush1.msra.mxu0 %v1069
  %1087 = vmatprep.subr.mxu0 0.0
  %1088 = vmatpush1.msra.mxu0 %v1070
  %1089 = vmatprep.subr.mxu0 0.0
  %1090 = vmatpush1.msra.mxu0 %v1071
  %1091 = vmatprep.subr.mxu0 0.0
  %1092 = vmatpush1.msra.mxu0 %v1072
  %1093 = vmatprep.subr.mxu0 0.0
  %1094 = vmatpush1.msra.mxu0 %v1073
  %1095 = vmatprep.subr.mxu0 0.0
  %1096 = vmatpush1.msra.mxu0 %v1074
  %1097 = vmatprep.subr.mxu0 0.0
  %1098 = vmatpush1.msra.mxu0 %v1075
  %1099 = vmatprep.subr.mxu0 0.0
  %1100 = vmatpush1.msra.mxu0 %v1076
  %1101 = vmatprep.subr.mxu0 0.0
  %1102 = vmatpush1.msra.mxu0 %v1077
  %1103 = vmatprep.subr.mxu0 0.0
  %1104 = vmatpush1.msra.mxu0 %v1078
  %1105 = vmatprep.subr.mxu0 0.0
  %1106 = vmatpush1.msra.mxu0 %v1079
  %1107 = vmatprep.subr.mxu0 0.0
  %1108 = vmatpush1.msra.mxu0 %v1080
  %1109 = vmatprep.subr.mxu0 0.0
  %1110 = vmatpush1.msra.mxu0 %v1081
  %1111 = vmatprep.subr.mxu0 0.0
  %1112 = vmatpush1.msra.mxu0 %v1082
  %1113 = vmatprep.subr.mxu0 0.0
  %1114 = vmatpush1.msra.mxu0 %v1083
  %1115 = vmatprep.subr.mxu0 0.0
  %1116 = vmatpush1.msra.mxu0 %v1084
  %1117 = vmatprep.subr.mxu0 0.0
  %1118 = vmatpush1.msra.mxu0 0.0
  %1119 = vmatprep.subr.mxu0 0.0
  %1120 = vmatpush1.msra.mxu0 0.0
  %1121 = vmatprep.subr.mxu0 0.0
  %1122 = vmatpush1.msra.mxu0 0.0
  %1123 = vmatprep.subr.mxu0 0.0
  %1124 = vmatpush1.msra.mxu0 0.0
  %1125 = vmatprep.subr.mxu0 0.0
  %1126 = vmatpush1.msra.mxu0 0.0
  %1127 = vmatprep.subr.mxu0 0.0
  %1128 = vmatpush1.msra.mxu0 0.0
  %1129 = vmatprep.subr.mxu0 0.0
  %1130 = vmatpush1.msra.mxu0 0.0
  %1131 = vmatprep.subr.mxu0 0.0
  %1132 = vmatpush1.msra.mxu0 0.0
  %1133 = vmatprep.subr.mxu0 0.0
  %1134 = vmatpush1.msra.mxu0 0.0
  %1135 = vmatprep.subr.mxu0 0.0
  %1136 = vmatpush1.msra.mxu0 0.0
  %1137 = vmatprep.subr.mxu0 0.0
  %1138 = vmatpush1.msra.mxu0 0.0
  %1139 = vmatprep.subr.mxu0 0.0
  %1140 = vmatpush1.msra.mxu0 0.0
  %1141 = vmatprep.subr.mxu0 0.0
  %1142 = vmatpush1.msra.mxu0 0.0
  %1143 = vmatprep.subr.mxu0 0.0
  %1144 = vmatpush1.msra.mxu0 0.0
  %1145 = vmatprep.subr.mxu0 0.0
  %1146 = vmatpush1.msra.mxu0 0.0
  %1147 = vmatprep.subr.mxu0 0.0
  %1148 = vmatpush1.msra.mxu0 0.0
  %1149 = vmatprep.mubr.f32.mxu0 0.0
  %1150 = vmatmul.mubr.f32.gmra.mrb[0].mxu0 %v1050
  %v1151 = vpop.f32.mrb[0].mxu0
  %v1152 = vadd.f32 0.0, %v1151
  %v1153 = vpop.f32.mrb[0].mxu0
  %1154 = vmatprep.mubr.f32.mxu0 0.0
  %1155 = vmatmul.mubr.f32.gmra.mrb[0].mxu0 %v1055
  %v1156 = vpop.f32.mrb[0].mxu0
  %v1157 = vadd.f32 0.0, %v1156
  %v1158 = vpop.f32.mrb[0].mxu0
  %1159 = vmatprep.mubr.f32.mxu0 0.0
  %1160 = vmatmul.mubr.f32.gmra.mrb[0].mxu0 %v1060
  %v1161 = vpop.f32.mrb[0].mxu0
  %v1162 = vadd.f32 0.0, %v1161
  %v1163 = vpop.f32.mrb[0].mxu0
  %1164 = vmatprep.mubr.f32.mxu0 0.0
  %1165 = vmatmul.mubr.f32.gmra.mrb[0].mxu0 %v1065
  %v1166 = vpop.f32.mrb[0].mxu0
  %v1167 = vadd.f32 0.0, %v1166
  %v1168 = vpop.f32.mrb[0].mxu0
  %1169 = vdwg.mxu0
  %v1170 = vadd.f32 %v962, %v1152
  %v1171 = vadd.f32 %v963, %v1157
  %v1172 = vadd.f32 %v964, %v1162
  %v1173 = vadd.f32 %v965, %v1167
  %s1174 = scalar_lea.vmem %s6, 96
  %v1175 = vld [vmem:[%s1174] sm:$0xff]
  %v1176 = vld [vmem:[%s1174 + $0x8] sm:$0xff]
  %v1177 = vld [vmem:[%s1174 + $0x10] sm:$0xff]
  %v1178 = vld [vmem:[%s1174 + $0x18] sm:$0xff]
  %v1180 = vsel %vm555, %v1175, 0
  %v1183 = vsel %vm555, %v1176, 0
  %v1186 = vsel %vm555, %v1177, 0
  %v1189 = vsel %vm555, %v1178, 0
  %1191 = vmatprep.subr.mxu0 0.0
  %1192 = vmatpush1.msra.mxu0 %v540
  %1193 = vmatprep.subr.mxu0 0.0
  %1194 = vmatpush1.msra.mxu0 %v541
  %1195 = vmatprep.subr.mxu0 0.0
  %1196 = vmatpush1.msra.mxu0 %v542
  %1197 = vmatprep.subr.mxu0 0.0
  %1198 = vmatpush1.msra.mxu0 %v543
  %1199 = vmatprep.subr.mxu0 0.0
  %1200 = vmatpush1.msra.mxu0 0.0
  %1201 = vmatprep.subr.mxu0 0.0
  %1202 = vmatpush1.msra.mxu0 0.0
  %1203 = vmatprep.subr.mxu0 0.0
  %1204 = vmatpush1.msra.mxu0 0.0
  %1205 = vmatprep.subr.mxu0 0.0
  %1206 = vmatpush1.msra.mxu0 0.0
  %1207 = vmatprep.subr.mxu0 0.0
  %1208 = vmatpush1.msra.mxu0 0.0
  %1209 = vmatprep.subr.mxu0 0.0
  %1210 = vmatpush1.msra.mxu0 0.0
  %1211 = vmatprep.subr.mxu0 0.0
  %1212 = vmatpush1.msra.mxu0 0.0
  %1213 = vmatprep.subr.mxu0 0.0
  %1214 = vmatpush1.msra.mxu0 0.0
  %1215 = vmatprep.subr.mxu0 0.0
  %1216 = vmatpush1.msra.mxu0 0.0
  %1217 = vmatprep.subr.mxu0 0.0
  %1218 = vmatpush1.msra.mxu0 0.0
  %1219 = vmatprep.subr.mxu0 0.0
  %1220 = vmatpush1.msra.mxu0 0.0
  %1221 = vmatprep.subr.mxu0 0.0
  %1222 = vmatpush1.msra.mxu0 0.0
  %1223 = vmatprep.subr.mxu0 0.0
  %1224 = vmatpush1.msra.mxu0 0.0
  %1225 = vmatprep.subr.mxu0 0.0
  %1226 = vmatpush1.msra.mxu0 0.0
  %1227 = vmatprep.subr.mxu0 0.0
  %1228 = vmatpush1.msra.mxu0 0.0
  %1229 = vmatprep.subr.mxu0 0.0
  %1230 = vmatpush1.msra.mxu0 0.0
  %1231 = vmatprep.subr.mxu0 0.0
  %1232 = vmatpush1.msra.mxu0 0.0
  %1233 = vmatprep.subr.mxu0 0.0
  %1234 = vmatpush1.msra.mxu0 0.0
  %1235 = vmatprep.subr.mxu0 0.0
  %1236 = vmatpush1.msra.mxu0 0.0
  %1237 = vmatprep.subr.mxu0 0.0
  %1238 = vmatpush1.msra.mxu0 0.0
  %1239 = vmatprep.subr.mxu0 0.0
  %1240 = vmatpush1.msra.mxu0 0.0
  %1241 = vmatprep.subr.mxu0 0.0
  %1242 = vmatpush1.msra.mxu0 0.0
  %1243 = vmatprep.subr.mxu0 0.0
  %1244 = vmatpush1.msra.mxu0 0.0
  %1245 = vmatprep.subr.mxu0 0.0
  %1246 = vmatpush1.msra.mxu0 0.0
  %1247 = vmatprep.subr.mxu0 0.0
  %1248 = vmatpush1.msra.mxu0 0.0
  %1249 = vmatprep.subr.mxu0 0.0
  %1250 = vmatpush1.msra.mxu0 0.0
  %1251 = vmatprep.subr.mxu0 0.0
  %1252 = vmatpush1.msra.mxu0 0.0
  %1253 = vmatprep.subr.mxu0 0.0
  %1254 = vmatpush1.msra.mxu0 0.0
  %1255 = vmatprep.mubr.f32.mxu0 0.0
  %1256 = vmatmul.mubr.f32.gmra.mrb[0].mxu0 %v1180
  %v1257 = vpop.f32.mrb[0].mxu0
  %v1258 = vadd.f32 0.0, %v1257
  %v1259 = vpop.f32.mrb[0].mxu0
  %1260 = vmatprep.mubr.f32.mxu0 0.0
  %1261 = vmatmul.mubr.f32.gmra.mrb[0].mxu0 %v1183
  %v1262 = vpop.f32.mrb[0].mxu0
  %v1263 = vadd.f32 0.0, %v1262
  %v1264 = vpop.f32.mrb[0].mxu0
  %1265 = vmatprep.mubr.f32.mxu0 0.0
  %1266 = vmatmul.mubr.f32.gmra.mrb[0].mxu0 %v1186
  %v1267 = vpop.f32.mrb[0].mxu0
  %v1268 = vadd.f32 0.0, %v1267
  %v1269 = vpop.f32.mrb[0].mxu0
  %1270 = vmatprep.mubr.f32.mxu0 0.0
  %1271 = vmatmul.mubr.f32.gmra.mrb[0].mxu0 %v1189
  %v1272 = vpop.f32.mrb[0].mxu0
  %v1273 = vadd.f32 0.0, %v1272
  %v1274 = vpop.f32.mrb[0].mxu0
  %1275 = vdwg.mxu0
  %s1276 = scalar_lea.vmem %s7, 384
  %v1277 = vld [vmem:[%s1276] sm:$0xff]
  %v1278 = vld [vmem:[%s1276 + $0x8] sm:$0xff]
  %v1279 = vld [vmem:[%s1276 + $0x10] sm:$0xff]
  %v1280 = vld [vmem:[%s1276 + $0x18] sm:$0xff]
  %v1281 = vld [vmem:[%s1276 + $0x20] sm:$0xff]
  %v1282 = vld [vmem:[%s1276 + $0x28] sm:$0xff]
  %v1283 = vld [vmem:[%s1276 + $0x30] sm:$0xff]
  %v1284 = vld [vmem:[%s1276 + $0x38] sm:$0xff]
  %v1285 = vld [vmem:[%s1276 + $0x40] sm:$0xff]
  %v1286 = vld [vmem:[%s1276 + $0x48] sm:$0xff]
  %v1287 = vld [vmem:[%s1276 + $0x50] sm:$0xff]
  %v1288 = vld [vmem:[%s1276 + $0x58] sm:$0xff]
  %v1289 = vld [vmem:[%s1276 + $0x60] sm:$0xff]
  %v1290 = vld [vmem:[%s1276 + $0x68] sm:$0xff]
  %v1291 = vld [vmem:[%s1276 + $0x70] sm:$0xff]
  %v1292 = vld [vmem:[%s1276 + $0x78] sm:$0xff]
  %1293 = vmatprep.subr.mxu0 0.0
  %1294 = vmatpush1.msra.mxu0 %v1277
  %1295 = vmatprep.subr.mxu0 0.0
  %1296 = vmatpush1.msra.mxu0 %v1278
  %1297 = vmatprep.subr.mxu0 0.0
  %1298 = vmatpush1.msra.mxu0 %v1279
  %1299 = vmatprep.subr.mxu0 0.0
  %1300 = vmatpush1.msra.mxu0 %v1280
  %1301 = vmatprep.subr.mxu0 0.0
  %1302 = vmatpush1.msra.mxu0 %v1281
  %1303 = vmatprep.subr.mxu0 0.0
  %1304 = vmatpush1.msra.mxu0 %v1282
  %1305 = vmatprep.subr.mxu0 0.0
  %1306 = vmatpush1.msra.mxu0 %v1283
  %1307 = vmatprep.subr.mxu0 0.0
  %1308 = vmatpush1.msra.mxu0 %v1284
  %1309 = vmatprep.subr.mxu0 0.0
  %1310 = vmatpush1.msra.mxu0 %v1285
  %1311 = vmatprep.subr.mxu0 0.0
  %1312 = vmatpush1.msra.mxu0 %v1286
  %1313 = vmatprep.subr.mxu0 0.0
  %1314 = vmatpush1.msra.mxu0 %v1287
  %1315 = vmatprep.subr.mxu0 0.0
  %1316 = vmatpush1.msra.mxu0 %v1288
  %1317 = vmatprep.subr.mxu0 0.0
  %1318 = vmatpush1.msra.mxu0 %v1289
  %1319 = vmatprep.subr.mxu0 0.0
  %1320 = vmatpush1.msra.mxu0 %v1290
  %1321 = vmatprep.subr.mxu0 0.0
  %1322 = vmatpush1.msra.mxu0 %v1291
  %1323 = vmatprep.subr.mxu0 0.0
  %1324 = vmatpush1.msra.mxu0 %v1292
  %1325 = vmatprep.subr.mxu0 0.0
  %1326 = vmatpush1.msra.mxu0 0.0
  %1327 = vmatprep.subr.mxu0 0.0
  %1328 = vmatpush1.msra.mxu0 0.0
  %1329 = vmatprep.subr.mxu0 0.0
  %1330 = vmatpush1.msra.mxu0 0.0
  %1331 = vmatprep.subr.mxu0 0.0
  %1332 = vmatpush1.msra.mxu0 0.0
  %1333 = vmatprep.subr.mxu0 0.0
  %1334 = vmatpush1.msra.mxu0 0.0
  %1335 = vmatprep.subr.mxu0 0.0
  %1336 = vmatpush1.msra.mxu0 0.0
  %1337 = vmatprep.subr.mxu0 0.0
  %1338 = vmatpush1.msra.mxu0 0.0
  %1339 = vmatprep.subr.mxu0 0.0
  %1340 = vmatpush1.msra.mxu0 0.0
  %1341 = vmatprep.subr.mxu0 0.0
  %1342 = vmatpush1.msra.mxu0 0.0
  %1343 = vmatprep.subr.mxu0 0.0
  %1344 = vmatpush1.msra.mxu0 0.0
  %1345 = vmatprep.subr.mxu0 0.0
  %1346 = vmatpush1.msra.mxu0 0.0
  %1347 = vmatprep.subr.mxu0 0.0
  %1348 = vmatpush1.msra.mxu0 0.0
  %1349 = vmatprep.subr.mxu0 0.0
  %1350 = vmatpush1.msra.mxu0 0.0
  %1351 = vmatprep.subr.mxu0 0.0
  %1352 = vmatpush1.msra.mxu0 0.0
  %1353 = vmatprep.subr.mxu0 0.0
  %1354 = vmatpush1.msra.mxu0 0.0
  %1355 = vmatprep.subr.mxu0 0.0
  %1356 = vmatpush1.msra.mxu0 0.0
  %1357 = vmatprep.mubr.f32.mxu0 0.0
  %1358 = vmatmul.mubr.f32.gmra.mrb[0].mxu0 %v1258
  %v1359 = vpop.f32.mrb[0].mxu0
  %v1360 = vadd.f32 0.0, %v1359
  %v1361 = vpop.f32.mrb[0].mxu0
  %1362 = vmatprep.mubr.f32.mxu0 0.0
  %1363 = vmatmul.mubr.f32.gmra.mrb[0].mxu0 %v1263
  %v1364 = vpop.f32.mrb[0].mxu0
  %v1365 = vadd.f32 0.0, %v1364
  %v1366 = vpop.f32.mrb[0].mxu0
  %1367 = vmatprep.mubr.f32.mxu0 0.0
  %1368 = vmatmul.mubr.f32.gmra.mrb[0].mxu0 %v1268
  %v1369 = vpop.f32.mrb[0].mxu0
  %v1370 = vadd.f32 0.0, %v1369
  %v1371 = vpop.f32.mrb[0].mxu0
  %1372 = vmatprep.mubr.f32.mxu0 0.0
  %1373 = vmatmul.mubr.f32.gmra.mrb[0].mxu0 %v1273
  %v1374 = vpop.f32.mrb[0].mxu0
  %v1375 = vadd.f32 0.0, %v1374
  %v1376 = vpop.f32.mrb[0].mxu0
  %1377 = vdwg.mxu0
  %v1378 = vadd.f32 %v1170, %v1360
  %v1379 = vadd.f32 %v1171, %v1365
  %v1380 = vadd.f32 %v1172, %v1370
  %v1381 = vadd.f32 %v1173, %v1375
  %s1382 = scalar_lea.vmem %s6, 128
  %v1383 = vld [vmem:[%s1382] sm:$0xff]
  %v1384 = vld [vmem:[%s1382 + $0x8] sm:$0xff]
  %v1385 = vld [vmem:[%s1382 + $0x10] sm:$0xff]
  %v1386 = vld [vmem:[%s1382 + $0x18] sm:$0xff]
  %v1388 = vsel %vm555, %v1383, 0
  %v1391 = vsel %vm555, %v1384, 0
  %v1394 = vsel %vm555, %v1385, 0
  %v1397 = vsel %vm555, %v1386, 0
  %1399 = vmatprep.subr.mxu0 0.0
  %1400 = vmatpush1.msra.mxu0 %v540
  %1401 = vmatprep.subr.mxu0 0.0
  %1402 = vmatpush1.msra.mxu0 %v541
  %1403 = vmatprep.subr.mxu0 0.0
  %1404 = vmatpush1.msra.mxu0 %v542
  %1405 = vmatprep.subr.mxu0 0.0
  %1406 = vmatpush1.msra.mxu0 %v543
  %1407 = vmatprep.subr.mxu0 0.0
  %1408 = vmatpush1.msra.mxu0 0.0
  %1409 = vmatprep.subr.mxu0 0.0
  %1410 = vmatpush1.msra.mxu0 0.0
  %1411 = vmatprep.subr.mxu0 0.0
  %1412 = vmatpush1.msra.mxu0 0.0
  %1413 = vmatprep.subr.mxu0 0.0
  %1414 = vmatpush1.msra.mxu0 0.0
  %1415 = vmatprep.subr.mxu0 0.0
  %1416 = vmatpush1.msra.mxu0 0.0
  %1417 = vmatprep.subr.mxu0 0.0
  %1418 = vmatpush1.msra.mxu0 0.0
  %1419 = vmatprep.subr.mxu0 0.0
  %1420 = vmatpush1.msra.mxu0 0.0
  %1421 = vmatprep.subr.mxu0 0.0
  %1422 = vmatpush1.msra.mxu0 0.0
  %1423 = vmatprep.subr.mxu0 0.0
  %1424 = vmatpush1.msra.mxu0 0.0
  %1425 = vmatprep.subr.mxu0 0.0
  %1426 = vmatpush1.msra.mxu0 0.0
  %1427 = vmatprep.subr.mxu0 0.0
  %1428 = vmatpush1.msra.mxu0 0.0
  %1429 = vmatprep.subr.mxu0 0.0
  %1430 = vmatpush1.msra.mxu0 0.0
  %1431 = vmatprep.subr.mxu0 0.0
  %1432 = vmatpush1.msra.mxu0 0.0
  %1433 = vmatprep.subr.mxu0 0.0
  %1434 = vmatpush1.msra.mxu0 0.0
  %1435 = vmatprep.subr.mxu0 0.0
  %1436 = vmatpush1.msra.mxu0 0.0
  %1437 = vmatprep.subr.mxu0 0.0
  %1438 = vmatpush1.msra.mxu0 0.0
  %1439 = vmatprep.subr.mxu0 0.0
  %1440 = vmatpush1.msra.mxu0 0.0
  %1441 = vmatprep.subr.mxu0 0.0
  %1442 = vmatpush1.msra.mxu0 0.0
  %1443 = vmatprep.subr.mxu0 0.0
  %1444 = vmatpush1.msra.mxu0 0.0
  %1445 = vmatprep.subr.mxu0 0.0
  %1446 = vmatpush1.msra.mxu0 0.0
  %1447 = vmatprep.subr.mxu0 0.0
  %1448 = vmatpush1.msra.mxu0 0.0
  %1449 = vmatprep.subr.mxu0 0.0
  %1450 = vmatpush1.msra.mxu0 0.0
  %1451 = vmatprep.subr.mxu0 0.0
  %1452 = vmatpush1.msra.mxu0 0.0
  %1453 = vmatprep.subr.mxu0 0.0
  %1454 = vmatpush1.msra.mxu0 0.0
  %1455 = vmatprep.subr.mxu0 0.0
  %1456 = vmatpush1.msra.mxu0 0.0
  %1457 = vmatprep.subr.mxu0 0.0
  %1458 = vmatpush1.msra.mxu0 0.0
  %1459 = vmatprep.subr.mxu0 0.0
  %1460 = vmatpush1.msra.mxu0 0.0
  %1461 = vmatprep.subr.mxu0 0.0
  %1462 = vmatpush1.msra.mxu0 0.0
  %1463 = vmatprep.mubr.f32.mxu0 0.0
  %1464 = vmatmul.mubr.f32.gmra.mrb[0].mxu0 %v1388
  %v1465 = vpop.f32.mrb[0].mxu0
  %v1466 = vadd.f32 0.0, %v1465
  %v1467 = vpop.f32.mrb[0].mxu0
  %1468 = vmatprep.mubr.f32.mxu0 0.0
  %1469 = vmatmul.mubr.f32.gmra.mrb[0].mxu0 %v1391
  %v1470 = vpop.f32.mrb[0].mxu0
  %v1471 = vadd.f32 0.0, %v1470
  %v1472 = vpop.f32.mrb[0].mxu0
  %1473 = vmatprep.mubr.f32.mxu0 0.0
  %1474 = vmatmul.mubr.f32.gmra.mrb[0].mxu0 %v1394
  %v1475 = vpop.f32.mrb[0].mxu0
  %v1476 = vadd.f32 0.0, %v1475
  %v1477 = vpop.f32.mrb[0].mxu0
  %1478 = vmatprep.mubr.f32.mxu0 0.0
  %1479 = vmatmul.mubr.f32.gmra.mrb[0].mxu0 %v1397
  %v1480 = vpop.f32.mrb[0].mxu0
  %v1481 = vadd.f32 0.0, %v1480
  %v1482 = vpop.f32.mrb[0].mxu0
  %1483 = vdwg.mxu0
  %s1484 = scalar_lea.vmem %s7, 512
  %v1485 = vld [vmem:[%s1484] sm:$0xff]
  %v1486 = vld [vmem:[%s1484 + $0x8] sm:$0xff]
  %v1487 = vld [vmem:[%s1484 + $0x10] sm:$0xff]
  %v1488 = vld [vmem:[%s1484 + $0x18] sm:$0xff]
  %v1489 = vld [vmem:[%s1484 + $0x20] sm:$0xff]
  %v1490 = vld [vmem:[%s1484 + $0x28] sm:$0xff]
  %v1491 = vld [vmem:[%s1484 + $0x30] sm:$0xff]
  %v1492 = vld [vmem:[%s1484 + $0x38] sm:$0xff]
  %v1493 = vld [vmem:[%s1484 + $0x40] sm:$0xff]
  %v1494 = vld [vmem:[%s1484 + $0x48] sm:$0xff]
  %v1495 = vld [vmem:[%s1484 + $0x50] sm:$0xff]
  %v1496 = vld [vmem:[%s1484 + $0x58] sm:$0xff]
  %v1497 = vld [vmem:[%s1484 + $0x60] sm:$0xff]
  %v1498 = vld [vmem:[%s1484 + $0x68] sm:$0xff]
  %v1499 = vld [vmem:[%s1484 + $0x70] sm:$0xff]
  %v1500 = vld [vmem:[%s1484 + $0x78] sm:$0xff]
  %1501 = vmatprep.subr.mxu0 0.0
  %1502 = vmatpush1.msra.mxu0 %v1485
  %1503 = vmatprep.subr.mxu0 0.0
  %1504 = vmatpush1.msra.mxu0 %v1486
  %1505 = vmatprep.subr.mxu0 0.0
  %1506 = vmatpush1.msra.mxu0 %v1487
  %1507 = vmatprep.subr.mxu0 0.0
  %1508 = vmatpush1.msra.mxu0 %v1488
  %1509 = vmatprep.subr.mxu0 0.0
  %1510 = vmatpush1.msra.mxu0 %v1489
  %1511 = vmatprep.subr.mxu0 0.0
  %1512 = vmatpush1.msra.mxu0 %v1490
  %1513 = vmatprep.subr.mxu0 0.0
  %1514 = vmatpush1.msra.mxu0 %v1491
  %1515 = vmatprep.subr.mxu0 0.0
  %1516 = vmatpush1.msra.mxu0 %v1492
  %1517 = vmatprep.subr.mxu0 0.0
  %1518 = vmatpush1.msra.mxu0 %v1493
  %1519 = vmatprep.subr.mxu0 0.0
  %1520 = vmatpush1.msra.mxu0 %v1494
  %1521 = vmatprep.subr.mxu0 0.0
  %1522 = vmatpush1.msra.mxu0 %v1495
  %1523 = vmatprep.subr.mxu0 0.0
  %1524 = vmatpush1.msra.mxu0 %v1496
  %1525 = vmatprep.subr.mxu0 0.0
  %1526 = vmatpush1.msra.mxu0 %v1497
  %1527 = vmatprep.subr.mxu0 0.0
  %1528 = vmatpush1.msra.mxu0 %v1498
  %1529 = vmatprep.subr.mxu0 0.0
  %1530 = vmatpush1.msra.mxu0 %v1499
  %1531 = vmatprep.subr.mxu0 0.0
  %1532 = vmatpush1.msra.mxu0 %v1500
  %1533 = vmatprep.subr.mxu0 0.0
  %1534 = vmatpush1.msra.mxu0 0.0
  %1535 = vmatprep.subr.mxu0 0.0
  %1536 = vmatpush1.msra.mxu0 0.0
  %1537 = vmatprep.subr.mxu0 0.0
  %1538 = vmatpush1.msra.mxu0 0.0
  %1539 = vmatprep.subr.mxu0 0.0
  %1540 = vmatpush1.msra.mxu0 0.0
  %1541 = vmatprep.subr.mxu0 0.0
  %1542 = vmatpush1.msra.mxu0 0.0
  %1543 = vmatprep.subr.mxu0 0.0
  %1544 = vmatpush1.msra.mxu0 0.0
  %1545 = vmatprep.subr.mxu0 0.0
  %1546 = vmatpush1.msra.mxu0 0.0
  %1547 = vmatprep.subr.mxu0 0.0
  %1548 = vmatpush1.msra.mxu0 0.0
  %1549 = vmatprep.subr.mxu0 0.0
  %1550 = vmatpush1.msra.mxu0 0.0
  %1551 = vmatprep.subr.mxu0 0.0
  %1552 = vmatpush1.msra.mxu0 0.0
  %1553 = vmatprep.subr.mxu0 0.0
  %1554 = vmatpush1.msra.mxu0 0.0
  %1555 = vmatprep.subr.mxu0 0.0
  %1556 = vmatpush1.msra.mxu0 0.0
  %1557 = vmatprep.subr.mxu0 0.0
  %1558 = vmatpush1.msra.mxu0 0.0
  %1559 = vmatprep.subr.mxu0 0.0
  %1560 = vmatpush1.msra.mxu0 0.0
  %1561 = vmatprep.subr.mxu0 0.0
  %1562 = vmatpush1.msra.mxu0 0.0
  %1563 = vmatprep.subr.mxu0 0.0
  %1564 = vmatpush1.msra.mxu0 0.0
  %1565 = vmatprep.mubr.f32.mxu0 0.0
  %1566 = vmatmul.mubr.f32.gmra.mrb[0].mxu0 %v1466
  %v1567 = vpop.f32.mrb[0].mxu0
  %v1568 = vadd.f32 0.0, %v1567
  %v1569 = vpop.f32.mrb[0].mxu0
  %1570 = vmatprep.mubr.f32.mxu0 0.0
  %1571 = vmatmul.mubr.f32.gmra.mrb[0].mxu0 %v1471
  %v1572 = vpop.f32.mrb[0].mxu0
  %v1573 = vadd.f32 0.0, %v1572
  %v1574 = vpop.f32.mrb[0].mxu0
  %1575 = vmatprep.mubr.f32.mxu0 0.0
  %1576 = vmatmul.mubr.f32.gmra.mrb[0].mxu0 %v1476
  %v1577 = vpop.f32.mrb[0].mxu0
  %v1578 = vadd.f32 0.0, %v1577
  %v1579 = vpop.f32.mrb[0].mxu0
  %1580 = vmatprep.mubr.f32.mxu0 0.0
  %1581 = vmatmul.mubr.f32.gmra.mrb[0].mxu0 %v1481
  %v1582 = vpop.f32.mrb[0].mxu0
  %v1583 = vadd.f32 0.0, %v1582
  %v1584 = vpop.f32.mrb[0].mxu0
  %1585 = vdwg.mxu0
  %v1586 = vadd.f32 %v1378, %v1568
  %v1587 = vadd.f32 %v1379, %v1573
  %v1588 = vadd.f32 %v1380, %v1578
  %v1589 = vadd.f32 %v1381, %v1583
  %v1590 = vtanh.pop %v1586
  %v1591 = vtanh.pop %v1587
  %v1592 = vtanh.pop %v1588
  %v1593 = vtanh.pop %v1589
  %v1594 = vld [vmem:[%s9] sm:$0xff]
  %v1595 = vld [vmem:[%s9 + $0x8] sm:$0xff]
  %v1596 = vld [vmem:[%s9 + $0x10] sm:$0xff]
  %v1597 = vld [vmem:[%s9 + $0x18] sm:$0xff]
  %v1598 = vld [vmem:[%s9 + $0x20] sm:$0xff]
  %v1599 = vld [vmem:[%s9 + $0x28] sm:$0xff]
  %v1600 = vld [vmem:[%s9 + $0x30] sm:$0xff]
  %v1601 = vld [vmem:[%s9 + $0x38] sm:$0xff]
  %v1602 = vld [vmem:[%s9 + $0x40] sm:$0xff]
  %v1603 = vld [vmem:[%s9 + $0x48] sm:$0xff]
  %v1604 = vld [vmem:[%s9 + $0x50] sm:$0xff]
  %v1605 = vld [vmem:[%s9 + $0x58] sm:$0xff]
  %v1606 = vld [vmem:[%s9 + $0x60] sm:$0xff]
  %v1607 = vld [vmem:[%s9 + $0x68] sm:$0xff]
  %v1608 = vld [vmem:[%s9 + $0x70] sm:$0xff]
  %v1609 = vld [vmem:[%s9 + $0x78] sm:$0xff]
  %1610 = vmatprep.subr.mxu0 0.0
  %1611 = vmatpush1.msra.mxu0 %v1594
  %1612 = vmatprep.subr.mxu0 0.0
  %1613 = vmatpush1.msra.mxu0 %v1595
  %1614 = vmatprep.subr.mxu0 0.0
  %1615 = vmatpush1.msra.mxu0 %v1596
  %1616 = vmatprep.subr.mxu0 0.0
  %1617 = vmatpush1.msra.mxu0 %v1597
  %1618 = vmatprep.subr.mxu0 0.0
  %1619 = vmatpush1.msra.mxu0 %v1598
  %1620 = vmatprep.subr.mxu0 0.0
  %1621 = vmatpush1.msra.mxu0 %v1599
  %1622 = vmatprep.subr.mxu0 0.0
  %1623 = vmatpush1.msra.mxu0 %v1600
  %1624 = vmatprep.subr.mxu0 0.0
  %1625 = vmatpush1.msra.mxu0 %v1601
  %1626 = vmatprep.subr.mxu0 0.0
  %1627 = vmatpush1.msra.mxu0 %v1602
  %1628 = vmatprep.subr.mxu0 0.0
  %1629 = vmatpush1.msra.mxu0 %v1603
  %1630 = vmatprep.subr.mxu0 0.0
  %1631 = vmatpush1.msra.mxu0 %v1604
  %1632 = vmatprep.subr.mxu0 0.0
  %1633 = vmatpush1.msra.mxu0 %v1605
  %1634 = vmatprep.subr.mxu0 0.0
  %1635 = vmatpush1.msra.mxu0 %v1606
  %1636 = vmatprep.subr.mxu0 0.0
  %1637 = vmatpush1.msra.mxu0 %v1607
  %1638 = vmatprep.subr.mxu0 0.0
  %1639 = vmatpush1.msra.mxu0 %v1608
  %1640 = vmatprep.subr.mxu0 0.0
  %1641 = vmatpush1.msra.mxu0 %v1609
  %1642 = vmatprep.subr.mxu0 0.0
  %1643 = vmatpush1.msra.mxu0 0.0
  %1644 = vmatprep.subr.mxu0 0.0
  %1645 = vmatpush1.msra.mxu0 0.0
  %1646 = vmatprep.subr.mxu0 0.0
  %1647 = vmatpush1.msra.mxu0 0.0
  %1648 = vmatprep.subr.mxu0 0.0
  %1649 = vmatpush1.msra.mxu0 0.0
  %1650 = vmatprep.subr.mxu0 0.0
  %1651 = vmatpush1.msra.mxu0 0.0
  %1652 = vmatprep.subr.mxu0 0.0
  %1653 = vmatpush1.msra.mxu0 0.0
  %1654 = vmatprep.subr.mxu0 0.0
  %1655 = vmatpush1.msra.mxu0 0.0
  %1656 = vmatprep.subr.mxu0 0.0
  %1657 = vmatpush1.msra.mxu0 0.0
  %1658 = vmatprep.subr.mxu0 0.0
  %1659 = vmatpush1.msra.mxu0 0.0
  %1660 = vmatprep.subr.mxu0 0.0
  %1661 = vmatpush1.msra.mxu0 0.0
  %1662 = vmatprep.subr.mxu0 0.0
  %1663 = vmatpush1.msra.mxu0 0.0
  %1664 = vmatprep.subr.mxu0 0.0
  %1665 = vmatpush1.msra.mxu0 0.0
  %1666 = vmatprep.subr.mxu0 0.0
  %1667 = vmatpush1.msra.mxu0 0.0
  %1668 = vmatprep.subr.mxu0 0.0
  %1669 = vmatpush1.msra.mxu0 0.0
  %1670 = vmatprep.subr.mxu0 0.0
  %1671 = vmatpush1.msra.mxu0 0.0
  %1672 = vmatprep.subr.mxu0 0.0
  %1673 = vmatpush1.msra.mxu0 0.0
  %1674 = vmatprep.mubr.f32.mxu0 0.0
  %1675 = vmatmul.mubr.f32.gmra.mrb[0].mxu0 %v1590
  %v1676 = vpop.f32.mrb[0].mxu0
  %v1677 = vadd.f32 0.0, %v1676
  %v1678 = vpop.f32.mrb[0].mxu0
  %1679 = vmatprep.mubr.f32.mxu0 0.0
  %1680 = vmatmul.mubr.f32.gmra.mrb[0].mxu0 %v1591
  %v1681 = vpop.f32.mrb[0].mxu0
  %v1682 = vadd.f32 0.0, %v1681
  %v1683 = vpop.f32.mrb[0].mxu0
  %1684 = vmatprep.mubr.f32.mxu0 0.0
  %1685 = vmatmul.mubr.f32.gmra.mrb[0].mxu0 %v1592
  %v1686 = vpop.f32.mrb[0].mxu0
  %v1687 = vadd.f32 0.0, %v1686
  %v1688 = vpop.f32.mrb[0].mxu0
  %1689 = vmatprep.mubr.f32.mxu0 0.0
  %1690 = vmatmul.mubr.f32.gmra.mrb[0].mxu0 %v1593
  %v1691 = vpop.f32.mrb[0].mxu0
  %v1692 = vadd.f32 0.0, %v1691
  %v1693 = vpop.f32.mrb[0].mxu0
  %1694 = vdwg.mxu0
  %vm1695 = vcmp.ge.f32.partialorder %v1677, 0.0
  %vm1696 = vcmp.ge.f32.partialorder %v1682, 0.0
  %vm1697 = vcmp.ge.f32.partialorder %v1687, 0.0
  %vm1698 = vcmp.ge.f32.partialorder %v1692, 0.0
  %v1699 = vmul.f32 %v1677, 0.01
  %v1700 = vmul.f32 %v1682, 0.01
  %v1701 = vmul.f32 %v1687, 0.01
  %v1702 = vmul.f32 %v1692, 0.01
  %v1703 = vsel %vm1695, %v1677, %v1699
  %v1704 = vsel %vm1696, %v1682, %v1700
  %v1705 = vsel %vm1697, %v1687, %v1701
  %v1706 = vsel %vm1698, %v1692, %v1702
  %v1707 = vld [vmem:[%s12] sm:$0x1]
  %v1709 = vlaneseq
  %v1710 = vshrl.u32 %v1709, 7
  %v1711 = vsub.s32 0, %v1710
  %v1712 = vrot.slane %v1707, %v1711
  %v1714 = vld [vmem:[%s10] sm:$0xff]
  %v1715 = vld [vmem:[%s10 + $0x8] sm:$0xff]
  %v1716 = vld [vmem:[%s10 + $0x10] sm:$0xff]
  %v1717 = vld [vmem:[%s10 + $0x18] sm:$0xff]
  %v1719 = vsel %vm555, %v1714, 0
  %v1722 = vsel %vm555, %v1715, 0
  %v1725 = vsel %vm555, %v1716, 0
  %v1728 = vsel %vm555, %v1717, 0
  %1730 = vmatprep.subr.mxu0 0.0
  %1731 = vmatpush1.msra.mxu0 %v1703
  %1732 = vmatprep.subr.mxu0 0.0
  %1733 = vmatpush1.msra.mxu0 %v1704
  %1734 = vmatprep.subr.mxu0 0.0
  %1735 = vmatpush1.msra.mxu0 %v1705
  %1736 = vmatprep.subr.mxu0 0.0
  %1737 = vmatpush1.msra.mxu0 %v1706
  %1738 = vmatprep.subr.mxu0 0.0
  %1739 = vmatpush1.msra.mxu0 0.0
  %1740 = vmatprep.subr.mxu0 0.0
  %1741 = vmatpush1.msra.mxu0 0.0
  %1742 = vmatprep.subr.mxu0 0.0
  %1743 = vmatpush1.msra.mxu0 0.0
  %1744 = vmatprep.subr.mxu0 0.0
  %1745 = vmatpush1.msra.mxu0 0.0
  %1746 = vmatprep.subr.mxu0 0.0
  %1747 = vmatpush1.msra.mxu0 0.0
  %1748 = vmatprep.subr.mxu0 0.0
  %1749 = vmatpush1.msra.mxu0 0.0
  %1750 = vmatprep.subr.mxu0 0.0
  %1751 = vmatpush1.msra.mxu0 0.0
  %1752 = vmatprep.subr.mxu0 0.0
  %1753 = vmatpush1.msra.mxu0 0.0
  %1754 = vmatprep.subr.mxu0 0.0
  %1755 = vmatpush1.msra.mxu0 0.0
  %1756 = vmatprep.subr.mxu0 0.0
  %1757 = vmatpush1.msra.mxu0 0.0
  %1758 = vmatprep.subr.mxu0 0.0
  %1759 = vmatpush1.msra.mxu0 0.0
  %1760 = vmatprep.subr.mxu0 0.0
  %1761 = vmatpush1.msra.mxu0 0.0
  %1762 = vmatprep.subr.mxu0 0.0
  %1763 = vmatpush1.msra.mxu0 0.0
  %1764 = vmatprep.subr.mxu0 0.0
  %1765 = vmatpush1.msra.mxu0 0.0
  %1766 = vmatprep.subr.mxu0 0.0
  %1767 = vmatpush1.msra.mxu0 0.0
  %1768 = vmatprep.subr.mxu0 0.0
  %1769 = vmatpush1.msra.mxu0 0.0
  %1770 = vmatprep.subr.mxu0 0.0
  %1771 = vmatpush1.msra.mxu0 0.0
  %1772 = vmatprep.subr.mxu0 0.0
  %1773 = vmatpush1.msra.mxu0 0.0
  %1774 = vmatprep.subr.mxu0 0.0
  %1775 = vmatpush1.msra.mxu0 0.0
  %1776 = vmatprep.subr.mxu0 0.0
  %1777 = vmatpush1.msra.mxu0 0.0
  %1778 = vmatprep.subr.mxu0 0.0
  %1779 = vmatpush1.msra.mxu0 0.0
  %1780 = vmatprep.subr.mxu0 0.0
  %1781 = vmatpush1.msra.mxu0 0.0
  %1782 = vmatprep.subr.mxu0 0.0
  %1783 = vmatpush1.msra.mxu0 0.0
  %1784 = vmatprep.subr.mxu0 0.0
  %1785 = vmatpush1.msra.mxu0 0.0
  %1786 = vmatprep.subr.mxu0 0.0
  %1787 = vmatpush1.msra.mxu0 0.0
  %1788 = vmatprep.subr.mxu0 0.0
  %1789 = vmatpush1.msra.mxu0 0.0
  %1790 = vmatprep.subr.mxu0 0.0
  %1791 = vmatpush1.msra.mxu0 0.0
  %1792 = vmatprep.subr.mxu0 0.0
  %1793 = vmatpush1.msra.mxu0 0.0
  %1794 = vmatprep.mubr.f32.mxu0 0.0
  %1795 = vmatmul.mubr.f32.gmra.mrb[0].mxu0 %v1719
  %v1796 = vpop.f32.mrb[0].mxu0
  %v1797 = vadd.f32 0.0, %v1796
  %v1798 = vpop.f32.mrb[0].mxu0
  %1799 = vmatprep.mubr.f32.mxu0 0.0
  %1800 = vmatmul.mubr.f32.gmra.mrb[0].mxu0 %v1722
  %v1801 = vpop.f32.mrb[0].mxu0
  %v1802 = vadd.f32 0.0, %v1801
  %v1803 = vpop.f32.mrb[0].mxu0
  %1804 = vmatprep.mubr.f32.mxu0 0.0
  %1805 = vmatmul.mubr.f32.gmra.mrb[0].mxu0 %v1725
  %v1806 = vpop.f32.mrb[0].mxu0
  %v1807 = vadd.f32 0.0, %v1806
  %v1808 = vpop.f32.mrb[0].mxu0
  %1809 = vmatprep.mubr.f32.mxu0 0.0
  %1810 = vmatmul.mubr.f32.gmra.mrb[0].mxu0 %v1728
  %v1811 = vpop.f32.mrb[0].mxu0
  %v1812 = vadd.f32 0.0, %v1811
  %v1813 = vpop.f32.mrb[0].mxu0
  %1814 = vdwg.mxu0
  %v1815 = vld [vmem:[%s11] sm:$0xff]
  %v1816 = vld [vmem:[%s11 + $0x8] sm:$0xff]
  %v1817 = vld [vmem:[%s11 + $0x10] sm:$0xff]
  %v1818 = vld [vmem:[%s11 + $0x18] sm:$0xff]
  %v1819 = vld [vmem:[%s11 + $0x20] sm:$0xff]
  %v1820 = vld [vmem:[%s11 + $0x28] sm:$0xff]
  %v1821 = vld [vmem:[%s11 + $0x30] sm:$0xff]
  %v1822 = vld [vmem:[%s11 + $0x38] sm:$0xff]
  %v1823 = vld [vmem:[%s11 + $0x40] sm:$0xff]
  %v1824 = vld [vmem:[%s11 + $0x48] sm:$0xff]
  %v1825 = vld [vmem:[%s11 + $0x50] sm:$0xff]
  %v1826 = vld [vmem:[%s11 + $0x58] sm:$0xff]
  %v1827 = vld [vmem:[%s11 + $0x60] sm:$0xff]
  %v1828 = vld [vmem:[%s11 + $0x68] sm:$0xff]
  %v1829 = vld [vmem:[%s11 + $0x70] sm:$0xff]
  %v1830 = vld [vmem:[%s11 + $0x78] sm:$0xff]
  %1831 = vmatprep.subr.mxu0 0.0
  %1832 = vmatpush1.msra.mxu0 %v1815
  %1833 = vmatprep.subr.mxu0 0.0
  %1834 = vmatpush1.msra.mxu0 %v1816
  %1835 = vmatprep.subr.mxu0 0.0
  %1836 = vmatpush1.msra.mxu0 %v1817
  %1837 = vmatprep.subr.mxu0 0.0
  %1838 = vmatpush1.msra.mxu0 %v1818
  %1839 = vmatprep.subr.mxu0 0.0
  %1840 = vmatpush1.msra.mxu0 %v1819
  %1841 = vmatprep.subr.mxu0 0.0
  %1842 = vmatpush1.msra.mxu0 %v1820
  %1843 = vmatprep.subr.mxu0 0.0
  %1844 = vmatpush1.msra.mxu0 %v1821
  %1845 = vmatprep.subr.mxu0 0.0
  %1846 = vmatpush1.msra.mxu0 %v1822
  %1847 = vmatprep.subr.mxu0 0.0
  %1848 = vmatpush1.msra.mxu0 %v1823
  %1849 = vmatprep.subr.mxu0 0.0
  %1850 = vmatpush1.msra.mxu0 %v1824
  %1851 = vmatprep.subr.mxu0 0.0
  %1852 = vmatpush1.msra.mxu0 %v1825
  %1853 = vmatprep.subr.mxu0 0.0
  %1854 = vmatpush1.msra.mxu0 %v1826
  %1855 = vmatprep.subr.mxu0 0.0
  %1856 = vmatpush1.msra.mxu0 %v1827
  %1857 = vmatprep.subr.mxu0 0.0
  %1858 = vmatpush1.msra.mxu0 %v1828
  %1859 = vmatprep.subr.mxu0 0.0
  %1860 = vmatpush1.msra.mxu0 %v1829
  %1861 = vmatprep.subr.mxu0 0.0
  %1862 = vmatpush1.msra.mxu0 %v1830
  %1863 = vmatprep.subr.mxu0 0.0
  %1864 = vmatpush1.msra.mxu0 0.0
  %1865 = vmatprep.subr.mxu0 0.0
  %1866 = vmatpush1.msra.mxu0 0.0
  %1867 = vmatprep.subr.mxu0 0.0
  %1868 = vmatpush1.msra.mxu0 0.0
  %1869 = vmatprep.subr.mxu0 0.0
  %1870 = vmatpush1.msra.mxu0 0.0
  %1871 = vmatprep.subr.mxu0 0.0
  %1872 = vmatpush1.msra.mxu0 0.0
  %1873 = vmatprep.subr.mxu0 0.0
  %1874 = vmatpush1.msra.mxu0 0.0
  %1875 = vmatprep.subr.mxu0 0.0
  %1876 = vmatpush1.msra.mxu0 0.0
  %1877 = vmatprep.subr.mxu0 0.0
  %1878 = vmatpush1.msra.mxu0 0.0
  %1879 = vmatprep.subr.mxu0 0.0
  %1880 = vmatpush1.msra.mxu0 0.0
  %1881 = vmatprep.subr.mxu0 0.0
  %1882 = vmatpush1.msra.mxu0 0.0
  %1883 = vmatprep.subr.mxu0 0.0
  %1884 = vmatpush1.msra.mxu0 0.0
  %1885 = vmatprep.subr.mxu0 0.0
  %1886 = vmatpush1.msra.mxu0 0.0
  %1887 = vmatprep.subr.mxu0 0.0
  %1888 = vmatpush1.msra.mxu0 0.0
  %1889 = vmatprep.subr.mxu0 0.0
  %1890 = vmatpush1.msra.mxu0 0.0
  %1891 = vmatprep.subr.mxu0 0.0
  %1892 = vmatpush1.msra.mxu0 0.0
  %1893 = vmatprep.subr.mxu0 0.0
  %1894 = vmatpush1.msra.mxu0 0.0
  %1895 = vmatprep.mubr.f32.mxu0 0.0
  %1896 = vmatmul.mubr.f32.gmra.mrb[0].mxu0 %v1797
  %v1897 = vpop.f32.mrb[0].mxu0
  %v1898 = vadd.f32 0.0, %v1897
  %v1899 = vpop.f32.mrb[0].mxu0
  %1900 = vmatprep.mubr.f32.mxu0 0.0
  %1901 = vmatmul.mubr.f32.gmra.mrb[0].mxu0 %v1802
  %v1902 = vpop.f32.mrb[0].mxu0
  %v1903 = vadd.f32 0.0, %v1902
  %v1904 = vpop.f32.mrb[0].mxu0
  %1905 = vmatprep.mubr.f32.mxu0 0.0
  %1906 = vmatmul.mubr.f32.gmra.mrb[0].mxu0 %v1807
  %v1907 = vpop.f32.mrb[0].mxu0
  %v1908 = vadd.f32 0.0, %v1907
  %v1909 = vpop.f32.mrb[0].mxu0
  %1910 = vmatprep.mubr.f32.mxu0 0.0
  %1911 = vmatmul.mubr.f32.gmra.mrb[0].mxu0 %v1812
  %v1912 = vpop.f32.mrb[0].mxu0
  %v1913 = vadd.f32 0.0, %v1912
  %v1914 = vpop.f32.mrb[0].mxu0
  %1915 = vdwg.mxu0
  %v1916 = vadd.f32 %v1712, %v1898
  %v1917 = vadd.f32 %v1712, %v1903
  %v1918 = vadd.f32 %v1712, %v1908
  %v1919 = vadd.f32 %v1712, %v1913
  %s1920 = scalar_lea.vmem %s10, 32
  %v1921 = vld [vmem:[%s1920] sm:$0xff]
  %v1922 = vld [vmem:[%s1920 + $0x8] sm:$0xff]
  %v1923 = vld [vmem:[%s1920 + $0x10] sm:$0xff]
  %v1924 = vld [vmem:[%s1920 + $0x18] sm:$0xff]
  %v1926 = vsel %vm555, %v1921, 0
  %v1929 = vsel %vm555, %v1922, 0
  %v1932 = vsel %vm555, %v1923, 0
  %v1935 = vsel %vm555, %v1924, 0
  %1937 = vmatprep.subr.mxu0 0.0
  %1938 = vmatpush1.msra.mxu0 %v1703
  %1939 = vmatprep.subr.mxu0 0.0
  %1940 = vmatpush1.msra.mxu0 %v1704
  %1941 = vmatprep.subr.mxu0 0.0
  %1942 = vmatpush1.msra.mxu0 %v1705
  %1943 = vmatprep.subr.mxu0 0.0
  %1944 = vmatpush1.msra.mxu0 %v1706
  %1945 = vmatprep.subr.mxu0 0.0
  %1946 = vmatpush1.msra.mxu0 0.0
  %1947 = vmatprep.subr.mxu0 0.0
  %1948 = vmatpush1.msra.mxu0 0.0
  %1949 = vmatprep.subr.mxu0 0.0
  %1950 = vmatpush1.msra.mxu0 0.0
  %1951 = vmatprep.subr.mxu0 0.0
  %1952 = vmatpush1.msra.mxu0 0.0
  %1953 = vmatprep.subr.mxu0 0.0
  %1954 = vmatpush1.msra.mxu0 0.0
  %1955 = vmatprep.subr.mxu0 0.0
  %1956 = vmatpush1.msra.mxu0 0.0
  %1957 = vmatprep.subr.mxu0 0.0
  %1958 = vmatpush1.msra.mxu0 0.0
  %1959 = vmatprep.subr.mxu0 0.0
  %1960 = vmatpush1.msra.mxu0 0.0
  %1961 = vmatprep.subr.mxu0 0.0
  %1962 = vmatpush1.msra.mxu0 0.0
  %1963 = vmatprep.subr.mxu0 0.0
  %1964 = vmatpush1.msra.mxu0 0.0
  %1965 = vmatprep.subr.mxu0 0.0
  %1966 = vmatpush1.msra.mxu0 0.0
  %1967 = vmatprep.subr.mxu0 0.0
  %1968 = vmatpush1.msra.mxu0 0.0
  %1969 = vmatprep.subr.mxu0 0.0
  %1970 = vmatpush1.msra.mxu0 0.0
  %1971 = vmatprep.subr.mxu0 0.0
  %1972 = vmatpush1.msra.mxu0 0.0
  %1973 = vmatprep.subr.mxu0 0.0
  %1974 = vmatpush1.msra.mxu0 0.0
  %1975 = vmatprep.subr.mxu0 0.0
  %1976 = vmatpush1.msra.mxu0 0.0
  %1977 = vmatprep.subr.mxu0 0.0
  %1978 = vmatpush1.msra.mxu0 0.0
  %1979 = vmatprep.subr.mxu0 0.0
  %1980 = vmatpush1.msra.mxu0 0.0
  %1981 = vmatprep.subr.mxu0 0.0
  %1982 = vmatpush1.msra.mxu0 0.0
  %1983 = vmatprep.subr.mxu0 0.0
  %1984 = vmatpush1.msra.mxu0 0.0
  %1985 = vmatprep.subr.mxu0 0.0
  %1986 = vmatpush1.msra.mxu0 0.0
  %1987 = vmatprep.subr.mxu0 0.0
  %1988 = vmatpush1.msra.mxu0 0.0
  %1989 = vmatprep.subr.mxu0 0.0
  %1990 = vmatpush1.msra.mxu0 0.0
  %1991 = vmatprep.subr.mxu0 0.0
  %1992 = vmatpush1.msra.mxu0 0.0
  %1993 = vmatprep.subr.mxu0 0.0
  %1994 = vmatpush1.msra.mxu0 0.0
  %1995 = vmatprep.subr.mxu0 0.0
  %1996 = vmatpush1.msra.mxu0 0.0
  %1997 = vmatprep.subr.mxu0 0.0
  %1998 = vmatpush1.msra.mxu0 0.0
  %1999 = vmatprep.subr.mxu0 0.0
  %2000 = vmatpush1.msra.mxu0 0.0
  %2001 = vmatprep.mubr.f32.mxu0 0.0
  %2002 = vmatmul.mubr.f32.gmra.mrb[0].mxu0 %v1926
  %v2003 = vpop.f32.mrb[0].mxu0
  %v2004 = vadd.f32 0.0, %v2003
  %v2005 = vpop.f32.mrb[0].mxu0
  %2006 = vmatprep.mubr.f32.mxu0 0.0
  %2007 = vmatmul.mubr.f32.gmra.mrb[0].mxu0 %v1929
  %v2008 = vpop.f32.mrb[0].mxu0
  %v2009 = vadd.f32 0.0, %v2008
  %v2010 = vpop.f32.mrb[0].mxu0
  %2011 = vmatprep.mubr.f32.mxu0 0.0
  %2012 = vmatmul.mubr.f32.gmra.mrb[0].mxu0 %v1932
  %v2013 = vpop.f32.mrb[0].mxu0
  %v2014 = vadd.f32 0.0, %v2013
  %v2015 = vpop.f32.mrb[0].mxu0
  %2016 = vmatprep.mubr.f32.mxu0 0.0
  %2017 = vmatmul.mubr.f32.gmra.mrb[0].mxu0 %v1935
  %v2018 = vpop.f32.mrb[0].mxu0
  %v2019 = vadd.f32 0.0, %v2018
  %v2020 = vpop.f32.mrb[0].mxu0
  %2021 = vdwg.mxu0
  %s2022 = scalar_lea.vmem %s11, 128
  %v2023 = vld [vmem:[%s2022] sm:$0xff]
  %v2024 = vld [vmem:[%s2022 + $0x8] sm:$0xff]
  %v2025 = vld [vmem:[%s2022 + $0x10] sm:$0xff]
  %v2026 = vld [vmem:[%s2022 + $0x18] sm:$0xff]
  %v2027 = vld [vmem:[%s2022 + $0x20] sm:$0xff]
  %v2028 = vld [vmem:[%s2022 + $0x28] sm:$0xff]
  %v2029 = vld [vmem:[%s2022 + $0x30] sm:$0xff]
  %v2030 = vld [vmem:[%s2022 + $0x38] sm:$0xff]
  %v2031 = vld [vmem:[%s2022 + $0x40] sm:$0xff]
  %v2032 = vld [vmem:[%s2022 + $0x48] sm:$0xff]
  %v2033 = vld [vmem:[%s2022 + $0x50] sm:$0xff]
  %v2034 = vld [vmem:[%s2022 + $0x58] sm:$0xff]
  %v2035 = vld [vmem:[%s2022 + $0x60] sm:$0xff]
  %v2036 = vld [vmem:[%s2022 + $0x68] sm:$0xff]
  %v2037 = vld [vmem:[%s2022 + $0x70] sm:$0xff]
  %v2038 = vld [vmem:[%s2022 + $0x78] sm:$0xff]
  %2039 = vmatprep.subr.mxu0 0.0
  %2040 = vmatpush1.msra.mxu0 %v2023
  %2041 = vmatprep.subr.mxu0 0.0
  %2042 = vmatpush1.msra.mxu0 %v2024
  %2043 = vmatprep.subr.mxu0 0.0
  %2044 = vmatpush1.msra.mxu0 %v2025
  %2045 = vmatprep.subr.mxu0 0.0
  %2046 = vmatpush1.msra.mxu0 %v2026
  %2047 = vmatprep.subr.mxu0 0.0
  %2048 = vmatpush1.msra.mxu0 %v2027
  %2049 = vmatprep.subr.mxu0 0.0
  %2050 = vmatpush1.msra.mxu0 %v2028
  %2051 = vmatprep.subr.mxu0 0.0
  %2052 = vmatpush1.msra.mxu0 %v2029
  %2053 = vmatprep.subr.mxu0 0.0
  %2054 = vmatpush1.msra.mxu0 %v2030
  %2055 = vmatprep.subr.mxu0 0.0
  %2056 = vmatpush1.msra.mxu0 %v2031
  %2057 = vmatprep.subr.mxu0 0.0
  %2058 = vmatpush1.msra.mxu0 %v2032
  %2059 = vmatprep.subr.mxu0 0.0
  %2060 = vmatpush1.msra.mxu0 %v2033
  %2061 = vmatprep.subr.mxu0 0.0
  %2062 = vmatpush1.msra.mxu0 %v2034
  %2063 = vmatprep.subr.mxu0 0.0
  %2064 = vmatpush1.msra.mxu0 %v2035
  %2065 = vmatprep.subr.mxu0 0.0
  %2066 = vmatpush1.msra.mxu0 %v2036
  %2067 = vmatprep.subr.mxu0 0.0
  %2068 = vmatpush1.msra.mxu0 %v2037
  %2069 = vmatprep.subr.mxu0 0.0
  %2070 = vmatpush1.msra.mxu0 %v2038
  %2071 = vmatprep.subr.mxu0 0.0
  %2072 = vmatpush1.msra.mxu0 0.0
  %2073 = vmatprep.subr.mxu0 0.0
  %2074 = vmatpush1.msra.mxu0 0.0
  %2075 = vmatprep.subr.mxu0 0.0
  %2076 = vmatpush1.msra.mxu0 0.0
  %2077 = vmatprep.subr.mxu0 0.0
  %2078 = vmatpush1.msra.mxu0 0.0
  %2079 = vmatprep.subr.mxu0 0.0
  %2080 = vmatpush1.msra.mxu0 0.0
  %2081 = vmatprep.subr.mxu0 0.0
  %2082 = vmatpush1.msra.mxu0 0.0
  %2083 = vmatprep.subr.mxu0 0.0
  %2084 = vmatpush1.msra.mxu0 0.0
  %2085 = vmatprep.subr.mxu0 0.0
  %2086 = vmatpush1.msra.mxu0 0.0
  %2087 = vmatprep.subr.mxu0 0.0
  %2088 = vmatpush1.msra.mxu0 0.0
  %2089 = vmatprep.subr.mxu0 0.0
  %2090 = vmatpush1.msra.mxu0 0.0
  %2091 = vmatprep.subr.mxu0 0.0
  %2092 = vmatpush1.msra.mxu0 0.0
  %2093 = vmatprep.subr.mxu0 0.0
  %2094 = vmatpush1.msra.mxu0 0.0
  %2095 = vmatprep.subr.mxu0 0.0
  %2096 = vmatpush1.msra.mxu0 0.0
  %2097 = vmatprep.subr.mxu0 0.0
  %2098 = vmatpush1.msra.mxu0 0.0
  %2099 = vmatprep.subr.mxu0 0.0
  %2100 = vmatpush1.msra.mxu0 0.0
  %2101 = vmatprep.subr.mxu0 0.0
  %2102 = vmatpush1.msra.mxu0 0.0
  %2103 = vmatprep.mubr.f32.mxu0 0.0
  %2104 = vmatmul.mubr.f32.gmra.mrb[0].mxu0 %v2004
  %v2105 = vpop.f32.mrb[0].mxu0
  %v2106 = vadd.f32 0.0, %v2105
  %v2107 = vpop.f32.mrb[0].mxu0
  %2108 = vmatprep.mubr.f32.mxu0 0.0
  %2109 = vmatmul.mubr.f32.gmra.mrb[0].mxu0 %v2009
  %v2110 = vpop.f32.mrb[0].mxu0
  %v2111 = vadd.f32 0.0, %v2110
  %v2112 = vpop.f32.mrb[0].mxu0
  %2113 = vmatprep.mubr.f32.mxu0 0.0
  %2114 = vmatmul.mubr.f32.gmra.mrb[0].mxu0 %v2014
  %v2115 = vpop.f32.mrb[0].mxu0
  %v2116 = vadd.f32 0.0, %v2115
  %v2117 = vpop.f32.mrb[0].mxu0
  %2118 = vmatprep.mubr.f32.mxu0 0.0
  %2119 = vmatmul.mubr.f32.gmra.mrb[0].mxu0 %v2019
  %v2120 = vpop.f32.mrb[0].mxu0
  %v2121 = vadd.f32 0.0, %v2120
  %v2122 = vpop.f32.mrb[0].mxu0
  %2123 = vdwg.mxu0
  %v2124 = vadd.f32 %v1916, %v2106
  %v2125 = vadd.f32 %v1917, %v2111
  %v2126 = vadd.f32 %v1918, %v2116
  %v2127 = vadd.f32 %v1919, %v2121
  %s2128 = scalar_lea.vmem %s10, 64
  %v2129 = vld [vmem:[%s2128] sm:$0xff]
  %v2130 = vld [vmem:[%s2128 + $0x8] sm:$0xff]
  %v2131 = vld [vmem:[%s2128 + $0x10] sm:$0xff]
  %v2132 = vld [vmem:[%s2128 + $0x18] sm:$0xff]
  %v2134 = vsel %vm555, %v2129, 0
  %v2137 = vsel %vm555, %v2130, 0
  %v2140 = vsel %vm555, %v2131, 0
  %v2143 = vsel %vm555, %v2132, 0
  %2145 = vmatprep.subr.mxu0 0.0
  %2146 = vmatpush1.msra.mxu0 %v1703
  %2147 = vmatprep.subr.mxu0 0.0
  %2148 = vmatpush1.msra.mxu0 %v1704
  %2149 = vmatprep.subr.mxu0 0.0
  %2150 = vmatpush1.msra.mxu0 %v1705
  %2151 = vmatprep.subr.mxu0 0.0
  %2152 = vmatpush1.msra.mxu0 %v1706
  %2153 = vmatprep.subr.mxu0 0.0
  %2154 = vmatpush1.msra.mxu0 0.0
  %2155 = vmatprep.subr.mxu0 0.0
  %2156 = vmatpush1.msra.mxu0 0.0
  %2157 = vmatprep.subr.mxu0 0.0
  %2158 = vmatpush1.msra.mxu0 0.0
  %2159 = vmatprep.subr.mxu0 0.0
  %2160 = vmatpush1.msra.mxu0 0.0
  %2161 = vmatprep.subr.mxu0 0.0
  %2162 = vmatpush1.msra.mxu0 0.0
  %2163 = vmatprep.subr.mxu0 0.0
  %2164 = vmatpush1.msra.mxu0 0.0
  %2165 = vmatprep.subr.mxu0 0.0
  %2166 = vmatpush1.msra.mxu0 0.0
  %2167 = vmatprep.subr.mxu0 0.0
  %2168 = vmatpush1.msra.mxu0 0.0
  %2169 = vmatprep.subr.mxu0 0.0
  %2170 = vmatpush1.msra.mxu0 0.0
  %2171 = vmatprep.subr.mxu0 0.0
  %2172 = vmatpush1.msra.mxu0 0.0
  %2173 = vmatprep.subr.mxu0 0.0
  %2174 = vmatpush1.msra.mxu0 0.0
  %2175 = vmatprep.subr.mxu0 0.0
  %2176 = vmatpush1.msra.mxu0 0.0
  %2177 = vmatprep.subr.mxu0 0.0
  %2178 = vmatpush1.msra.mxu0 0.0
  %2179 = vmatprep.subr.mxu0 0.0
  %2180 = vmatpush1.msra.mxu0 0.0
  %2181 = vmatprep.subr.mxu0 0.0
  %2182 = vmatpush1.msra.mxu0 0.0
  %2183 = vmatprep.subr.mxu0 0.0
  %2184 = vmatpush1.msra.mxu0 0.0
  %2185 = vmatprep.subr.mxu0 0.0
  %2186 = vmatpush1.msra.mxu0 0.0
  %2187 = vmatprep.subr.mxu0 0.0
  %2188 = vmatpush1.msra.mxu0 0.0
  %2189 = vmatprep.subr.mxu0 0.0
  %2190 = vmatpush1.msra.mxu0 0.0
  %2191 = vmatprep.subr.mxu0 0.0
  %2192 = vmatpush1.msra.mxu0 0.0
  %2193 = vmatprep.subr.mxu0 0.0
  %2194 = vmatpush1.msra.mxu0 0.0
  %2195 = vmatprep.subr.mxu0 0.0
  %2196 = vmatpush1.msra.mxu0 0.0
  %2197 = vmatprep.subr.mxu0 0.0
  %2198 = vmatpush1.msra.mxu0 0.0
  %2199 = vmatprep.subr.mxu0 0.0
  %2200 = vmatpush1.msra.mxu0 0.0
  %2201 = vmatprep.subr.mxu0 0.0
  %2202 = vmatpush1.msra.mxu0 0.0
  %2203 = vmatprep.subr.mxu0 0.0
  %2204 = vmatpush1.msra.mxu0 0.0
  %2205 = vmatprep.subr.mxu0 0.0
  %2206 = vmatpush1.msra.mxu0 0.0
  %2207 = vmatprep.subr.mxu0 0.0
  %2208 = vmatpush1.msra.mxu0 0.0
  %2209 = vmatprep.mubr.f32.mxu0 0.0
  %2210 = vmatmul.mubr.f32.gmra.mrb[0].mxu0 %v2134
  %v2211 = vpop.f32.mrb[0].mxu0
  %v2212 = vadd.f32 0.0, %v2211
  %v2213 = vpop.f32.mrb[0].mxu0
  %2214 = vmatprep.mubr.f32.mxu0 0.0
  %2215 = vmatmul.mubr.f32.gmra.mrb[0].mxu0 %v2137
  %v2216 = vpop.f32.mrb[0].mxu0
  %v2217 = vadd.f32 0.0, %v2216
  %v2218 = vpop.f32.mrb[0].mxu0
  %2219 = vmatprep.mubr.f32.mxu0 0.0
  %2220 = vmatmul.mubr.f32.gmra.mrb[0].mxu0 %v2140
  %v2221 = vpop.f32.mrb[0].mxu0
  %v2222 = vadd.f32 0.0, %v2221
  %v2223 = vpop.f32.mrb[0].mxu0
  %2224 = vmatprep.mubr.f32.mxu0 0.0
  %2225 = vmatmul.mubr.f32.gmra.mrb[0].mxu0 %v2143
  %v2226 = vpop.f32.mrb[0].mxu0
  %v2227 = vadd.f32 0.0, %v2226
  %v2228 = vpop.f32.mrb[0].mxu0
  %2229 = vdwg.mxu0
  %s2230 = scalar_lea.vmem %s11, 256
  %v2231 = vld [vmem:[%s2230] sm:$0xff]
  %v2232 = vld [vmem:[%s2230 + $0x8] sm:$0xff]
  %v2233 = vld [vmem:[%s2230 + $0x10] sm:$0xff]
  %v2234 = vld [vmem:[%s2230 + $0x18] sm:$0xff]
  %v2235 = vld [vmem:[%s2230 + $0x20] sm:$0xff]
  %v2236 = vld [vmem:[%s2230 + $0x28] sm:$0xff]
  %v2237 = vld [vmem:[%s2230 + $0x30] sm:$0xff]
  %v2238 = vld [vmem:[%s2230 + $0x38] sm:$0xff]
  %v2239 = vld [vmem:[%s2230 + $0x40] sm:$0xff]
  %v2240 = vld [vmem:[%s2230 + $0x48] sm:$0xff]
  %v2241 = vld [vmem:[%s2230 + $0x50] sm:$0xff]
  %v2242 = vld [vmem:[%s2230 + $0x58] sm:$0xff]
  %v2243 = vld [vmem:[%s2230 + $0x60] sm:$0xff]
  %v2244 = vld [vmem:[%s2230 + $0x68] sm:$0xff]
  %v2245 = vld [vmem:[%s2230 + $0x70] sm:$0xff]
  %v2246 = vld [vmem:[%s2230 + $0x78] sm:$0xff]
  %2247 = vmatprep.subr.mxu0 0.0
  %2248 = vmatpush1.msra.mxu0 %v2231
  %2249 = vmatprep.subr.mxu0 0.0
  %2250 = vmatpush1.msra.mxu0 %v2232
  %2251 = vmatprep.subr.mxu0 0.0
  %2252 = vmatpush1.msra.mxu0 %v2233
  %2253 = vmatprep.subr.mxu0 0.0
  %2254 = vmatpush1.msra.mxu0 %v2234
  %2255 = vmatprep.subr.mxu0 0.0
  %2256 = vmatpush1.msra.mxu0 %v2235
  %2257 = vmatprep.subr.mxu0 0.0
  %2258 = vmatpush1.msra.mxu0 %v2236
  %2259 = vmatprep.subr.mxu0 0.0
  %2260 = vmatpush1.msra.mxu0 %v2237
  %2261 = vmatprep.subr.mxu0 0.0
  %2262 = vmatpush1.msra.mxu0 %v2238
  %2263 = vmatprep.subr.mxu0 0.0
  %2264 = vmatpush1.msra.mxu0 %v2239
  %2265 = vmatprep.subr.mxu0 0.0
  %2266 = vmatpush1.msra.mxu0 %v2240
  %2267 = vmatprep.subr.mxu0 0.0
  %2268 = vmatpush1.msra.mxu0 %v2241
  %2269 = vmatprep.subr.mxu0 0.0
  %2270 = vmatpush1.msra.mxu0 %v2242
  %2271 = vmatprep.subr.mxu0 0.0
  %2272 = vmatpush1.msra.mxu0 %v2243
  %2273 = vmatprep.subr.mxu0 0.0
  %2274 = vmatpush1.msra.mxu0 %v2244
  %2275 = vmatprep.subr.mxu0 0.0
  %2276 = vmatpush1.msra.mxu0 %v2245
  %2277 = vmatprep.subr.mxu0 0.0
  %2278 = vmatpush1.msra.mxu0 %v2246
  %2279 = vmatprep.subr.mxu0 0.0
  %2280 = vmatpush1.msra.mxu0 0.0
  %2281 = vmatprep.subr.mxu0 0.0
  %2282 = vmatpush1.msra.mxu0 0.0
  %2283 = vmatprep.subr.mxu0 0.0
  %2284 = vmatpush1.msra.mxu0 0.0
  %2285 = vmatprep.subr.mxu0 0.0
  %2286 = vmatpush1.msra.mxu0 0.0
  %2287 = vmatprep.subr.mxu0 0.0
  %2288 = vmatpush1.msra.mxu0 0.0
  %2289 = vmatprep.subr.mxu0 0.0
  %2290 = vmatpush1.msra.mxu0 0.0
  %2291 = vmatprep.subr.mxu0 0.0
  %2292 = vmatpush1.msra.mxu0 0.0
  %2293 = vmatprep.subr.mxu0 0.0
  %2294 = vmatpush1.msra.mxu0 0.0
  %2295 = vmatprep.subr.mxu0 0.0
  %2296 = vmatpush1.msra.mxu0 0.0
  %2297 = vmatprep.subr.mxu0 0.0
  %2298 = vmatpush1.msra.mxu0 0.0
  %2299 = vmatprep.subr.mxu0 0.0
  %2300 = vmatpush1.msra.mxu0 0.0
  %2301 = vmatprep.subr.mxu0 0.0
  %2302 = vmatpush1.msra.mxu0 0.0
  %2303 = vmatprep.subr.mxu0 0.0
  %2304 = vmatpush1.msra.mxu0 0.0
  %2305 = vmatprep.subr.mxu0 0.0
  %2306 = vmatpush1.msra.mxu0 0.0
  %2307 = vmatprep.subr.mxu0 0.0
  %2308 = vmatpush1.msra.mxu0 0.0
  %2309 = vmatprep.subr.mxu0 0.0
  %2310 = vmatpush1.msra.mxu0 0.0
  %2311 = vmatprep.mubr.f32.mxu0 0.0
  %2312 = vmatmul.mubr.f32.gmra.mrb[0].mxu0 %v2212
  %v2313 = vpop.f32.mrb[0].mxu0
  %v2314 = vadd.f32 0.0, %v2313
  %v2315 = vpop.f32.mrb[0].mxu0
  %2316 = vmatprep.mubr.f32.mxu0 0.0
  %2317 = vmatmul.mubr.f32.gmra.mrb[0].mxu0 %v2217
  %v2318 = vpop.f32.mrb[0].mxu0
  %v2319 = vadd.f32 0.0, %v2318
  %v2320 = vpop.f32.mrb[0].mxu0
  %2321 = vmatprep.mubr.f32.mxu0 0.0
  %2322 = vmatmul.mubr.f32.gmra.mrb[0].mxu0 %v2222
  %v2323 = vpop.f32.mrb[0].mxu0
  %v2324 = vadd.f32 0.0, %v2323
  %v2325 = vpop.f32.mrb[0].mxu0
  %2326 = vmatprep.mubr.f32.mxu0 0.0
  %2327 = vmatmul.mubr.f32.gmra.mrb[0].mxu0 %v2227
  %v2328 = vpop.f32.mrb[0].mxu0
  %v2329 = vadd.f32 0.0, %v2328
  %v2330 = vpop.f32.mrb[0].mxu0
  %2331 = vdwg.mxu0
  %v2332 = vadd.f32 %v2124, %v2314
  %v2333 = vadd.f32 %v2125, %v2319
  %v2334 = vadd.f32 %v2126, %v2324
  %v2335 = vadd.f32 %v2127, %v2329
  %s2336 = scalar_lea.vmem %s10, 96
  %v2337 = vld [vmem:[%s2336] sm:$0xff]
  %v2338 = vld [vmem:[%s2336 + $0x8] sm:$0xff]
  %v2339 = vld [vmem:[%s2336 + $0x10] sm:$0xff]
  %v2340 = vld [vmem:[%s2336 + $0x18] sm:$0xff]
  %v2342 = vsel %vm555, %v2337, 0
  %v2345 = vsel %vm555, %v2338, 0
  %v2348 = vsel %vm555, %v2339, 0
  %v2351 = vsel %vm555, %v2340, 0
  %2353 = vmatprep.subr.mxu0 0.0
  %2354 = vmatpush1.msra.mxu0 %v1703
  %2355 = vmatprep.subr.mxu0 0.0
  %2356 = vmatpush1.msra.mxu0 %v1704
  %2357 = vmatprep.subr.mxu0 0.0
  %2358 = vmatpush1.msra.mxu0 %v1705
  %2359 = vmatprep.subr.mxu0 0.0
  %2360 = vmatpush1.msra.mxu0 %v1706
  %2361 = vmatprep.subr.mxu0 0.0
  %2362 = vmatpush1.msra.mxu0 0.0
  %2363 = vmatprep.subr.mxu0 0.0
  %2364 = vmatpush1.msra.mxu0 0.0
  %2365 = vmatprep.subr.mxu0 0.0
  %2366 = vmatpush1.msra.mxu0 0.0
  %2367 = vmatprep.subr.mxu0 0.0
  %2368 = vmatpush1.msra.mxu0 0.0
  %2369 = vmatprep.subr.mxu0 0.0
  %2370 = vmatpush1.msra.mxu0 0.0
  %2371 = vmatprep.subr.mxu0 0.0
  %2372 = vmatpush1.msra.mxu0 0.0
  %2373 = vmatprep.subr.mxu0 0.0
  %2374 = vmatpush1.msra.mxu0 0.0
  %2375 = vmatprep.subr.mxu0 0.0
  %2376 = vmatpush1.msra.mxu0 0.0
  %2377 = vmatprep.subr.mxu0 0.0
  %2378 = vmatpush1.msra.mxu0 0.0
  %2379 = vmatprep.subr.mxu0 0.0
  %2380 = vmatpush1.msra.mxu0 0.0
  %2381 = vmatprep.subr.mxu0 0.0
  %2382 = vmatpush1.msra.mxu0 0.0
  %2383 = vmatprep.subr.mxu0 0.0
  %2384 = vmatpush1.msra.mxu0 0.0
  %2385 = vmatprep.subr.mxu0 0.0
  %2386 = vmatpush1.msra.mxu0 0.0
  %2387 = vmatprep.subr.mxu0 0.0
  %2388 = vmatpush1.msra.mxu0 0.0
  %2389 = vmatprep.subr.mxu0 0.0
  %2390 = vmatpush1.msra.mxu0 0.0
  %2391 = vmatprep.subr.mxu0 0.0
  %2392 = vmatpush1.msra.mxu0 0.0
  %2393 = vmatprep.subr.mxu0 0.0
  %2394 = vmatpush1.msra.mxu0 0.0
  %2395 = vmatprep.subr.mxu0 0.0
  %2396 = vmatpush1.msra.mxu0 0.0
  %2397 = vmatprep.subr.mxu0 0.0
  %2398 = vmatpush1.msra.mxu0 0.0
  %2399 = vmatprep.subr.mxu0 0.0
  %2400 = vmatpush1.msra.mxu0 0.0
  %2401 = vmatprep.subr.mxu0 0.0
  %2402 = vmatpush1.msra.mxu0 0.0
  %2403 = vmatprep.subr.mxu0 0.0
  %2404 = vmatpush1.msra.mxu0 0.0
  %2405 = vmatprep.subr.mxu0 0.0
  %2406 = vmatpush1.msra.mxu0 0.0
  %2407 = vmatprep.subr.mxu0 0.0
  %2408 = vmatpush1.msra.mxu0 0.0
  %2409 = vmatprep.subr.mxu0 0.0
  %2410 = vmatpush1.msra.mxu0 0.0
  %2411 = vmatprep.subr.mxu0 0.0
  %2412 = vmatpush1.msra.mxu0 0.0
  %2413 = vmatprep.subr.mxu0 0.0
  %2414 = vmatpush1.msra.mxu0 0.0
  %2415 = vmatprep.subr.mxu0 0.0
  %2416 = vmatpush1.msra.mxu0 0.0
  %2417 = vmatprep.mubr.f32.mxu0 0.0
  %2418 = vmatmul.mubr.f32.gmra.mrb[0].mxu0 %v2342
  %v2419 = vpop.f32.mrb[0].mxu0
  %v2420 = vadd.f32 0.0, %v2419
  %v2421 = vpop.f32.mrb[0].mxu0
  %2422 = vmatprep.mubr.f32.mxu0 0.0
  %2423 = vmatmul.mubr.f32.gmra.mrb[0].mxu0 %v2345
  %v2424 = vpop.f32.mrb[0].mxu0
  %v2425 = vadd.f32 0.0, %v2424
  %v2426 = vpop.f32.mrb[0].mxu0
  %2427 = vmatprep.mubr.f32.mxu0 0.0
  %2428 = vmatmul.mubr.f32.gmra.mrb[0].mxu0 %v2348
  %v2429 = vpop.f32.mrb[0].mxu0
  %v2430 = vadd.f32 0.0, %v2429
  %v2431 = vpop.f32.mrb[0].mxu0
  %2432 = vmatprep.mubr.f32.mxu0 0.0
  %2433 = vmatmul.mubr.f32.gmra.mrb[0].mxu0 %v2351
  %v2434 = vpop.f32.mrb[0].mxu0
  %v2435 = vadd.f32 0.0, %v2434
  %v2436 = vpop.f32.mrb[0].mxu0
  %2437 = vdwg.mxu0
  %s2438 = scalar_lea.vmem %s11, 384
  %v2439 = vld [vmem:[%s2438] sm:$0xff]
  %v2440 = vld [vmem:[%s2438 + $0x8] sm:$0xff]
  %v2441 = vld [vmem:[%s2438 + $0x10] sm:$0xff]
  %v2442 = vld [vmem:[%s2438 + $0x18] sm:$0xff]
  %v2443 = vld [vmem:[%s2438 + $0x20] sm:$0xff]
  %v2444 = vld [vmem:[%s2438 + $0x28] sm:$0xff]
  %v2445 = vld [vmem:[%s2438 + $0x30] sm:$0xff]
  %v2446 = vld [vmem:[%s2438 + $0x38] sm:$0xff]
  %v2447 = vld [vmem:[%s2438 + $0x40] sm:$0xff]
  %v2448 = vld [vmem:[%s2438 + $0x48] sm:$0xff]
  %v2449 = vld [vmem:[%s2438 + $0x50] sm:$0xff]
  %v2450 = vld [vmem:[%s2438 + $0x58] sm:$0xff]
  %v2451 = vld [vmem:[%s2438 + $0x60] sm:$0xff]
  %v2452 = vld [vmem:[%s2438 + $0x68] sm:$0xff]
  %v2453 = vld [vmem:[%s2438 + $0x70] sm:$0xff]
  %v2454 = vld [vmem:[%s2438 + $0x78] sm:$0xff]
  %2455 = vmatprep.subr.mxu0 0.0
  %2456 = vmatpush1.msra.mxu0 %v2439
  %2457 = vmatprep.subr.mxu0 0.0
  %2458 = vmatpush1.msra.mxu0 %v2440
  %2459 = vmatprep.subr.mxu0 0.0
  %2460 = vmatpush1.msra.mxu0 %v2441
  %2461 = vmatprep.subr.mxu0 0.0
  %2462 = vmatpush1.msra.mxu0 %v2442
  %2463 = vmatprep.subr.mxu0 0.0
  %2464 = vmatpush1.msra.mxu0 %v2443
  %2465 = vmatprep.subr.mxu0 0.0
  %2466 = vmatpush1.msra.mxu0 %v2444
  %2467 = vmatprep.subr.mxu0 0.0
  %2468 = vmatpush1.msra.mxu0 %v2445
  %2469 = vmatprep.subr.mxu0 0.0
  %2470 = vmatpush1.msra.mxu0 %v2446
  %2471 = vmatprep.subr.mxu0 0.0
  %2472 = vmatpush1.msra.mxu0 %v2447
  %2473 = vmatprep.subr.mxu0 0.0
  %2474 = vmatpush1.msra.mxu0 %v2448
  %2475 = vmatprep.subr.mxu0 0.0
  %2476 = vmatpush1.msra.mxu0 %v2449
  %2477 = vmatprep.subr.mxu0 0.0
  %2478 = vmatpush1.msra.mxu0 %v2450
  %2479 = vmatprep.subr.mxu0 0.0
  %2480 = vmatpush1.msra.mxu0 %v2451
  %2481 = vmatprep.subr.mxu0 0.0
  %2482 = vmatpush1.msra.mxu0 %v2452
  %2483 = vmatprep.subr.mxu0 0.0
  %2484 = vmatpush1.msra.mxu0 %v2453
  %2485 = vmatprep.subr.mxu0 0.0
  %2486 = vmatpush1.msra.mxu0 %v2454
  %2487 = vmatprep.subr.mxu0 0.0
  %2488 = vmatpush1.msra.mxu0 0.0
  %2489 = vmatprep.subr.mxu0 0.0
  %2490 = vmatpush1.msra.mxu0 0.0
  %2491 = vmatprep.subr.mxu0 0.0
  %2492 = vmatpush1.msra.mxu0 0.0
  %2493 = vmatprep.subr.mxu0 0.0
  %2494 = vmatpush1.msra.mxu0 0.0
  %2495 = vmatprep.subr.mxu0 0.0
  %2496 = vmatpush1.msra.mxu0 0.0
  %2497 = vmatprep.subr.mxu0 0.0
  %2498 = vmatpush1.msra.mxu0 0.0
  %2499 = vmatprep.subr.mxu0 0.0
  %2500 = vmatpush1.msra.mxu0 0.0
  %2501 = vmatprep.subr.mxu0 0.0
  %2502 = vmatpush1.msra.mxu0 0.0
  %2503 = vmatprep.subr.mxu0 0.0
  %2504 = vmatpush1.msra.mxu0 0.0
  %2505 = vmatprep.subr.mxu0 0.0
  %2506 = vmatpush1.msra.mxu0 0.0
  %2507 = vmatprep.subr.mxu0 0.0
  %2508 = vmatpush1.msra.mxu0 0.0
  %2509 = vmatprep.subr.mxu0 0.0
  %2510 = vmatpush1.msra.mxu0 0.0
  %2511 = vmatprep.subr.mxu0 0.0
  %2512 = vmatpush1.msra.mxu0 0.0
  %2513 = vmatprep.subr.mxu0 0.0
  %2514 = vmatpush1.msra.mxu0 0.0
  %2515 = vmatprep.subr.mxu0 0.0
  %2516 = vmatpush1.msra.mxu0 0.0
  %2517 = vmatprep.subr.mxu0 0.0
  %2518 = vmatpush1.msra.mxu0 0.0
  %2519 = vmatprep.mubr.f32.mxu0 0.0
  %2520 = vmatmul.mubr.f32.gmra.mrb[0].mxu0 %v2420
  %v2521 = vpop.f32.mrb[0].mxu0
  %v2522 = vadd.f32 0.0, %v2521
  %v2523 = vpop.f32.mrb[0].mxu0
  %2524 = vmatprep.mubr.f32.mxu0 0.0
  %2525 = vmatmul.mubr.f32.gmra.mrb[0].mxu0 %v2425
  %v2526 = vpop.f32.mrb[0].mxu0
  %v2527 = vadd.f32 0.0, %v2526
  %v2528 = vpop.f32.mrb[0].mxu0
  %2529 = vmatprep.mubr.f32.mxu0 0.0
  %2530 = vmatmul.mubr.f32.gmra.mrb[0].mxu0 %v2430
  %v2531 = vpop.f32.mrb[0].mxu0
  %v2532 = vadd.f32 0.0, %v2531
  %v2533 = vpop.f32.mrb[0].mxu0
  %2534 = vmatprep.mubr.f32.mxu0 0.0
  %2535 = vmatmul.mubr.f32.gmra.mrb[0].mxu0 %v2435
  %v2536 = vpop.f32.mrb[0].mxu0
  %v2537 = vadd.f32 0.0, %v2536
  %v2538 = vpop.f32.mrb[0].mxu0
  %2539 = vdwg.mxu0
  %v2540 = vadd.f32 %v2332, %v2522
  %v2541 = vadd.f32 %v2333, %v2527
  %v2542 = vadd.f32 %v2334, %v2532
  %v2543 = vadd.f32 %v2335, %v2537
  %s2544 = scalar_lea.vmem %s10, 128
  %v2545 = vld [vmem:[%s2544] sm:$0xff]
  %v2546 = vld [vmem:[%s2544 + $0x8] sm:$0xff]
  %v2547 = vld [vmem:[%s2544 + $0x10] sm:$0xff]
  %v2548 = vld [vmem:[%s2544 + $0x18] sm:$0xff]
  %v2550 = vsel %vm555, %v2545, 0
  %v2553 = vsel %vm555, %v2546, 0
  %v2556 = vsel %vm555, %v2547, 0
  %v2559 = vsel %vm555, %v2548, 0
  %2561 = vmatprep.subr.mxu0 0.0
  %2562 = vmatpush1.msra.mxu0 %v1703
  %2563 = vmatprep.subr.mxu0 0.0
  %2564 = vmatpush1.msra.mxu0 %v1704
  %2565 = vmatprep.subr.mxu0 0.0
  %2566 = vmatpush1.msra.mxu0 %v1705
  %2567 = vmatprep.subr.mxu0 0.0
  %2568 = vmatpush1.msra.mxu0 %v1706
  %2569 = vmatprep.subr.mxu0 0.0
  %2570 = vmatpush1.msra.mxu0 0.0
  %2571 = vmatprep.subr.mxu0 0.0
  %2572 = vmatpush1.msra.mxu0 0.0
  %2573 = vmatprep.subr.mxu0 0.0
  %2574 = vmatpush1.msra.mxu0 0.0
  %2575 = vmatprep.subr.mxu0 0.0
  %2576 = vmatpush1.msra.mxu0 0.0
  %2577 = vmatprep.subr.mxu0 0.0
  %2578 = vmatpush1.msra.mxu0 0.0
  %2579 = vmatprep.subr.mxu0 0.0
  %2580 = vmatpush1.msra.mxu0 0.0
  %2581 = vmatprep.subr.mxu0 0.0
  %2582 = vmatpush1.msra.mxu0 0.0
  %2583 = vmatprep.subr.mxu0 0.0
  %2584 = vmatpush1.msra.mxu0 0.0
  %2585 = vmatprep.subr.mxu0 0.0
  %2586 = vmatpush1.msra.mxu0 0.0
  %2587 = vmatprep.subr.mxu0 0.0
  %2588 = vmatpush1.msra.mxu0 0.0
  %2589 = vmatprep.subr.mxu0 0.0
  %2590 = vmatpush1.msra.mxu0 0.0
  %2591 = vmatprep.subr.mxu0 0.0
  %2592 = vmatpush1.msra.mxu0 0.0
  %2593 = vmatprep.subr.mxu0 0.0
  %2594 = vmatpush1.msra.mxu0 0.0
  %2595 = vmatprep.subr.mxu0 0.0
  %2596 = vmatpush1.msra.mxu0 0.0
  %2597 = vmatprep.subr.mxu0 0.0
  %2598 = vmatpush1.msra.mxu0 0.0
  %2599 = vmatprep.subr.mxu0 0.0
  %2600 = vmatpush1.msra.mxu0 0.0
  %2601 = vmatprep.subr.mxu0 0.0
  %2602 = vmatpush1.msra.mxu0 0.0
  %2603 = vmatprep.subr.mxu0 0.0
  %2604 = vmatpush1.msra.mxu0 0.0
  %2605 = vmatprep.subr.mxu0 0.0
  %2606 = vmatpush1.msra.mxu0 0.0
  %2607 = vmatprep.subr.mxu0 0.0
  %2608 = vmatpush1.msra.mxu0 0.0
  %2609 = vmatprep.subr.mxu0 0.0
  %2610 = vmatpush1.msra.mxu0 0.0
  %2611 = vmatprep.subr.mxu0 0.0
  %2612 = vmatpush1.msra.mxu0 0.0
  %2613 = vmatprep.subr.mxu0 0.0
  %2614 = vmatpush1.msra.mxu0 0.0
  %2615 = vmatprep.subr.mxu0 0.0
  %2616 = vmatpush1.msra.mxu0 0.0
  %2617 = vmatprep.subr.mxu0 0.0
  %2618 = vmatpush1.msra.mxu0 0.0
  %2619 = vmatprep.subr.mxu0 0.0
  %2620 = vmatpush1.msra.mxu0 0.0
  %2621 = vmatprep.subr.mxu0 0.0
  %2622 = vmatpush1.msra.mxu0 0.0
  %2623 = vmatprep.subr.mxu0 0.0
  %2624 = vmatpush1.msra.mxu0 0.0
  %2625 = vmatprep.mubr.f32.mxu0 0.0
  %2626 = vmatmul.mubr.f32.gmra.mrb[0].mxu0 %v2550
  %v2627 = vpop.f32.mrb[0].mxu0
  %v2628 = vadd.f32 0.0, %v2627
  %v2629 = vpop.f32.mrb[0].mxu0
  %2630 = vmatprep.mubr.f32.mxu0 0.0
  %2631 = vmatmul.mubr.f32.gmra.mrb[0].mxu0 %v2553
  %v2632 = vpop.f32.mrb[0].mxu0
  %v2633 = vadd.f32 0.0, %v2632
  %v2634 = vpop.f32.mrb[0].mxu0
  %2635 = vmatprep.mubr.f32.mxu0 0.0
  %2636 = vmatmul.mubr.f32.gmra.mrb[0].mxu0 %v2556
  %v2637 = vpop.f32.mrb[0].mxu0
  %v2638 = vadd.f32 0.0, %v2637
  %v2639 = vpop.f32.mrb[0].mxu0
  %2640 = vmatprep.mubr.f32.mxu0 0.0
  %2641 = vmatmul.mubr.f32.gmra.mrb[0].mxu0 %v2559
  %v2642 = vpop.f32.mrb[0].mxu0
  %v2643 = vadd.f32 0.0, %v2642
  %v2644 = vpop.f32.mrb[0].mxu0
  %2645 = vdwg.mxu0
  %s2646 = scalar_lea.vmem %s11, 512
  %v2647 = vld [vmem:[%s2646] sm:$0xff]
  %v2648 = vld [vmem:[%s2646 + $0x8] sm:$0xff]
  %v2649 = vld [vmem:[%s2646 + $0x10] sm:$0xff]
  %v2650 = vld [vmem:[%s2646 + $0x18] sm:$0xff]
  %v2651 = vld [vmem:[%s2646 + $0x20] sm:$0xff]
  %v2652 = vld [vmem:[%s2646 + $0x28] sm:$0xff]
  %v2653 = vld [vmem:[%s2646 + $0x30] sm:$0xff]
  %v2654 = vld [vmem:[%s2646 + $0x38] sm:$0xff]
  %v2655 = vld [vmem:[%s2646 + $0x40] sm:$0xff]
  %v2656 = vld [vmem:[%s2646 + $0x48] sm:$0xff]
  %v2657 = vld [vmem:[%s2646 + $0x50] sm:$0xff]
  %v2658 = vld [vmem:[%s2646 + $0x58] sm:$0xff]
  %v2659 = vld [vmem:[%s2646 + $0x60] sm:$0xff]
  %v2660 = vld [vmem:[%s2646 + $0x68] sm:$0xff]
  %v2661 = vld [vmem:[%s2646 + $0x70] sm:$0xff]
  %v2662 = vld [vmem:[%s2646 + $0x78] sm:$0xff]
  %2663 = vmatprep.subr.mxu0 0.0
  %2664 = vmatpush1.msra.mxu0 %v2647
  %2665 = vmatprep.subr.mxu0 0.0
  %2666 = vmatpush1.msra.mxu0 %v2648
  %2667 = vmatprep.subr.mxu0 0.0
  %2668 = vmatpush1.msra.mxu0 %v2649
  %2669 = vmatprep.subr.mxu0 0.0
  %2670 = vmatpush1.msra.mxu0 %v2650
  %2671 = vmatprep.subr.mxu0 0.0
  %2672 = vmatpush1.msra.mxu0 %v2651
  %2673 = vmatprep.subr.mxu0 0.0
  %2674 = vmatpush1.msra.mxu0 %v2652
  %2675 = vmatprep.subr.mxu0 0.0
  %2676 = vmatpush1.msra.mxu0 %v2653
  %2677 = vmatprep.subr.mxu0 0.0
  %2678 = vmatpush1.msra.mxu0 %v2654
  %2679 = vmatprep.subr.mxu0 0.0
  %2680 = vmatpush1.msra.mxu0 %v2655
  %2681 = vmatprep.subr.mxu0 0.0
  %2682 = vmatpush1.msra.mxu0 %v2656
  %2683 = vmatprep.subr.mxu0 0.0
  %2684 = vmatpush1.msra.mxu0 %v2657
  %2685 = vmatprep.subr.mxu0 0.0
  %2686 = vmatpush1.msra.mxu0 %v2658
  %2687 = vmatprep.subr.mxu0 0.0
  %2688 = vmatpush1.msra.mxu0 %v2659
  %2689 = vmatprep.subr.mxu0 0.0
  %2690 = vmatpush1.msra.mxu0 %v2660
  %2691 = vmatprep.subr.mxu0 0.0
  %2692 = vmatpush1.msra.mxu0 %v2661
  %2693 = vmatprep.subr.mxu0 0.0
  %2694 = vmatpush1.msra.mxu0 %v2662
  %2695 = vmatprep.subr.mxu0 0.0
  %2696 = vmatpush1.msra.mxu0 0.0
  %2697 = vmatprep.subr.mxu0 0.0
  %2698 = vmatpush1.msra.mxu0 0.0
  %2699 = vmatprep.subr.mxu0 0.0
  %2700 = vmatpush1.msra.mxu0 0.0
  %2701 = vmatprep.subr.mxu0 0.0
  %2702 = vmatpush1.msra.mxu0 0.0
  %2703 = vmatprep.subr.mxu0 0.0
  %2704 = vmatpush1.msra.mxu0 0.0
  %2705 = vmatprep.subr.mxu0 0.0
  %2706 = vmatpush1.msra.mxu0 0.0
  %2707 = vmatprep.subr.mxu0 0.0
  %2708 = vmatpush1.msra.mxu0 0.0
  %2709 = vmatprep.subr.mxu0 0.0
  %2710 = vmatpush1.msra.mxu0 0.0
  %2711 = vmatprep.subr.mxu0 0.0
  %2712 = vmatpush1.msra.mxu0 0.0
  %2713 = vmatprep.subr.mxu0 0.0
  %2714 = vmatpush1.msra.mxu0 0.0
  %2715 = vmatprep.subr.mxu0 0.0
  %2716 = vmatpush1.msra.mxu0 0.0
  %2717 = vmatprep.subr.mxu0 0.0
  %2718 = vmatpush1.msra.mxu0 0.0
  %2719 = vmatprep.subr.mxu0 0.0
  %2720 = vmatpush1.msra.mxu0 0.0
  %2721 = vmatprep.subr.mxu0 0.0
  %2722 = vmatpush1.msra.mxu0 0.0
  %2723 = vmatprep.subr.mxu0 0.0
  %2724 = vmatpush1.msra.mxu0 0.0
  %2725 = vmatprep.subr.mxu0 0.0
  %2726 = vmatpush1.msra.mxu0 0.0
  %2727 = vmatprep.mubr.f32.mxu0 0.0
  %2728 = vmatmul.mubr.f32.gmra.mrb[0].mxu0 %v2628
  %v2729 = vpop.f32.mrb[0].mxu0
  %v2730 = vadd.f32 0.0, %v2729
  %v2731 = vpop.f32.mrb[0].mxu0
  %2732 = vmatprep.mubr.f32.mxu0 0.0
  %2733 = vmatmul.mubr.f32.gmra.mrb[0].mxu0 %v2633
  %v2734 = vpop.f32.mrb[0].mxu0
  %v2735 = vadd.f32 0.0, %v2734
  %v2736 = vpop.f32.mrb[0].mxu0
  %2737 = vmatprep.mubr.f32.mxu0 0.0
  %2738 = vmatmul.mubr.f32.gmra.mrb[0].mxu0 %v2638
  %v2739 = vpop.f32.mrb[0].mxu0
  %v2740 = vadd.f32 0.0, %v2739
  %v2741 = vpop.f32.mrb[0].mxu0
  %2742 = vmatprep.mubr.f32.mxu0 0.0
  %2743 = vmatmul.mubr.f32.gmra.mrb[0].mxu0 %v2643
  %v2744 = vpop.f32.mrb[0].mxu0
  %v2745 = vadd.f32 0.0, %v2744
  %v2746 = vpop.f32.mrb[0].mxu0
  %2747 = vdwg.mxu0
  %v2748 = vadd.f32 %v2540, %v2730
  %v2749 = vadd.f32 %v2541, %v2735
  %v2750 = vadd.f32 %v2542, %v2740
  %v2751 = vadd.f32 %v2543, %v2745
  %s2752 = scalar_lea.vmem %s10, 160
  %v2753 = vld [vmem:[%s2752] sm:$0xff]
  %v2754 = vld [vmem:[%s2752 + $0x8] sm:$0xff]
  %v2755 = vld [vmem:[%s2752 + $0x10] sm:$0xff]
  %v2756 = vld [vmem:[%s2752 + $0x18] sm:$0xff]
  %v2758 = vsel %vm555, %v2753, 0
  %v2761 = vsel %vm555, %v2754, 0
  %v2764 = vsel %vm555, %v2755, 0
  %v2767 = vsel %vm555, %v2756, 0
  %2769 = vmatprep.subr.mxu0 0.0
  %2770 = vmatpush1.msra.mxu0 %v1703
  %2771 = vmatprep.subr.mxu0 0.0
  %2772 = vmatpush1.msra.mxu0 %v1704
  %2773 = vmatprep.subr.mxu0 0.0
  %2774 = vmatpush1.msra.mxu0 %v1705
  %2775 = vmatprep.subr.mxu0 0.0
  %2776 = vmatpush1.msra.mxu0 %v1706
  %2777 = vmatprep.subr.mxu0 0.0
  %2778 = vmatpush1.msra.mxu0 0.0
  %2779 = vmatprep.subr.mxu0 0.0
  %2780 = vmatpush1.msra.mxu0 0.0
  %2781 = vmatprep.subr.mxu0 0.0
  %2782 = vmatpush1.msra.mxu0 0.0
  %2783 = vmatprep.subr.mxu0 0.0
  %2784 = vmatpush1.msra.mxu0 0.0
  %2785 = vmatprep.subr.mxu0 0.0
  %2786 = vmatpush1.msra.mxu0 0.0
  %2787 = vmatprep.subr.mxu0 0.0
  %2788 = vmatpush1.msra.mxu0 0.0
  %2789 = vmatprep.subr.mxu0 0.0
  %2790 = vmatpush1.msra.mxu0 0.0
  %2791 = vmatprep.subr.mxu0 0.0
  %2792 = vmatpush1.msra.mxu0 0.0
  %2793 = vmatprep.subr.mxu0 0.0
  %2794 = vmatpush1.msra.mxu0 0.0
  %2795 = vmatprep.subr.mxu0 0.0
  %2796 = vmatpush1.msra.mxu0 0.0
  %2797 = vmatprep.subr.mxu0 0.0
  %2798 = vmatpush1.msra.mxu0 0.0
  %2799 = vmatprep.subr.mxu0 0.0
  %2800 = vmatpush1.msra.mxu0 0.0
  %2801 = vmatprep.subr.mxu0 0.0
  %2802 = vmatpush1.msra.mxu0 0.0
  %2803 = vmatprep.subr.mxu0 0.0
  %2804 = vmatpush1.msra.mxu0 0.0
  %2805 = vmatprep.subr.mxu0 0.0
  %2806 = vmatpush1.msra.mxu0 0.0
  %2807 = vmatprep.subr.mxu0 0.0
  %2808 = vmatpush1.msra.mxu0 0.0
  %2809 = vmatprep.subr.mxu0 0.0
  %2810 = vmatpush1.msra.mxu0 0.0
  %2811 = vmatprep.subr.mxu0 0.0
  %2812 = vmatpush1.msra.mxu0 0.0
  %2813 = vmatprep.subr.mxu0 0.0
  %2814 = vmatpush1.msra.mxu0 0.0
  %2815 = vmatprep.subr.mxu0 0.0
  %2816 = vmatpush1.msra.mxu0 0.0
  %2817 = vmatprep.subr.mxu0 0.0
  %2818 = vmatpush1.msra.mxu0 0.0
  %2819 = vmatprep.subr.mxu0 0.0
  %2820 = vmatpush1.msra.mxu0 0.0
  %2821 = vmatprep.subr.mxu0 0.0
  %2822 = vmatpush1.msra.mxu0 0.0
  %2823 = vmatprep.subr.mxu0 0.0
  %2824 = vmatpush1.msra.mxu0 0.0
  %2825 = vmatprep.subr.mxu0 0.0
  %2826 = vmatpush1.msra.mxu0 0.0
  %2827 = vmatprep.subr.mxu0 0.0
  %2828 = vmatpush1.msra.mxu0 0.0
  %2829 = vmatprep.subr.mxu0 0.0
  %2830 = vmatpush1.msra.mxu0 0.0
  %2831 = vmatprep.subr.mxu0 0.0
  %2832 = vmatpush1.msra.mxu0 0.0
  %2833 = vmatprep.mubr.f32.mxu0 0.0
  %2834 = vmatmul.mubr.f32.gmra.mrb[0].mxu0 %v2758
  %v2835 = vpop.f32.mrb[0].mxu0
  %v2836 = vadd.f32 0.0, %v2835
  %v2837 = vpop.f32.mrb[0].mxu0
  %2838 = vmatprep.mubr.f32.mxu0 0.0
  %2839 = vmatmul.mubr.f32.gmra.mrb[0].mxu0 %v2761
  %v2840 = vpop.f32.mrb[0].mxu0
  %v2841 = vadd.f32 0.0, %v2840
  %v2842 = vpop.f32.mrb[0].mxu0
  %2843 = vmatprep.mubr.f32.mxu0 0.0
  %2844 = vmatmul.mubr.f32.gmra.mrb[0].mxu0 %v2764
  %v2845 = vpop.f32.mrb[0].mxu0
  %v2846 = vadd.f32 0.0, %v2845
  %v2847 = vpop.f32.mrb[0].mxu0
  %2848 = vmatprep.mubr.f32.mxu0 0.0
  %2849 = vmatmul.mubr.f32.gmra.mrb[0].mxu0 %v2767
  %v2850 = vpop.f32.mrb[0].mxu0
  %v2851 = vadd.f32 0.0, %v2850
  %v2852 = vpop.f32.mrb[0].mxu0
  %2853 = vdwg.mxu0
  %s2854 = scalar_lea.vmem %s11, 640
  %v2855 = vld [vmem:[%s2854] sm:$0xff]
  %v2856 = vld [vmem:[%s2854 + $0x8] sm:$0xff]
  %v2857 = vld [vmem:[%s2854 + $0x10] sm:$0xff]
  %v2858 = vld [vmem:[%s2854 + $0x18] sm:$0xff]
  %v2859 = vld [vmem:[%s2854 + $0x20] sm:$0xff]
  %v2860 = vld [vmem:[%s2854 + $0x28] sm:$0xff]
  %v2861 = vld [vmem:[%s2854 + $0x30] sm:$0xff]
  %v2862 = vld [vmem:[%s2854 + $0x38] sm:$0xff]
  %v2863 = vld [vmem:[%s2854 + $0x40] sm:$0xff]
  %v2864 = vld [vmem:[%s2854 + $0x48] sm:$0xff]
  %v2865 = vld [vmem:[%s2854 + $0x50] sm:$0xff]
  %v2866 = vld [vmem:[%s2854 + $0x58] sm:$0xff]
  %v2867 = vld [vmem:[%s2854 + $0x60] sm:$0xff]
  %v2868 = vld [vmem:[%s2854 + $0x68] sm:$0xff]
  %v2869 = vld [vmem:[%s2854 + $0x70] sm:$0xff]
  %v2870 = vld [vmem:[%s2854 + $0x78] sm:$0xff]
  %2871 = vmatprep.subr.mxu0 0.0
  %2872 = vmatpush1.msra.mxu0 %v2855
  %2873 = vmatprep.subr.mxu0 0.0
  %2874 = vmatpush1.msra.mxu0 %v2856
  %2875 = vmatprep.subr.mxu0 0.0
  %2876 = vmatpush1.msra.mxu0 %v2857
  %2877 = vmatprep.subr.mxu0 0.0
  %2878 = vmatpush1.msra.mxu0 %v2858
  %2879 = vmatprep.subr.mxu0 0.0
  %2880 = vmatpush1.msra.mxu0 %v2859
  %2881 = vmatprep.subr.mxu0 0.0
  %2882 = vmatpush1.msra.mxu0 %v2860
  %2883 = vmatprep.subr.mxu0 0.0
  %2884 = vmatpush1.msra.mxu0 %v2861
  %2885 = vmatprep.subr.mxu0 0.0
  %2886 = vmatpush1.msra.mxu0 %v2862
  %2887 = vmatprep.subr.mxu0 0.0
  %2888 = vmatpush1.msra.mxu0 %v2863
  %2889 = vmatprep.subr.mxu0 0.0
  %2890 = vmatpush1.msra.mxu0 %v2864
  %2891 = vmatprep.subr.mxu0 0.0
  %2892 = vmatpush1.msra.mxu0 %v2865
  %2893 = vmatprep.subr.mxu0 0.0
  %2894 = vmatpush1.msra.mxu0 %v2866
  %2895 = vmatprep.subr.mxu0 0.0
  %2896 = vmatpush1.msra.mxu0 %v2867
  %2897 = vmatprep.subr.mxu0 0.0
  %2898 = vmatpush1.msra.mxu0 %v2868
  %2899 = vmatprep.subr.mxu0 0.0
  %2900 = vmatpush1.msra.mxu0 %v2869
  %2901 = vmatprep.subr.mxu0 0.0
  %2902 = vmatpush1.msra.mxu0 %v2870
  %2903 = vmatprep.subr.mxu0 0.0
  %2904 = vmatpush1.msra.mxu0 0.0
  %2905 = vmatprep.subr.mxu0 0.0
  %2906 = vmatpush1.msra.mxu0 0.0
  %2907 = vmatprep.subr.mxu0 0.0
  %2908 = vmatpush1.msra.mxu0 0.0
  %2909 = vmatprep.subr.mxu0 0.0
  %2910 = vmatpush1.msra.mxu0 0.0
  %2911 = vmatprep.subr.mxu0 0.0
  %2912 = vmatpush1.msra.mxu0 0.0
  %2913 = vmatprep.subr.mxu0 0.0
  %2914 = vmatpush1.msra.mxu0 0.0
  %2915 = vmatprep.subr.mxu0 0.0
  %2916 = vmatpush1.msra.mxu0 0.0
  %2917 = vmatprep.subr.mxu0 0.0
  %2918 = vmatpush1.msra.mxu0 0.0
  %2919 = vmatprep.subr.mxu0 0.0
  %2920 = vmatpush1.msra.mxu0 0.0
  %2921 = vmatprep.subr.mxu0 0.0
  %2922 = vmatpush1.msra.mxu0 0.0
  %2923 = vmatprep.subr.mxu0 0.0
  %2924 = vmatpush1.msra.mxu0 0.0
  %2925 = vmatprep.subr.mxu0 0.0
  %2926 = vmatpush1.msra.mxu0 0.0
  %2927 = vmatprep.subr.mxu0 0.0
  %2928 = vmatpush1.msra.mxu0 0.0
  %2929 = vmatprep.subr.mxu0 0.0
  %2930 = vmatpush1.msra.mxu0 0.0
  %2931 = vmatprep.subr.mxu0 0.0
  %2932 = vmatpush1.msra.mxu0 0.0
  %2933 = vmatprep.subr.mxu0 0.0
  %2934 = vmatpush1.msra.mxu0 0.0
  %2935 = vmatprep.mubr.f32.mxu0 0.0
  %2936 = vmatmul.mubr.f32.gmra.mrb[0].mxu0 %v2836
  %v2937 = vpop.f32.mrb[0].mxu0
  %v2938 = vadd.f32 0.0, %v2937
  %v2939 = vpop.f32.mrb[0].mxu0
  %2940 = vmatprep.mubr.f32.mxu0 0.0
  %2941 = vmatmul.mubr.f32.gmra.mrb[0].mxu0 %v2841
  %v2942 = vpop.f32.mrb[0].mxu0
  %v2943 = vadd.f32 0.0, %v2942
  %v2944 = vpop.f32.mrb[0].mxu0
  %2945 = vmatprep.mubr.f32.mxu0 0.0
  %2946 = vmatmul.mubr.f32.gmra.mrb[0].mxu0 %v2846
  %v2947 = vpop.f32.mrb[0].mxu0
  %v2948 = vadd.f32 0.0, %v2947
  %v2949 = vpop.f32.mrb[0].mxu0
  %2950 = vmatprep.mubr.f32.mxu0 0.0
  %2951 = vmatmul.mubr.f32.gmra.mrb[0].mxu0 %v2851
  %v2952 = vpop.f32.mrb[0].mxu0
  %v2953 = vadd.f32 0.0, %v2952
  %v2954 = vpop.f32.mrb[0].mxu0
  %2955 = vdwg.mxu0
  %v2956 = vadd.f32 %v2748, %v2938
  %v2957 = vadd.f32 %v2749, %v2943
  %v2958 = vadd.f32 %v2750, %v2948
  %v2959 = vadd.f32 %v2751, %v2953
  %s2960 = scalar_lea.vmem %s10, 192
  %v2961 = vld [vmem:[%s2960] sm:$0xff]
  %v2962 = vld [vmem:[%s2960 + $0x8] sm:$0xff]
  %v2963 = vld [vmem:[%s2960 + $0x10] sm:$0xff]
  %v2964 = vld [vmem:[%s2960 + $0x18] sm:$0xff]
  %v2966 = vsel %vm555, %v2961, 0
  %v2969 = vsel %vm555, %v2962, 0
  %v2972 = vsel %vm555, %v2963, 0
  %v2975 = vsel %vm555, %v2964, 0
  %2977 = vmatprep.subr.mxu0 0.0
  %2978 = vmatpush1.msra.mxu0 %v1703
  %2979 = vmatprep.subr.mxu0 0.0
  %2980 = vmatpush1.msra.mxu0 %v1704
  %2981 = vmatprep.subr.mxu0 0.0
  %2982 = vmatpush1.msra.mxu0 %v1705
  %2983 = vmatprep.subr.mxu0 0.0
  %2984 = vmatpush1.msra.mxu0 %v1706
  %2985 = vmatprep.subr.mxu0 0.0
  %2986 = vmatpush1.msra.mxu0 0.0
  %2987 = vmatprep.subr.mxu0 0.0
  %2988 = vmatpush1.msra.mxu0 0.0
  %2989 = vmatprep.subr.mxu0 0.0
  %2990 = vmatpush1.msra.mxu0 0.0
  %2991 = vmatprep.subr.mxu0 0.0
  %2992 = vmatpush1.msra.mxu0 0.0
  %2993 = vmatprep.subr.mxu0 0.0
  %2994 = vmatpush1.msra.mxu0 0.0
  %2995 = vmatprep.subr.mxu0 0.0
  %2996 = vmatpush1.msra.mxu0 0.0
  %2997 = vmatprep.subr.mxu0 0.0
  %2998 = vmatpush1.msra.mxu0 0.0
  %2999 = vmatprep.subr.mxu0 0.0
  %3000 = vmatpush1.msra.mxu0 0.0
  %3001 = vmatprep.subr.mxu0 0.0
  %3002 = vmatpush1.msra.mxu0 0.0
  %3003 = vmatprep.subr.mxu0 0.0
  %3004 = vmatpush1.msra.mxu0 0.0
  %3005 = vmatprep.subr.mxu0 0.0
  %3006 = vmatpush1.msra.mxu0 0.0
  %3007 = vmatprep.subr.mxu0 0.0
  %3008 = vmatpush1.msra.mxu0 0.0
  %3009 = vmatprep.subr.mxu0 0.0
  %3010 = vmatpush1.msra.mxu0 0.0
  %3011 = vmatprep.subr.mxu0 0.0
  %3012 = vmatpush1.msra.mxu0 0.0
  %3013 = vmatprep.subr.mxu0 0.0
  %3014 = vmatpush1.msra.mxu0 0.0
  %3015 = vmatprep.subr.mxu0 0.0
  %3016 = vmatpush1.msra.mxu0 0.0
  %3017 = vmatprep.subr.mxu0 0.0
  %3018 = vmatpush1.msra.mxu0 0.0
  %3019 = vmatprep.subr.mxu0 0.0
  %3020 = vmatpush1.msra.mxu0 0.0
  %3021 = vmatprep.subr.mxu0 0.0
  %3022 = vmatpush1.msra.mxu0 0.0
  %3023 = vmatprep.subr.mxu0 0.0
  %3024 = vmatpush1.msra.mxu0 0.0
  %3025 = vmatprep.subr.mxu0 0.0
  %3026 = vmatpush1.msra.mxu0 0.0
  %3027 = vmatprep.subr.mxu0 0.0
  %3028 = vmatpush1.msra.mxu0 0.0
  %3029 = vmatprep.subr.mxu0 0.0
  %3030 = vmatpush1.msra.mxu0 0.0
  %3031 = vmatprep.subr.mxu0 0.0
  %3032 = vmatpush1.msra.mxu0 0.0
  %3033 = vmatprep.subr.mxu0 0.0
  %3034 = vmatpush1.msra.mxu0 0.0
  %3035 = vmatprep.subr.mxu0 0.0
  %3036 = vmatpush1.msra.mxu0 0.0
  %3037 = vmatprep.subr.mxu0 0.0
  %3038 = vmatpush1.msra.mxu0 0.0
  %3039 = vmatprep.subr.mxu0 0.0
  %3040 = vmatpush1.msra.mxu0 0.0
  %3041 = vmatprep.mubr.f32.mxu0 0.0
  %3042 = vmatmul.mubr.f32.gmra.mrb[0].mxu0 %v2966
  %v3043 = vpop.f32.mrb[0].mxu0
  %v3044 = vadd.f32 0.0, %v3043
  %v3045 = vpop.f32.mrb[0].mxu0
  %3046 = vmatprep.mubr.f32.mxu0 0.0
  %3047 = vmatmul.mubr.f32.gmra.mrb[0].mxu0 %v2969
  %v3048 = vpop.f32.mrb[0].mxu0
  %v3049 = vadd.f32 0.0, %v3048
  %v3050 = vpop.f32.mrb[0].mxu0
  %3051 = vmatprep.mubr.f32.mxu0 0.0
  %3052 = vmatmul.mubr.f32.gmra.mrb[0].mxu0 %v2972
  %v3053 = vpop.f32.mrb[0].mxu0
  %v3054 = vadd.f32 0.0, %v3053
  %v3055 = vpop.f32.mrb[0].mxu0
  %3056 = vmatprep.mubr.f32.mxu0 0.0
  %3057 = vmatmul.mubr.f32.gmra.mrb[0].mxu0 %v2975
  %v3058 = vpop.f32.mrb[0].mxu0
  %v3059 = vadd.f32 0.0, %v3058
  %v3060 = vpop.f32.mrb[0].mxu0
  %3061 = vdwg.mxu0
  %s3062 = scalar_lea.vmem %s11, 768
  %v3063 = vld [vmem:[%s3062] sm:$0xff]
  %v3064 = vld [vmem:[%s3062 + $0x8] sm:$0xff]
  %v3065 = vld [vmem:[%s3062 + $0x10] sm:$0xff]
  %v3066 = vld [vmem:[%s3062 + $0x18] sm:$0xff]
  %v3067 = vld [vmem:[%s3062 + $0x20] sm:$0xff]
  %v3068 = vld [vmem:[%s3062 + $0x28] sm:$0xff]
  %v3069 = vld [vmem:[%s3062 + $0x30] sm:$0xff]
  %v3070 = vld [vmem:[%s3062 + $0x38] sm:$0xff]
  %v3071 = vld [vmem:[%s3062 + $0x40] sm:$0xff]
  %v3072 = vld [vmem:[%s3062 + $0x48] sm:$0xff]
  %v3073 = vld [vmem:[%s3062 + $0x50] sm:$0xff]
  %v3074 = vld [vmem:[%s3062 + $0x58] sm:$0xff]
  %v3075 = vld [vmem:[%s3062 + $0x60] sm:$0xff]
  %v3076 = vld [vmem:[%s3062 + $0x68] sm:$0xff]
  %v3077 = vld [vmem:[%s3062 + $0x70] sm:$0xff]
  %v3078 = vld [vmem:[%s3062 + $0x78] sm:$0xff]
  %3079 = vmatprep.subr.mxu0 0.0
  %3080 = vmatpush1.msra.mxu0 %v3063
  %3081 = vmatprep.subr.mxu0 0.0
  %3082 = vmatpush1.msra.mxu0 %v3064
  %3083 = vmatprep.subr.mxu0 0.0
  %3084 = vmatpush1.msra.mxu0 %v3065
  %3085 = vmatprep.subr.mxu0 0.0
  %3086 = vmatpush1.msra.mxu0 %v3066
  %3087 = vmatprep.subr.mxu0 0.0
  %3088 = vmatpush1.msra.mxu0 %v3067
  %3089 = vmatprep.subr.mxu0 0.0
  %3090 = vmatpush1.msra.mxu0 %v3068
  %3091 = vmatprep.subr.mxu0 0.0
  %3092 = vmatpush1.msra.mxu0 %v3069
  %3093 = vmatprep.subr.mxu0 0.0
  %3094 = vmatpush1.msra.mxu0 %v3070
  %3095 = vmatprep.subr.mxu0 0.0
  %3096 = vmatpush1.msra.mxu0 %v3071
  %3097 = vmatprep.subr.mxu0 0.0
  %3098 = vmatpush1.msra.mxu0 %v3072
  %3099 = vmatprep.subr.mxu0 0.0
  %3100 = vmatpush1.msra.mxu0 %v3073
  %3101 = vmatprep.subr.mxu0 0.0
  %3102 = vmatpush1.msra.mxu0 %v3074
  %3103 = vmatprep.subr.mxu0 0.0
  %3104 = vmatpush1.msra.mxu0 %v3075
  %3105 = vmatprep.subr.mxu0 0.0
  %3106 = vmatpush1.msra.mxu0 %v3076
  %3107 = vmatprep.subr.mxu0 0.0
  %3108 = vmatpush1.msra.mxu0 %v3077
  %3109 = vmatprep.subr.mxu0 0.0
  %3110 = vmatpush1.msra.mxu0 %v3078
  %3111 = vmatprep.subr.mxu0 0.0
  %3112 = vmatpush1.msra.mxu0 0.0
  %3113 = vmatprep.subr.mxu0 0.0
  %3114 = vmatpush1.msra.mxu0 0.0
  %3115 = vmatprep.subr.mxu0 0.0
  %3116 = vmatpush1.msra.mxu0 0.0
  %3117 = vmatprep.subr.mxu0 0.0
  %3118 = vmatpush1.msra.mxu0 0.0
  %3119 = vmatprep.subr.mxu0 0.0
  %3120 = vmatpush1.msra.mxu0 0.0
  %3121 = vmatprep.subr.mxu0 0.0
  %3122 = vmatpush1.msra.mxu0 0.0
  %3123 = vmatprep.subr.mxu0 0.0
  %3124 = vmatpush1.msra.mxu0 0.0
  %3125 = vmatprep.subr.mxu0 0.0
  %3126 = vmatpush1.msra.mxu0 0.0
  %3127 = vmatprep.subr.mxu0 0.0
  %3128 = vmatpush1.msra.mxu0 0.0
  %3129 = vmatprep.subr.mxu0 0.0
  %3130 = vmatpush1.msra.mxu0 0.0
  %3131 = vmatprep.subr.mxu0 0.0
  %3132 = vmatpush1.msra.mxu0 0.0
  %3133 = vmatprep.subr.mxu0 0.0
  %3134 = vmatpush1.msra.mxu0 0.0
  %3135 = vmatprep.subr.mxu0 0.0
  %3136 = vmatpush1.msra.mxu0 0.0
  %3137 = vmatprep.subr.mxu0 0.0
  %3138 = vmatpush1.msra.mxu0 0.0
  %3139 = vmatprep.subr.mxu0 0.0
  %3140 = vmatpush1.msra.mxu0 0.0
  %3141 = vmatprep.subr.mxu0 0.0
  %3142 = vmatpush1.msra.mxu0 0.0
  %3143 = vmatprep.mubr.f32.mxu0 0.0
  %3144 = vmatmul.mubr.f32.gmra.mrb[0].mxu0 %v3044
  %v3145 = vpop.f32.mrb[0].mxu0
  %v3146 = vadd.f32 0.0, %v3145
  %v3147 = vpop.f32.mrb[0].mxu0
  %3148 = vmatprep.mubr.f32.mxu0 0.0
  %3149 = vmatmul.mubr.f32.gmra.mrb[0].mxu0 %v3049
  %v3150 = vpop.f32.mrb[0].mxu0
  %v3151 = vadd.f32 0.0, %v3150
  %v3152 = vpop.f32.mrb[0].mxu0
  %3153 = vmatprep.mubr.f32.mxu0 0.0
  %3154 = vmatmul.mubr.f32.gmra.mrb[0].mxu0 %v3054
  %v3155 = vpop.f32.mrb[0].mxu0
  %v3156 = vadd.f32 0.0, %v3155
  %v3157 = vpop.f32.mrb[0].mxu0
  %3158 = vmatprep.mubr.f32.mxu0 0.0
  %3159 = vmatmul.mubr.f32.gmra.mrb[0].mxu0 %v3059
  %v3160 = vpop.f32.mrb[0].mxu0
  %v3161 = vadd.f32 0.0, %v3160
  %v3162 = vpop.f32.mrb[0].mxu0
  %3163 = vdwg.mxu0
  %v3164 = vadd.f32 %v2956, %v3146
  %v3165 = vadd.f32 %v2957, %v3151
  %v3166 = vadd.f32 %v2958, %v3156
  %v3167 = vadd.f32 %v2959, %v3161
  %v3168 = vtanh.pop %v3164
  %v3169 = vtanh.pop %v3165
  %v3170 = vtanh.pop %v3166
  %v3171 = vtanh.pop %v3167
  %3172 = vst [vmem:[%s17] sm:$0xff] %v3168
  %3173 = vst [vmem:[%s17 + $0x8] sm:$0xff] %v3169
  %3174 = vst [vmem:[%s17 + $0x10] sm:$0xff] %v3170
  %3175 = vst [vmem:[%s17 + $0x18] sm:$0xff] %v3171
  %v3176 = vld [vmem:[%s13] sm:$0xff]
  %v3177 = vld [vmem:[%s13 + $0x8] sm:$0xff]
  %v3178 = vld [vmem:[%s13 + $0x10] sm:$0xff]
  %v3179 = vld [vmem:[%s13 + $0x18] sm:$0xff]
  %v3180 = vld [vmem:[%s13 + $0x20] sm:$0xff]
  %v3181 = vld [vmem:[%s13 + $0x28] sm:$0xff]
  %v3182 = vld [vmem:[%s13 + $0x30] sm:$0xff]
  %v3183 = vld [vmem:[%s13 + $0x38] sm:$0xff]
  %v3184 = vld [vmem:[%s13 + $0x40] sm:$0xff]
  %v3185 = vld [vmem:[%s13 + $0x48] sm:$0xff]
  %v3186 = vld [vmem:[%s13 + $0x50] sm:$0xff]
  %v3187 = vld [vmem:[%s13 + $0x58] sm:$0xff]
  %v3188 = vld [vmem:[%s13 + $0x60] sm:$0xff]
  %v3189 = vld [vmem:[%s13 + $0x68] sm:$0xff]
  %v3190 = vld [vmem:[%s13 + $0x70] sm:$0xff]
  %v3191 = vld [vmem:[%s13 + $0x78] sm:$0xff]
  %3192 = vmatprep.subr.mxu0 0.0
  %3193 = vmatpush1.msra.mxu0 %v3176
  %3194 = vmatprep.subr.mxu0 0.0
  %3195 = vmatpush1.msra.mxu0 %v3177
  %3196 = vmatprep.subr.mxu0 0.0
  %3197 = vmatpush1.msra.mxu0 %v3178
  %3198 = vmatprep.subr.mxu0 0.0
  %3199 = vmatpush1.msra.mxu0 %v3179
  %3200 = vmatprep.subr.mxu0 0.0
  %3201 = vmatpush1.msra.mxu0 %v3180
  %3202 = vmatprep.subr.mxu0 0.0
  %3203 = vmatpush1.msra.mxu0 %v3181
  %3204 = vmatprep.subr.mxu0 0.0
  %3205 = vmatpush1.msra.mxu0 %v3182
  %3206 = vmatprep.subr.mxu0 0.0
  %3207 = vmatpush1.msra.mxu0 %v3183
  %3208 = vmatprep.subr.mxu0 0.0
  %3209 = vmatpush1.msra.mxu0 %v3184
  %3210 = vmatprep.subr.mxu0 0.0
  %3211 = vmatpush1.msra.mxu0 %v3185
  %3212 = vmatprep.subr.mxu0 0.0
  %3213 = vmatpush1.msra.mxu0 %v3186
  %3214 = vmatprep.subr.mxu0 0.0
  %3215 = vmatpush1.msra.mxu0 %v3187
  %3216 = vmatprep.subr.mxu0 0.0
  %3217 = vmatpush1.msra.mxu0 %v3188
  %3218 = vmatprep.subr.mxu0 0.0
  %3219 = vmatpush1.msra.mxu0 %v3189
  %3220 = vmatprep.subr.mxu0 0.0
  %3221 = vmatpush1.msra.mxu0 %v3190
  %3222 = vmatprep.subr.mxu0 0.0
  %3223 = vmatpush1.msra.mxu0 %v3191
  %3224 = vmatprep.subr.mxu0 0.0
  %3225 = vmatpush1.msra.mxu0 0.0
  %3226 = vmatprep.subr.mxu0 0.0
  %3227 = vmatpush1.msra.mxu0 0.0
  %3228 = vmatprep.subr.mxu0 0.0
  %3229 = vmatpush1.msra.mxu0 0.0
  %3230 = vmatprep.subr.mxu0 0.0
  %3231 = vmatpush1.msra.mxu0 0.0
  %3232 = vmatprep.subr.mxu0 0.0
  %3233 = vmatpush1.msra.mxu0 0.0
  %3234 = vmatprep.subr.mxu0 0.0
  %3235 = vmatpush1.msra.mxu0 0.0
  %3236 = vmatprep.subr.mxu0 0.0
  %3237 = vmatpush1.msra.mxu0 0.0
  %3238 = vmatprep.subr.mxu0 0.0
  %3239 = vmatpush1.msra.mxu0 0.0
  %3240 = vmatprep.subr.mxu0 0.0
  %3241 = vmatpush1.msra.mxu0 0.0
  %3242 = vmatprep.subr.mxu0 0.0
  %3243 = vmatpush1.msra.mxu0 0.0
  %3244 = vmatprep.subr.mxu0 0.0
  %3245 = vmatpush1.msra.mxu0 0.0
  %3246 = vmatprep.subr.mxu0 0.0
  %3247 = vmatpush1.msra.mxu0 0.0
  %3248 = vmatprep.subr.mxu0 0.0
  %3249 = vmatpush1.msra.mxu0 0.0
  %3250 = vmatprep.subr.mxu0 0.0
  %3251 = vmatpush1.msra.mxu0 0.0
  %3252 = vmatprep.subr.mxu0 0.0
  %3253 = vmatpush1.msra.mxu0 0.0
  %3254 = vmatprep.subr.mxu0 0.0
  %3255 = vmatpush1.msra.mxu0 0.0
  %3256 = vmatprep.mubr.f32.mxu0 0.0
  %3257 = vmatmul.mubr.f32.gmra.mrb[0].mxu0 %v3168
  %v3258 = vpop.f32.mrb[0].mxu0
  %v3259 = vadd.f32 0.0, %v3258
  %v3260 = vpop.f32.mrb[0].mxu0
  %3261 = vmatprep.mubr.f32.mxu0 0.0
  %3262 = vmatmul.mubr.f32.gmra.mrb[0].mxu0 %v3169
  %v3263 = vpop.f32.mrb[0].mxu0
  %v3264 = vadd.f32 0.0, %v3263
  %v3265 = vpop.f32.mrb[0].mxu0
  %3266 = vmatprep.mubr.f32.mxu0 0.0
  %3267 = vmatmul.mubr.f32.gmra.mrb[0].mxu0 %v3170
  %v3268 = vpop.f32.mrb[0].mxu0
  %v3269 = vadd.f32 0.0, %v3268
  %v3270 = vpop.f32.mrb[0].mxu0
  %3271 = vmatprep.mubr.f32.mxu0 0.0
  %3272 = vmatmul.mubr.f32.gmra.mrb[0].mxu0 %v3171
  %v3273 = vpop.f32.mrb[0].mxu0
  %v3274 = vadd.f32 0.0, %v3273
  %v3275 = vpop.f32.mrb[0].mxu0
  %3276 = vdwg.mxu0
  %v3277 = vld [vmem:[%s14] sm:$0xff]
  %v3278 = vld [vmem:[%s14 + $0x8] sm:$0xff]
  %v3279 = vld [vmem:[%s14 + $0x10] sm:$0xff]
  %v3280 = vld [vmem:[%s14 + $0x18] sm:$0xff]
  %v3281 = vld [vmem:[%s14 + $0x20] sm:$0xff]
  %v3282 = vld [vmem:[%s14 + $0x28] sm:$0xff]
  %v3283 = vld [vmem:[%s14 + $0x30] sm:$0xff]
  %v3284 = vld [vmem:[%s14 + $0x38] sm:$0xff]
  %v3285 = vld [vmem:[%s14 + $0x40] sm:$0xff]
  %v3286 = vld [vmem:[%s14 + $0x48] sm:$0xff]
  %v3287 = vld [vmem:[%s14 + $0x50] sm:$0xff]
  %v3288 = vld [vmem:[%s14 + $0x58] sm:$0xff]
  %v3289 = vld [vmem:[%s14 + $0x60] sm:$0xff]
  %v3290 = vld [vmem:[%s14 + $0x68] sm:$0xff]
  %v3291 = vld [vmem:[%s14 + $0x70] sm:$0xff]
  %v3292 = vld [vmem:[%s14 + $0x78] sm:$0xff]
  %3293 = vmatprep.subr.mxu0 0.0
  %3294 = vmatpush1.msra.mxu0 %v3277
  %3295 = vmatprep.subr.mxu0 0.0
  %3296 = vmatpush1.msra.mxu0 %v3278
  %3297 = vmatprep.subr.mxu0 0.0
  %3298 = vmatpush1.msra.mxu0 %v3279
  %3299 = vmatprep.subr.mxu0 0.0
  %3300 = vmatpush1.msra.mxu0 %v3280
  %3301 = vmatprep.subr.mxu0 0.0
  %3302 = vmatpush1.msra.mxu0 %v3281
  %3303 = vmatprep.subr.mxu0 0.0
  %3304 = vmatpush1.msra.mxu0 %v3282
  %3305 = vmatprep.subr.mxu0 0.0
  %3306 = vmatpush1.msra.mxu0 %v3283
  %3307 = vmatprep.subr.mxu0 0.0
  %3308 = vmatpush1.msra.mxu0 %v3284
  %3309 = vmatprep.subr.mxu0 0.0
  %3310 = vmatpush1.msra.mxu0 %v3285
  %3311 = vmatprep.subr.mxu0 0.0
  %3312 = vmatpush1.msra.mxu0 %v3286
  %3313 = vmatprep.subr.mxu0 0.0
  %3314 = vmatpush1.msra.mxu0 %v3287
  %3315 = vmatprep.subr.mxu0 0.0
  %3316 = vmatpush1.msra.mxu0 %v3288
  %3317 = vmatprep.subr.mxu0 0.0
  %3318 = vmatpush1.msra.mxu0 %v3289
  %3319 = vmatprep.subr.mxu0 0.0
  %3320 = vmatpush1.msra.mxu0 %v3290
  %3321 = vmatprep.subr.mxu0 0.0
  %3322 = vmatpush1.msra.mxu0 %v3291
  %3323 = vmatprep.subr.mxu0 0.0
  %3324 = vmatpush1.msra.mxu0 %v3292
  %3325 = vmatprep.subr.mxu0 0.0
  %3326 = vmatpush1.msra.mxu0 0.0
  %3327 = vmatprep.subr.mxu0 0.0
  %3328 = vmatpush1.msra.mxu0 0.0
  %3329 = vmatprep.subr.mxu0 0.0
  %3330 = vmatpush1.msra.mxu0 0.0
  %3331 = vmatprep.subr.mxu0 0.0
  %3332 = vmatpush1.msra.mxu0 0.0
  %3333 = vmatprep.subr.mxu0 0.0
  %3334 = vmatpush1.msra.mxu0 0.0
  %3335 = vmatprep.subr.mxu0 0.0
  %3336 = vmatpush1.msra.mxu0 0.0
  %3337 = vmatprep.subr.mxu0 0.0
  %3338 = vmatpush1.msra.mxu0 0.0
  %3339 = vmatprep.subr.mxu0 0.0
  %3340 = vmatpush1.msra.mxu0 0.0
  %3341 = vmatprep.subr.mxu0 0.0
  %3342 = vmatpush1.msra.mxu0 0.0
  %3343 = vmatprep.subr.mxu0 0.0
  %3344 = vmatpush1.msra.mxu0 0.0
  %3345 = vmatprep.subr.mxu0 0.0
  %3346 = vmatpush1.msra.mxu0 0.0
  %3347 = vmatprep.subr.mxu0 0.0
  %3348 = vmatpush1.msra.mxu0 0.0
  %3349 = vmatprep.subr.mxu0 0.0
  %3350 = vmatpush1.msra.mxu0 0.0
  %3351 = vmatprep.subr.mxu0 0.0
  %3352 = vmatpush1.msra.mxu0 0.0
  %3353 = vmatprep.subr.mxu0 0.0
  %3354 = vmatpush1.msra.mxu0 0.0
  %3355 = vmatprep.subr.mxu0 0.0
  %3356 = vmatpush1.msra.mxu0 0.0
  %3357 = vmatprep.mubr.f32.mxu0 0.0
  %3358 = vmatmul.mubr.f32.gmra.mrb[0].mxu0 %v3168
  %v3359 = vpop.f32.mrb[0].mxu0
  %v3360 = vadd.f32 0.0, %v3359
  %v3361 = vpop.f32.mrb[0].mxu0
  %3362 = vmatprep.mubr.f32.mxu0 0.0
  %3363 = vmatmul.mubr.f32.gmra.mrb[0].mxu0 %v3169
  %v3364 = vpop.f32.mrb[0].mxu0
  %v3365 = vadd.f32 0.0, %v3364
  %v3366 = vpop.f32.mrb[0].mxu0
  %3367 = vmatprep.mubr.f32.mxu0 0.0
  %3368 = vmatmul.mubr.f32.gmra.mrb[0].mxu0 %v3170
  %v3369 = vpop.f32.mrb[0].mxu0
  %v3370 = vadd.f32 0.0, %v3369
  %v3371 = vpop.f32.mrb[0].mxu0
  %3372 = vmatprep.mubr.f32.mxu0 0.0
  %3373 = vmatmul.mubr.f32.gmra.mrb[0].mxu0 %v3171
  %v3374 = vpop.f32.mrb[0].mxu0
  %v3375 = vadd.f32 0.0, %v3374
  %v3376 = vpop.f32.mrb[0].mxu0
  %3377 = vdwg.mxu0
  %v3378 = vmax.f32 %v3259, %v3360
  %v3379 = vmax.f32 %v3264, %v3365
  %v3380 = vmax.f32 %v3269, %v3370
  %v3381 = vmax.f32 %v3274, %v3375
  %v3382 = vld [vmem:[%s15] sm:$0xff]
  %v3383 = vld [vmem:[%s15 + $0x8] sm:$0xff]
  %v3385 = vsel %vm555, %v3382, 0
  %v3388 = vsel %vm555, %v3383, 0
  %3390 = vmatprep.subr.mxu0 0.0
  %3391 = vmatpush1.msra.mxu0 %v3378
  %3392 = vmatprep.subr.mxu0 0.0
  %3393 = vmatpush1.msra.mxu0 %v3379
  %3394 = vmatprep.subr.mxu0 0.0
  %3395 = vmatpush1.msra.mxu0 %v3380
  %3396 = vmatprep.subr.mxu0 0.0
  %3397 = vmatpush1.msra.mxu0 %v3381
  %3398 = vmatprep.subr.mxu0 0.0
  %3399 = vmatpush1.msra.mxu0 0.0
  %3400 = vmatprep.subr.mxu0 0.0
  %3401 = vmatpush1.msra.mxu0 0.0
  %3402 = vmatprep.subr.mxu0 0.0
  %3403 = vmatpush1.msra.mxu0 0.0
  %3404 = vmatprep.subr.mxu0 0.0
  %3405 = vmatpush1.msra.mxu0 0.0
  %3406 = vmatprep.subr.mxu0 0.0
  %3407 = vmatpush1.msra.mxu0 0.0
  %3408 = vmatprep.subr.mxu0 0.0
  %3409 = vmatpush1.msra.mxu0 0.0
  %3410 = vmatprep.subr.mxu0 0.0
  %3411 = vmatpush1.msra.mxu0 0.0
  %3412 = vmatprep.subr.mxu0 0.0
  %3413 = vmatpush1.msra.mxu0 0.0
  %3414 = vmatprep.subr.mxu0 0.0
  %3415 = vmatpush1.msra.mxu0 0.0
  %3416 = vmatprep.subr.mxu0 0.0
  %3417 = vmatpush1.msra.mxu0 0.0
  %3418 = vmatprep.subr.mxu0 0.0
  %3419 = vmatpush1.msra.mxu0 0.0
  %3420 = vmatprep.subr.mxu0 0.0
  %3421 = vmatpush1.msra.mxu0 0.0
  %3422 = vmatprep.subr.mxu0 0.0
  %3423 = vmatpush1.msra.mxu0 0.0
  %3424 = vmatprep.subr.mxu0 0.0
  %3425 = vmatpush1.msra.mxu0 0.0
  %3426 = vmatprep.subr.mxu0 0.0
  %3427 = vmatpush1.msra.mxu0 0.0
  %3428 = vmatprep.subr.mxu0 0.0
  %3429 = vmatpush1.msra.mxu0 0.0
  %3430 = vmatprep.subr.mxu0 0.0
  %3431 = vmatpush1.msra.mxu0 0.0
  %3432 = vmatprep.subr.mxu0 0.0
  %3433 = vmatpush1.msra.mxu0 0.0
  %3434 = vmatprep.subr.mxu0 0.0
  %3435 = vmatpush1.msra.mxu0 0.0
  %3436 = vmatprep.subr.mxu0 0.0
  %3437 = vmatpush1.msra.mxu0 0.0
  %3438 = vmatprep.subr.mxu0 0.0
  %3439 = vmatpush1.msra.mxu0 0.0
  %3440 = vmatprep.subr.mxu0 0.0
  %3441 = vmatpush1.msra.mxu0 0.0
  %3442 = vmatprep.subr.mxu0 0.0
  %3443 = vmatpush1.msra.mxu0 0.0
  %3444 = vmatprep.subr.mxu0 0.0
  %3445 = vmatpush1.msra.mxu0 0.0
  %3446 = vmatprep.subr.mxu0 0.0
  %3447 = vmatpush1.msra.mxu0 0.0
  %3448 = vmatprep.subr.mxu0 0.0
  %3449 = vmatpush1.msra.mxu0 0.0
  %3450 = vmatprep.subr.mxu0 0.0
  %3451 = vmatpush1.msra.mxu0 0.0
  %3452 = vmatprep.subr.mxu0 0.0
  %3453 = vmatpush1.msra.mxu0 0.0
  %3454 = vmatprep.mubr.f32.mxu0 0.0
  %3455 = vmatmul.mubr.f32.gmra.mrb[0].mxu0 %v3385
  %v3456 = vpop.f32.mrb[0].mxu0
  %v3457 = vadd.f32 0.0, %v3456
  %v3458 = vpop.f32.mrb[0].mxu0
  %3459 = vmatprep.mubr.f32.mxu0 0.0
  %3460 = vmatmul.mubr.f32.gmra.mrb[0].mxu0 %v3388
  %v3461 = vpop.f32.mrb[0].mxu0
  %v3462 = vadd.f32 0.0, %v3461
  %v3463 = vpop.f32.mrb[0].mxu0
  %3464 = vdwg.mxu0
  %v3465 = vld [vmem:[%s16] sm:$0xff]
  %v3466 = vld [vmem:[%s16 + $0x8] sm:$0xff]
  %v3468 = vsel %vm555, %v3465, 0
  %v3471 = vsel %vm555, %v3466, 0
  %3473 = vmatprep.subr.mxu0 0.0
  %3474 = vmatpush1.msra.mxu0 %v3378
  %3475 = vmatprep.subr.mxu0 0.0
  %3476 = vmatpush1.msra.mxu0 %v3379
  %3477 = vmatprep.subr.mxu0 0.0
  %3478 = vmatpush1.msra.mxu0 %v3380
  %3479 = vmatprep.subr.mxu0 0.0
  %3480 = vmatpush1.msra.mxu0 %v3381
  %3481 = vmatprep.subr.mxu0 0.0
  %3482 = vmatpush1.msra.mxu0 0.0
  %3483 = vmatprep.subr.mxu0 0.0
  %3484 = vmatpush1.msra.mxu0 0.0
  %3485 = vmatprep.subr.mxu0 0.0
  %3486 = vmatpush1.msra.mxu0 0.0
  %3487 = vmatprep.subr.mxu0 0.0
  %3488 = vmatpush1.msra.mxu0 0.0
  %3489 = vmatprep.subr.mxu0 0.0
  %3490 = vmatpush1.msra.mxu0 0.0
  %3491 = vmatprep.subr.mxu0 0.0
  %3492 = vmatpush1.msra.mxu0 0.0
  %3493 = vmatprep.subr.mxu0 0.0
  %3494 = vmatpush1.msra.mxu0 0.0
  %3495 = vmatprep.subr.mxu0 0.0
  %3496 = vmatpush1.msra.mxu0 0.0
  %3497 = vmatprep.subr.mxu0 0.0
  %3498 = vmatpush1.msra.mxu0 0.0
  %3499 = vmatprep.subr.mxu0 0.0
  %3500 = vmatpush1.msra.mxu0 0.0
  %3501 = vmatprep.subr.mxu0 0.0
  %3502 = vmatpush1.msra.mxu0 0.0
  %3503 = vmatprep.subr.mxu0 0.0
  %3504 = vmatpush1.msra.mxu0 0.0
  %3505 = vmatprep.subr.mxu0 0.0
  %3506 = vmatpush1.msra.mxu0 0.0
  %3507 = vmatprep.subr.mxu0 0.0
  %3508 = vmatpush1.msra.mxu0 0.0
  %3509 = vmatprep.subr.mxu0 0.0
  %3510 = vmatpush1.msra.mxu0 0.0
  %3511 = vmatprep.subr.mxu0 0.0
  %3512 = vmatpush1.msra.mxu0 0.0
  %3513 = vmatprep.subr.mxu0 0.0
  %3514 = vmatpush1.msra.mxu0 0.0
  %3515 = vmatprep.subr.mxu0 0.0
  %3516 = vmatpush1.msra.mxu0 0.0
  %3517 = vmatprep.subr.mxu0 0.0
  %3518 = vmatpush1.msra.mxu0 0.0
  %3519 = vmatprep.subr.mxu0 0.0
  %3520 = vmatpush1.msra.mxu0 0.0
  %3521 = vmatprep.subr.mxu0 0.0
  %3522 = vmatpush1.msra.mxu0 0.0
  %3523 = vmatprep.subr.mxu0 0.0
  %3524 = vmatpush1.msra.mxu0 0.0
  %3525 = vmatprep.subr.mxu0 0.0
  %3526 = vmatpush1.msra.mxu0 0.0
  %3527 = vmatprep.subr.mxu0 0.0
  %3528 = vmatpush1.msra.mxu0 0.0
  %3529 = vmatprep.subr.mxu0 0.0
  %3530 = vmatpush1.msra.mxu0 0.0
  %3531 = vmatprep.subr.mxu0 0.0
  %3532 = vmatpush1.msra.mxu0 0.0
  %3533 = vmatprep.subr.mxu0 0.0
  %3534 = vmatpush1.msra.mxu0 0.0
  %3535 = vmatprep.subr.mxu0 0.0
  %3536 = vmatpush1.msra.mxu0 0.0
  %3537 = vmatprep.mubr.f32.mxu0 0.0
  %3538 = vmatmul.mubr.f32.gmra.mrb[0].mxu0 %v3468
  %v3539 = vpop.f32.mrb[0].mxu0
  %v3540 = vadd.f32 0.0, %v3539
  %v3541 = vpop.f32.mrb[0].mxu0
  %3542 = vmatprep.mubr.f32.mxu0 0.0
  %3543 = vmatmul.mubr.f32.gmra.mrb[0].mxu0 %v3471
  %v3544 = vpop.f32.mrb[0].mxu0
  %v3545 = vadd.f32 0.0, %v3544
  %v3546 = vpop.f32.mrb[0].mxu0
  %3547 = vdwg.mxu0
  %v3548 = vmax.f32 %v3457, %v3540
  %v3549 = vmax.f32 %v3462, %v3545
  %3550 = vst.msk [vmem:[%s18] sm:$0xff] %vm62, %v3548
  %3551 = vst.msk [vmem:[%s18 + $0x8] sm:$0xff] %vm62, %v3549
  // Predicated region
  $region70: #{encoder_forward.1} parent=0 // pred_check
    _
  $region71: #{encoder_forward.1} parent=0 // pred_check_branch
    %3553 = sbr.rel (0) target = $region73
  $region72: #{encoder_forward.1} parent=0 // pred_region
    _
  $region73: #{encoder_forward.1} parent=0 // pred_fallthru
    _
  // Predicated region
  $region74: #{encoder_forward.1} parent=0 // pred_check
    _
  $region75: #{encoder_forward.1} parent=0 // pred_check_branch
    %3555 = sbr.rel (0) target = $region77
  $region76: #{encoder_forward.1} parent=0 // pred_region
    _
  $region77: #{encoder_forward.1} parent=0 // pred_fallthru
    _
  // Predicated region
  $region78: #{encoder_forward.1} parent=0 // pred_check
    _
  $region79: #{encoder_forward.1} parent=0 // pred_check_branch
    %3557 = sbr.rel (0) target = $region81
  $region80: #{encoder_forward.1} parent=0 // pred_region
    _
  $region81: #{encoder_forward.1} parent=0 // pred_fallthru
    _
  // Predicated region
  $region82: #{encoder_forward.1} parent=0 // pred_check
    _
  $region83: #{encoder_forward.1} parent=0 // pred_check_branch
    %3559 = sbr.rel (0) target = $region85
  $region84: #{encoder_forward.1} parent=0 // pred_region
    _
  $region85: #{encoder_forward.1} parent=0 // pred_fallthru
    _

</llo_original>
